<compile_context>
chip_gen: v7x
topology: tpu7x:2x2x1
jax: 0.10.0
libtpu: 0.0.40
codegen_flags: <defaults>
</compile_context>

<pallas_src>
import jax
import jax.numpy as jnp
from jax import lax
from jax.experimental import pallas as pl
from jax.experimental.pallas import tpu as pltpu

SOS_TOKEN = 0
EOS_TOKEN = 1


def _make_kernel(hidden_dim, embbed_dim, num_layers, padded_vocab, target_len):
    H, E, L, VP, T = hidden_dim, embbed_dim, num_layers, padded_vocab, target_len

    def gates(g, h_prev):
        # g: (1, 4H) fused pre-activations [r | z | gi_n | gh_n] (f32).
        rz = jax.nn.sigmoid(g[:, 0:2 * H])          # one sigmoid over the r|z chunk
        r, z = rz[:, 0:H], rz[:, H:2 * H]
        n = jnp.tanh(g[:, 2 * H:3 * H] + r * g[:, 3 * H:4 * H])
        h_new = (1.0 - z) * n
        if h_prev is not None:                      # h_prev is None => zero hidden
            h_new = h_new + z * h_prev
        return h_new

    def kernel(last_src_ref, tf_ref,
               enc_emb_ref, enc_w_ref, enc_b_ref,
               dec_emb_ref, dec_w_ref, dec_b_ref,
               out_w_ref, out_b_ref, outputs_ref):
        f32, bf16 = jnp.float32, jnp.bfloat16

        # ---------- hoist loop-invariant weight reads (review item 3) ----------
        dec_w = [dec_w_ref[l] for l in range(L)]    # each (E+H, 4H) bf16
        dec_b = [dec_b_ref[l] for l in range(L)]    # each (1, 4H)   f32
        out_w = out_w_ref[...]                      # (H, VP) bf16
        out_b = out_b_ref[...]                      # (1, VP) f32

        # ---------------- Encoder: one step from a zero hidden ----------------
        # Only source[-1] matters (reference re-zeros the hidden every source
        # step).  With h == 0 the hh matmul vanishes, so the packed encoder
        # weight carries only the ih rows; both biases are pre-summed into it.
        x = enc_emb_ref[pl.ds(last_src_ref[0], 1), :]            # (1, E), no relu
        hidden = []
        for l in range(L):
            g = (jnp.dot(x.astype(bf16), enc_w_ref[l],
                         preferred_element_type=f32) + enc_b_ref[l])   # (1, 4H)
            h_l = gates(g, None)
            hidden.append(h_l)
            x = h_l

        # -------------- Decoder: fully unrolled over static T -----------------
        # Reference quirk: decoder_input is never reassigned, so the decoder
        # input is embedding(SOS) at every step.  Its layer-0 ih contribution is
        # therefore constant across steps and precomputed once.
        x_sos = jnp.maximum(dec_emb_ref[pl.ds(SOS_TOKEN, 1), :], 0.0)   # relu(emb(SOS))
        gi0 = (jnp.dot(x_sos.astype(bf16), dec_w[0][0:E, :],
                       preferred_element_type=f32) + dec_b[0])          # (1, 4H) const
        whh0 = dec_w[0][E:E + H, :]                                     # (H, 4H)

        active = jnp.float32(1.0)       # 1.0 until the greedy-EOS break, then 0.0
        rows = []
        for t in range(T):
            # layer 0: one (1,H)@(H,4H) matmul, constant x-part pre-added
            g = (jnp.dot(hidden[0].astype(bf16), whh0,
                         preferred_element_type=f32) + gi0)
            h0 = gates(g, hidden[0])
            new_hidden = [h0]
            x = h0
            # layers 1..L-1: one fused (1,2H)@(2H,4H) matmul per cell
            for l in range(1, L):
                xh = jnp.concatenate([x, hidden[l]], axis=1)            # (1, 2H)
                g = (jnp.dot(xh.astype(bf16), dec_w[l],
                             preferred_element_type=f32) + dec_b[l])
                h_l = gates(g, hidden[l])
                new_hidden.append(h_l)
                x = h_l
            hidden = new_hidden

            # Linear + LogSoftmax over the lane-dense padded row (padded logits
            # are -1e30, finite, so max/LSE/argmax over real columns unchanged).
            logits = (jnp.dot(x.astype(bf16), out_w,
                              preferred_element_type=f32) + out_b)       # (1, VP)
            m = jnp.max(logits, axis=1, keepdims=True)
            lse = m + jnp.log(jnp.sum(jnp.exp(logits - m), axis=1, keepdims=True))
            # Rows produced after the break are multiplied by 0 (torch.zeros).
            rows.append((logits - lse) * active)

            # Early-break check.  The reference can only break on non-teacher-
            # forced steps, so the greedy argmax + vreg->sreg extraction is
            # cond-gated off the serial chain when tf == 1 (review item 2).
            def _greedy_stop(lg=logits, mx=m):
                idxs = lax.broadcasted_iota(jnp.int32, lg.shape, 1)
                # first max index == torch.topk(1) tie behaviour
                topi = jnp.min(jnp.where(lg >= mx, idxs, VP)).astype(jnp.int32)
                return (topi == EOS_TOKEN).astype(jnp.int32)

            stop = lax.cond(tf_ref[t] == 1,
                            lambda: jnp.zeros((), jnp.int32),
                            _greedy_stop)
            # Once active hits 0 it stays 0: every later row is zeroed, so the
            # (still-evolving) hidden can never affect a stored output.
            active = active * (1.0 - stop.astype(f32))

        # Single lane-dense (T, VP) store at the end (no per-step masked stores).
        outputs_ref[...] = jnp.concatenate(rows, axis=0)

    return kernel


def _pack_gru_layer(w_ih, w_hh, b_ih, b_hh):
    """Pack a torch.nn.GRU layer into the fused [r|z|gi_n|gh_n] layout.

    w_ih:(3H,in) w_hh:(3H,H) b_ih/b_hh:(3H,)  ->  W_cat:(in+H,4H), b_cat:(1,4H)
    so that  [x|h] @ W_cat + b_cat  yields r/z pre-activations summed over ih+hh
    and gi_n / gh_n kept separate (needed for n = tanh(gi_n + r*gh_n)).
    """
    H = w_hh.shape[1]
    in_dim = w_ih.shape[1]
    w = jnp.zeros((in_dim + H, 4 * H), jnp.float32)
    w = w.at[:in_dim, 0:H].set(w_ih[0:H].T).at[in_dim:, 0:H].set(w_hh[0:H].T)
    w = w.at[:in_dim, H:2 * H].set(w_ih[H:2 * H].T).at[in_dim:, H:2 * H].set(w_hh[H:2 * H].T)
    w = w.at[:in_dim, 2 * H:3 * H].set(w_ih[2 * H:3 * H].T)   # gi_n: x rows only
    w = w.at[in_dim:, 3 * H:4 * H].set(w_hh[2 * H:3 * H].T)   # gh_n: h rows only
    b = jnp.concatenate([b_ih[0:H] + b_hh[0:H],
                         b_ih[H:2 * H] + b_hh[H:2 * H],
                         b_ih[2 * H:3 * H],
                         b_hh[2 * H:3 * H]])[None, :]
    return w, b


def _pack_gru_layer_zero_hidden(w_ih, b_ih, b_hh):
    """Same packing for a cell whose previous hidden is always zero (encoder):
    the hh weight never contributes, but b_hh still does (gh_n column = b_hn)."""
    H = b_ih.shape[0] // 3
    in_dim = w_ih.shape[1]
    w = jnp.zeros((in_dim, 4 * H), jnp.float32)
    w = w.at[:, 0:H].set(w_ih[0:H].T)
    w = w.at[:, H:2 * H].set(w_ih[H:2 * H].T)
    w = w.at[:, 2 * H:3 * H].set(w_ih[2 * H:3 * H].T)          # gh_n columns stay 0
    b = jnp.concatenate([b_ih[0:H] + b_hh[0:H],
                         b_ih[H:2 * H] + b_hh[H:2 * H],
                         b_ih[2 * H:3 * H],
                         b_hh[2 * H:3 * H]])[None, :]
    return w, b


def init_params(key, input_dim, output_dim, hidden_dim, embbed_dim, num_layers):
    """Deterministic synthetic parameters, pre-packed for the kernel (bf16 weights,
    f32 biases/embeddings; out_w/out_b lane-padded to a multiple of 128, padding
    bias = -1e30 so the padded columns never win the max / change the LSE)."""
    assert embbed_dim == hidden_dim, "this kernel assumes embbed_dim == hidden_dim"
    H, E, L, V = hidden_dim, embbed_dim, num_layers, output_dim
    VP = -(-V // 128) * 128                         # lane-dense padded vocab width
    s = 1.0 / float(H) ** 0.5
    k_enc_emb, k_dec_emb, k_enc, k_dec, k_out = jax.random.split(key, 5)

    def u(k, shape):
        return jax.random.uniform(k, shape, jnp.float32, -s, s)

    enc_w, enc_b = [], []
    for l, kl in enumerate(jax.random.split(k_enc, L)):
        in_dim = E if l == 0 else H
        k1, k2, k3 = jax.random.split(kl, 3)
        # weight_hh_l{l} never contributes in the reference encoder (fresh zero
        # hidden every call), so it is not generated / packed / DMA'd.
        w_ih, b_ih, b_hh = u(k1, (3 * H, in_dim)), u(k2, (3 * H,)), u(k3, (3 * H,))
        wc, bc = _pack_gru_layer_zero_hidden(w_ih, b_ih, b_hh)
        enc_w.append(wc); enc_b.append(bc)

    dec_w, dec_b = [], []
    for l, kl in enumerate(jax.random.split(k_dec, L)):
        in_dim = E if l == 0 else H
        k1, k2, k3, k4 = jax.random.split(kl, 4)
        w_ih, w_hh = u(k1, (3 * H, in_dim)), u(k2, (3 * H, H))
        b_ih, b_hh = u(k3, (3 * H,)), u(k4, (3 * H,))
        wc, bc = _pack_gru_layer(w_ih, w_hh, b_ih, b_hh)
        dec_w.append(wc); dec_b.append(bc)

    k_ow, k_ob = jax.random.split(k_out)
    lin_w, lin_b = u(k_ow, (V, H)), u(k_ob, (V,))
    out_w = jnp.zeros((H, VP), jnp.float32).at[:, :V].set(lin_w.T)
    out_b = jnp.full((1, VP), -1e30, jnp.float32).at[0, :V].set(lin_b)

    return dict(
        enc_emb=jax.random.normal(k_enc_emb, (input_dim, E), jnp.float32),
        dec_emb=jax.random.normal(k_dec_emb, (V, E), jnp.float32),
        enc_w=jnp.stack(enc_w).astype(jnp.bfloat16),   # (L, E,   4H)
        enc_b=jnp.stack(enc_b),                        # (L, 1,   4H)
        dec_w=jnp.stack(dec_w).astype(jnp.bfloat16),   # (L, E+H, 4H)
        dec_b=jnp.stack(dec_b),                        # (L, 1,   4H)
        out_w=out_w.astype(jnp.bfloat16),              # (H, VP)
        out_b=out_b,                                   # (1, VP)
    )


def seq2seq_forward(params, source, target, teacher_force_flags):
    """source: (input_len,) int32, target: (target_len, batch) int32,
    teacher_force_flags: (target_len,) int32 (0/1) — deterministic stand-in for
    `random.random() < teacher_forcing_ratio`.

    Reference-faithful notes: only source[-1] can influence encoder_hidden;
    target VALUES never influence the outputs (the reference never feeds the
    chosen token back and the break is greedy-path-only), so only target.shape
    is used; the (1, V) prediction is broadcast across the batch dim exactly
    like `outputs[t] = decoder_output` in the reference."""
    T, B = target.shape
    V = params["dec_emb"].shape[0]
    E = params["enc_emb"].shape[1]
    L, H = params["dec_w"].shape[0], params["dec_w"].shape[2] // 4
    VP = params["out_w"].shape[1]

    kernel = _make_kernel(H, E, L, VP, T)
    smem = pl.BlockSpec(memory_space=pltpu.MemorySpace.SMEM)
    vmem = pl.BlockSpec(memory_space=pltpu.MemorySpace.VMEM)

    out = pl.pallas_call(
        kernel,
        out_shape=jax.ShapeDtypeStruct((T, VP), jnp.float32),
        in_specs=[smem, smem] + [vmem] * 8,
        out_specs=vmem,
    )(source[-1:].astype(jnp.int32),              # only src[-1] matters (ref semantics)
      teacher_force_flags.astype(jnp.int32),
      params["enc_emb"], params["enc_w"], params["enc_b"],
      params["dec_emb"], params["dec_w"], params["dec_b"],
      params["out_w"], params["out_b"])

    # Slice off the lane padding and broadcast across batch (reference stores
    # the (1, V) decoder output into every batch row).
    return jnp.broadcast_to(out[:, None, :V], (T, B, V))


if __name__ == "__main__":
    key = jax.random.PRNGKey(0)
    input_dim = 16      # encoder vocab
    output_dim = 16     # decoder vocab
    hidden_dim = 32
    embbed_dim = 32
    num_layers = 2
    input_length = 8
    target_length = 8
    batch = 2

    k_params, k_data = jax.random.split(key)
    params = init_params(k_params, input_dim, output_dim,
                         hidden_dim, embbed_dim, num_layers)

    k1, k2, k3 = jax.random.split(k_data, 3)
    source = jax.random.randint(k1, (input_length,), 0, input_dim, dtype=jnp.int32)
    target = jax.random.randint(k2, (target_length, batch), 0, output_dim,
                                dtype=jnp.int32)
    # Deterministic stand-in for python `random.random() < 0.5` coin flips.
    tf_flags = (jax.random.uniform(k3, (target_length,)) < 0.5).astype(jnp.int32)

    outputs = seq2seq_forward(params, source, target, tf_flags)
    jax.block_until_ready(outputs)
    assert outputs.shape == (target_length, batch, output_dim)
    assert bool(jnp.all(jnp.isfinite(outputs)))
    print("KERNEL_OK")
</pallas_src>

<mosaic_0001>
module attributes {stable_mosaic.version = 11 : i64} {
  func.func @kernel(%arg0: memref<1xi32, #tpu.memory_space<smem>>, %arg1: memref<8xi32, #tpu.memory_space<smem>>, %arg2: memref<16x32xf32, #tpu.memory_space<vmem>>, %arg3: memref<2x32x128xbf16, #tpu.memory_space<vmem>>, %arg4: memref<2x1x128xf32, #tpu.memory_space<vmem>>, %arg5: memref<16x32xf32, #tpu.memory_space<vmem>>, %arg6: memref<2x64x128xbf16, #tpu.memory_space<vmem>>, %arg7: memref<2x1x128xf32, #tpu.memory_space<vmem>>, %arg8: memref<32x128xbf16, #tpu.memory_space<vmem>>, %arg9: memref<1x128xf32, #tpu.memory_space<vmem>>, %arg10: memref<8x128xf32, #tpu.memory_space<vmem>>) attributes {dimension_semantics = [], scalar_prefetch = 0 : i64, scratch_operands = 0 : i64, tpu.core_type = #tpu.core_type<tc>} {
    %c0 = arith.constant 0 : index
    %c0_0 = arith.constant 0 : index
    %c0_1 = arith.constant 0 : index
    %0 = vector.load %arg6[%c0, %c0_0, %c0_1] : memref<2x64x128xbf16, #tpu.memory_space<vmem>>, vector<1x64x128xbf16>
    %1 = vector.shape_cast %0 : vector<1x64x128xbf16> to vector<64x128xbf16>
    %c1 = arith.constant 1 : index
    %c0_2 = arith.constant 0 : index
    %c0_3 = arith.constant 0 : index
    %2 = vector.load %arg6[%c1, %c0_2, %c0_3] : memref<2x64x128xbf16, #tpu.memory_space<vmem>>, vector<1x64x128xbf16>
    %3 = vector.shape_cast %2 : vector<1x64x128xbf16> to vector<64x128xbf16>
    %c0_4 = arith.constant 0 : index
    %c0_5 = arith.constant 0 : index
    %c0_6 = arith.constant 0 : index
    %4 = vector.load %arg7[%c0_4, %c0_5, %c0_6] : memref<2x1x128xf32, #tpu.memory_space<vmem>>, vector<1x1x128xf32>
    %5 = vector.shape_cast %4 : vector<1x1x128xf32> to vector<1x128xf32>
    %c1_7 = arith.constant 1 : index
    %c0_8 = arith.constant 0 : index
    %c0_9 = arith.constant 0 : index
    %6 = vector.load %arg7[%c1_7, %c0_8, %c0_9] : memref<2x1x128xf32, #tpu.memory_space<vmem>>, vector<1x1x128xf32>
    %7 = vector.shape_cast %6 : vector<1x1x128xf32> to vector<1x128xf32>
    %c0_10 = arith.constant 0 : index
    %c0_11 = arith.constant 0 : index
    %8 = vector.load %arg8[%c0_10, %c0_11] : memref<32x128xbf16, #tpu.memory_space<vmem>>, vector<32x128xbf16>
    %c0_12 = arith.constant 0 : index
    %c0_13 = arith.constant 0 : index
    %9 = vector.load %arg9[%c0_12, %c0_13] : memref<1x128xf32, #tpu.memory_space<vmem>>, vector<1x128xf32>
    %c0_14 = arith.constant 0 : index
    %10 = memref.load %arg0[%c0_14] : memref<1xi32, #tpu.memory_space<smem>>
    %11 = arith.index_cast %10 : i32 to index
    %c0_15 = arith.constant 0 : index
    %12 = vector.load %arg2[%11, %c0_15] : memref<16x32xf32, #tpu.memory_space<vmem>>, vector<1x32xf32>
    %13 = arith.truncf %12 : vector<1x32xf32> to vector<1x32xbf16>
    %c0_16 = arith.constant 0 : index
    %c0_17 = arith.constant 0 : index
    %c0_18 = arith.constant 0 : index
    %14 = vector.load %arg3[%c0_16, %c0_17, %c0_18] : memref<2x32x128xbf16, #tpu.memory_space<vmem>>, vector<1x32x128xbf16>
    %15 = vector.shape_cast %14 : vector<1x32x128xbf16> to vector<32x128xbf16>
    %cst = arith.constant dense<0.000000e+00> : vector<1x128xf32>
    %16 = tpu.matmul %13, %15, %cst {dimension_numbers = #tpu.dot_dimension_numbers<[1], [0], [0], [1], [0, 0, 1, 1], [], []>} : vector<1x32xbf16>, vector<32x128xbf16>, vector<1x128xf32> -> vector<1x128xf32>
    %c0_19 = arith.constant 0 : index
    %c0_20 = arith.constant 0 : index
    %c0_21 = arith.constant 0 : index
    %17 = vector.load %arg4[%c0_19, %c0_20, %c0_21] : memref<2x1x128xf32, #tpu.memory_space<vmem>>, vector<1x1x128xf32>
    %18 = vector.shape_cast %17 : vector<1x1x128xf32> to vector<1x128xf32>
    %19 = arith.addf %16, %18 : vector<1x128xf32>
    %20 = vector.extract_strided_slice %19 {offsets = [0, 0], sizes = [1, 64], strides = [1, 1]} : vector<1x128xf32> to vector<1x64xf32>
    %21 = arith.negf %20 : vector<1x64xf32>
    %22 = math.exp %21 : vector<1x64xf32>
    %cst_22 = arith.constant 1.000000e+00 : f32
    %23 = vector.broadcast %cst_22 : f32 to vector<1x64xf32>
    %24 = arith.addf %23, %22 : vector<1x64xf32>
    %25 = arith.divf %23, %24 : vector<1x64xf32>
    %26 = vector.extract_strided_slice %25 {offsets = [0, 0], sizes = [1, 32], strides = [1, 1]} : vector<1x64xf32> to vector<1x32xf32>
    %27 = vector.extract_strided_slice %25 {offsets = [0, 32], sizes = [1, 32], strides = [1, 1]} : vector<1x64xf32> to vector<1x32xf32>
    %28 = vector.extract_strided_slice %19 {offsets = [0, 64], sizes = [1, 32], strides = [1, 1]} : vector<1x128xf32> to vector<1x32xf32>
    %29 = vector.extract_strided_slice %19 {offsets = [0, 96], sizes = [1, 32], strides = [1, 1]} : vector<1x128xf32> to vector<1x32xf32>
    %30 = arith.mulf %26, %29 : vector<1x32xf32>
    %31 = arith.addf %28, %30 : vector<1x32xf32>
    %32 = math.tanh %31 : vector<1x32xf32>
    %cst_23 = arith.constant 1.000000e+00 : f32
    %33 = vector.broadcast %cst_23 : f32 to vector<1x32xf32>
    %34 = arith.subf %33, %27 : vector<1x32xf32>
    %35 = arith.mulf %34, %32 : vector<1x32xf32>
    %36 = arith.truncf %35 : vector<1x32xf32> to vector<1x32xbf16>
    %c1_24 = arith.constant 1 : index
    %c0_25 = arith.constant 0 : index
    %c0_26 = arith.constant 0 : index
    %37 = vector.load %arg3[%c1_24, %c0_25, %c0_26] : memref<2x32x128xbf16, #tpu.memory_space<vmem>>, vector<1x32x128xbf16>
    %38 = vector.shape_cast %37 : vector<1x32x128xbf16> to vector<32x128xbf16>
    %cst_27 = arith.constant dense<0.000000e+00> : vector<1x128xf32>
    %39 = tpu.matmul %36, %38, %cst_27 {dimension_numbers = #tpu.dot_dimension_numbers<[1], [0], [0], [1], [0, 0, 1, 1], [], []>} : vector<1x32xbf16>, vector<32x128xbf16>, vector<1x128xf32> -> vector<1x128xf32>
    %c1_28 = arith.constant 1 : index
    %c0_29 = arith.constant 0 : index
    %c0_30 = arith.constant 0 : index
    %40 = vector.load %arg4[%c1_28, %c0_29, %c0_30] : memref<2x1x128xf32, #tpu.memory_space<vmem>>, vector<1x1x128xf32>
    %41 = vector.shape_cast %40 : vector<1x1x128xf32> to vector<1x128xf32>
    %42 = arith.addf %39, %41 : vector<1x128xf32>
    %43 = vector.extract_strided_slice %42 {offsets = [0, 0], sizes = [1, 64], strides = [1, 1]} : vector<1x128xf32> to vector<1x64xf32>
    %44 = arith.negf %43 : vector<1x64xf32>
    %45 = math.exp %44 : vector<1x64xf32>
    %cst_31 = arith.constant 1.000000e+00 : f32
    %46 = vector.broadcast %cst_31 : f32 to vector<1x64xf32>
    %47 = arith.addf %46, %45 : vector<1x64xf32>
    %48 = arith.divf %46, %47 : vector<1x64xf32>
    %49 = vector.extract_strided_slice %48 {offsets = [0, 0], sizes = [1, 32], strides = [1, 1]} : vector<1x64xf32> to vector<1x32xf32>
    %50 = vector.extract_strided_slice %48 {offsets = [0, 32], sizes = [1, 32], strides = [1, 1]} : vector<1x64xf32> to vector<1x32xf32>
    %51 = vector.extract_strided_slice %42 {offsets = [0, 64], sizes = [1, 32], strides = [1, 1]} : vector<1x128xf32> to vector<1x32xf32>
    %52 = vector.extract_strided_slice %42 {offsets = [0, 96], sizes = [1, 32], strides = [1, 1]} : vector<1x128xf32> to vector<1x32xf32>
    %53 = arith.mulf %49, %52 : vector<1x32xf32>
    %54 = arith.addf %51, %53 : vector<1x32xf32>
    %55 = math.tanh %54 : vector<1x32xf32>
    %cst_32 = arith.constant 1.000000e+00 : f32
    %56 = vector.broadcast %cst_32 : f32 to vector<1x32xf32>
    %57 = arith.subf %56, %50 : vector<1x32xf32>
    %58 = arith.mulf %57, %55 : vector<1x32xf32>
    %c0_33 = arith.constant 0 : index
    %c0_34 = arith.constant 0 : index
    %59 = vector.load %arg5[%c0_33, %c0_34] : memref<16x32xf32, #tpu.memory_space<vmem>>, vector<1x32xf32>
    %cst_35 = arith.constant 0.000000e+00 : f32
    %60 = vector.broadcast %cst_35 : f32 to vector<1x32xf32>
    %61 = arith.maximumf %59, %60 : vector<1x32xf32>
    %62 = arith.truncf %61 : vector<1x32xf32> to vector<1x32xbf16>
    %63 = vector.extract_strided_slice %1 {offsets = [0, 0], sizes = [32, 128], strides = [1, 1]} : vector<64x128xbf16> to vector<32x128xbf16>
    %cst_36 = arith.constant dense<0.000000e+00> : vector<1x128xf32>
    %64 = tpu.matmul %62, %63, %cst_36 {dimension_numbers = #tpu.dot_dimension_numbers<[1], [0], [0], [1], [0, 0, 1, 1], [], []>} : vector<1x32xbf16>, vector<32x128xbf16>, vector<1x128xf32> -> vector<1x128xf32>
    %65 = arith.addf %64, %5 : vector<1x128xf32>
    %66 = vector.extract_strided_slice %1 {offsets = [32, 0], sizes = [32, 128], strides = [1, 1]} : vector<64x128xbf16> to vector<32x128xbf16>
    %67 = arith.truncf %35 : vector<1x32xf32> to vector<1x32xbf16>
    %cst_37 = arith.constant dense<0.000000e+00> : vector<1x128xf32>
    %68 = tpu.matmul %67, %66, %cst_37 {dimension_numbers = #tpu.dot_dimension_numbers<[1], [0], [0], [1], [0, 0, 1, 1], [], []>} : vector<1x32xbf16>, vector<32x128xbf16>, vector<1x128xf32> -> vector<1x128xf32>
    %69 = arith.addf %68, %65 : vector<1x128xf32>
    %70 = vector.extract_strided_slice %69 {offsets = [0, 0], sizes = [1, 64], strides = [1, 1]} : vector<1x128xf32> to vector<1x64xf32>
    %71 = arith.negf %70 : vector<1x64xf32>
    %72 = math.exp %71 : vector<1x64xf32>
    %cst_38 = arith.constant 1.000000e+00 : f32
    %73 = vector.broadcast %cst_38 : f32 to vector<1x64xf32>
    %74 = arith.addf %73, %72 : vector<1x64xf32>
    %75 = arith.divf %73, %74 : vector<1x64xf32>
    %76 = vector.extract_strided_slice %75 {offsets = [0, 0], sizes = [1, 32], strides = [1, 1]} : vector<1x64xf32> to vector<1x32xf32>
    %77 = vector.extract_strided_slice %75 {offsets = [0, 32], sizes = [1, 32], strides = [1, 1]} : vector<1x64xf32> to vector<1x32xf32>
    %78 = vector.extract_strided_slice %69 {offsets = [0, 64], sizes = [1, 32], strides = [1, 1]} : vector<1x128xf32> to vector<1x32xf32>
    %79 = vector.extract_strided_slice %69 {offsets = [0, 96], sizes = [1, 32], strides = [1, 1]} : vector<1x128xf32> to vector<1x32xf32>
    %80 = arith.mulf %76, %79 : vector<1x32xf32>
    %81 = arith.addf %78, %80 : vector<1x32xf32>
    %82 = math.tanh %81 : vector<1x32xf32>
    %cst_39 = arith.constant 1.000000e+00 : f32
    %83 = vector.broadcast %cst_39 : f32 to vector<1x32xf32>
    %84 = arith.subf %83, %77 : vector<1x32xf32>
    %85 = arith.mulf %84, %82 : vector<1x32xf32>
    %86 = arith.mulf %77, %35 : vector<1x32xf32>
    %87 = arith.addf %85, %86 : vector<1x32xf32>
    %88 = tpu.concatenate %87, %58 in 1 : vector<1x32xf32>, vector<1x32xf32> -> vector<1x64xf32>
    %89 = arith.truncf %88 : vector<1x64xf32> to vector<1x64xbf16>
    %cst_40 = arith.constant dense<0.000000e+00> : vector<1x128xf32>
    %90 = tpu.matmul %89, %3, %cst_40 {dimension_numbers = #tpu.dot_dimension_numbers<[1], [0], [0], [1], [0, 0, 1, 1], [], []>} : vector<1x64xbf16>, vector<64x128xbf16>, vector<1x128xf32> -> vector<1x128xf32>
    %91 = arith.addf %90, %7 : vector<1x128xf32>
    %92 = vector.extract_strided_slice %91 {offsets = [0, 0], sizes = [1, 64], strides = [1, 1]} : vector<1x128xf32> to vector<1x64xf32>
    %93 = arith.negf %92 : vector<1x64xf32>
    %94 = math.exp %93 : vector<1x64xf32>
    %cst_41 = arith.constant 1.000000e+00 : f32
    %95 = vector.broadcast %cst_41 : f32 to vector<1x64xf32>
    %96 = arith.addf %95, %94 : vector<1x64xf32>
    %97 = arith.divf %95, %96 : vector<1x64xf32>
    %98 = vector.extract_strided_slice %97 {offsets = [0, 0], sizes = [1, 32], strides = [1, 1]} : vector<1x64xf32> to vector<1x32xf32>
    %99 = vector.extract_strided_slice %97 {offsets = [0, 32], sizes = [1, 32], strides = [1, 1]} : vector<1x64xf32> to vector<1x32xf32>
    %100 = vector.extract_strided_slice %91 {offsets = [0, 64], sizes = [1, 32], strides = [1, 1]} : vector<1x128xf32> to vector<1x32xf32>
    %101 = vector.extract_strided_slice %91 {offsets = [0, 96], sizes = [1, 32], strides = [1, 1]} : vector<1x128xf32> to vector<1x32xf32>
    %102 = arith.mulf %98, %101 : vector<1x32xf32>
    %103 = arith.addf %100, %102 : vector<1x32xf32>
    %104 = math.tanh %103 : vector<1x32xf32>
    %cst_42 = arith.constant 1.000000e+00 : f32
    %105 = vector.broadcast %cst_42 : f32 to vector<1x32xf32>
    %106 = arith.subf %105, %99 : vector<1x32xf32>
    %107 = arith.mulf %106, %104 : vector<1x32xf32>
    %108 = arith.mulf %99, %58 : vector<1x32xf32>
    %109 = arith.addf %107, %108 : vector<1x32xf32>
    %110 = arith.truncf %109 : vector<1x32xf32> to vector<1x32xbf16>
    %cst_43 = arith.constant dense<0.000000e+00> : vector<1x128xf32>
    %111 = tpu.matmul %110, %8, %cst_43 {dimension_numbers = #tpu.dot_dimension_numbers<[1], [0], [0], [1], [0, 0, 1, 1], [], []>} : vector<1x32xbf16>, vector<32x128xbf16>, vector<1x128xf32> -> vector<1x128xf32>
    %112 = arith.addf %111, %9 : vector<1x128xf32>
    %cst_44 = arith.constant dense<0xFF800000> : vector<1xf32>
    %113 = vector.multi_reduction <maximumf>, %112, %cst_44 [1] : vector<1x128xf32> to vector<1xf32>
    %114 = vector.shape_cast %113 : vector<1xf32> to vector<1x1xf32>
    %115 = vector.broadcast %114 : vector<1x1xf32> to vector<1x128xf32>
    %116 = arith.subf %112, %115 : vector<1x128xf32>
    %117 = math.exp %116 : vector<1x128xf32>
    %cst_45 = arith.constant dense<0.000000e+00> : vector<1xf32>
    %118 = vector.multi_reduction <add>, %117, %cst_45 [1] : vector<1x128xf32> to vector<1xf32>
    %119 = vector.shape_cast %118 : vector<1xf32> to vector<1x1xf32>
    %120 = math.log %119 : vector<1x1xf32>
    %121 = arith.addf %114, %120 : vector<1x1xf32>
    %122 = vector.broadcast %121 : vector<1x1xf32> to vector<1x128xf32>
    %123 = arith.subf %112, %122 : vector<1x128xf32>
    %cst_46 = arith.constant 1.000000e+00 : f32
    %124 = vector.broadcast %cst_46 : f32 to vector<1x128xf32>
    %125 = arith.mulf %123, %124 : vector<1x128xf32>
    %c0_47 = arith.constant 0 : index
    %126 = memref.load %arg1[%c0_47] : memref<8xi32, #tpu.memory_space<smem>>
    %c1_i32 = arith.constant 1 : i32
    %127 = arith.cmpi eq, %126, %c1_i32 : i32
    %128 = arith.extui %127 : i1 to i32
    %c0_i32 = arith.constant 0 : i32
    %129 = arith.cmpi ne, %128, %c0_i32 : i32
    %130 = scf.if %129 -> (i32) {
      %c0_i32_134 = arith.constant 0 : i32
      scf.yield %c0_i32_134 : i32
    } else {
      %597 = tpu.iota {dimensions = array<i32: 1>} : vector<1x128xi32>
      %598 = vector.broadcast %114 : vector<1x1xf32> to vector<1x128xf32>
      %599 = arith.cmpf oge, %112, %598 : vector<1x128xf32>
      %c128_i32 = arith.constant 128 : i32
      %600 = vector.broadcast %c128_i32 : i32 to vector<1x128xi32>
      %601 = arith.select %599, %597, %600 : vector<1x128xi1>, vector<1x128xi32>
      %602 = vector.shape_cast %601 : vector<1x128xi32> to vector<1x1x128xi32>
      %cst_134 = arith.constant dense<2147483647> : vector<1xi32>
      %603 = vector.multi_reduction <minsi>, %602, %cst_134 [1, 2] : vector<1x1x128xi32> to vector<1xi32>
      %604 = vector.shape_cast %603 : vector<1xi32> to vector<1x1x1xi32>
      %605 = vector.extract %604[0, 0, 0] : i32 from vector<1x1x1xi32>
      %c1_i32_135 = arith.constant 1 : i32
      %606 = arith.cmpi eq, %605, %c1_i32_135 : i32
      %607 = arith.extui %606 : i1 to i32
      scf.yield %607 : i32
    }
    %131 = arith.sitofp %130 : i32 to f32
    %cst_48 = arith.constant 1.000000e+00 : f32
    %132 = arith.subf %cst_48, %131 : f32
    %cst_49 = arith.constant 1.000000e+00 : f32
    %133 = arith.mulf %cst_49, %132 : f32
    %134 = arith.truncf %87 : vector<1x32xf32> to vector<1x32xbf16>
    %cst_50 = arith.constant dense<0.000000e+00> : vector<1x128xf32>
    %135 = tpu.matmul %134, %66, %cst_50 {dimension_numbers = #tpu.dot_dimension_numbers<[1], [0], [0], [1], [0, 0, 1, 1], [], []>} : vector<1x32xbf16>, vector<32x128xbf16>, vector<1x128xf32> -> vector<1x128xf32>
    %136 = arith.addf %135, %65 : vector<1x128xf32>
    %137 = vector.extract_strided_slice %136 {offsets = [0, 0], sizes = [1, 64], strides = [1, 1]} : vector<1x128xf32> to vector<1x64xf32>
    %138 = arith.negf %137 : vector<1x64xf32>
    %139 = math.exp %138 : vector<1x64xf32>
    %cst_51 = arith.constant 1.000000e+00 : f32
    %140 = vector.broadcast %cst_51 : f32 to vector<1x64xf32>
    %141 = arith.addf %140, %139 : vector<1x64xf32>
    %142 = arith.divf %140, %141 : vector<1x64xf32>
    %143 = vector.extract_strided_slice %142 {offsets = [0, 0], sizes = [1, 32], strides = [1, 1]} : vector<1x64xf32> to vector<1x32xf32>
    %144 = vector.extract_strided_slice %142 {offsets = [0, 32], sizes = [1, 32], strides = [1, 1]} : vector<1x64xf32> to vector<1x32xf32>
    %145 = vector.extract_strided_slice %136 {offsets = [0, 64], sizes = [1, 32], strides = [1, 1]} : vector<1x128xf32> to vector<1x32xf32>
    %146 = vector.extract_strided_slice %136 {offsets = [0, 96], sizes = [1, 32], strides = [1, 1]} : vector<1x128xf32> to vector<1x32xf32>
    %147 = arith.mulf %143, %146 : vector<1x32xf32>
    %148 = arith.addf %145, %147 : vector<1x32xf32>
    %149 = math.tanh %148 : vector<1x32xf32>
    %cst_52 = arith.constant 1.000000e+00 : f32
    %150 = vector.broadcast %cst_52 : f32 to vector<1x32xf32>
    %151 = arith.subf %150, %144 : vector<1x32xf32>
    %152 = arith.mulf %151, %149 : vector<1x32xf32>
    %153 = arith.mulf %144, %87 : vector<1x32xf32>
    %154 = arith.addf %152, %153 : vector<1x32xf32>
    %155 = tpu.concatenate %154, %109 in 1 : vector<1x32xf32>, vector<1x32xf32> -> vector<1x64xf32>
    %156 = arith.truncf %155 : vector<1x64xf32> to vector<1x64xbf16>
    %cst_53 = arith.constant dense<0.000000e+00> : vector<1x128xf32>
    %157 = tpu.matmul %156, %3, %cst_53 {dimension_numbers = #tpu.dot_dimension_numbers<[1], [0], [0], [1], [0, 0, 1, 1], [], []>} : vector<1x64xbf16>, vector<64x128xbf16>, vector<1x128xf32> -> vector<1x128xf32>
    %158 = arith.addf %157, %7 : vector<1x128xf32>
    %159 = vector.extract_strided_slice %158 {offsets = [0, 0], sizes = [1, 64], strides = [1, 1]} : vector<1x128xf32> to vector<1x64xf32>
    %160 = arith.negf %159 : vector<1x64xf32>
    %161 = math.exp %160 : vector<1x64xf32>
    %cst_54 = arith.constant 1.000000e+00 : f32
    %162 = vector.broadcast %cst_54 : f32 to vector<1x64xf32>
    %163 = arith.addf %162, %161 : vector<1x64xf32>
    %164 = arith.divf %162, %163 : vector<1x64xf32>
    %165 = vector.extract_strided_slice %164 {offsets = [0, 0], sizes = [1, 32], strides = [1, 1]} : vector<1x64xf32> to vector<1x32xf32>
    %166 = vector.extract_strided_slice %164 {offsets = [0, 32], sizes = [1, 32], strides = [1, 1]} : vector<1x64xf32> to vector<1x32xf32>
    %167 = vector.extract_strided_slice %158 {offsets = [0, 64], sizes = [1, 32], strides = [1, 1]} : vector<1x128xf32> to vector<1x32xf32>
    %168 = vector.extract_strided_slice %158 {offsets = [0, 96], sizes = [1, 32], strides = [1, 1]} : vector<1x128xf32> to vector<1x32xf32>
    %169 = arith.mulf %165, %168 : vector<1x32xf32>
    %170 = arith.addf %167, %169 : vector<1x32xf32>
    %171 = math.tanh %170 : vector<1x32xf32>
    %cst_55 = arith.constant 1.000000e+00 : f32
    %172 = vector.broadcast %cst_55 : f32 to vector<1x32xf32>
    %173 = arith.subf %172, %166 : vector<1x32xf32>
    %174 = arith.mulf %173, %171 : vector<1x32xf32>
    %175 = arith.mulf %166, %109 : vector<1x32xf32>
    %176 = arith.addf %174, %175 : vector<1x32xf32>
    %177 = arith.truncf %176 : vector<1x32xf32> to vector<1x32xbf16>
    %cst_56 = arith.constant dense<0.000000e+00> : vector<1x128xf32>
    %178 = tpu.matmul %177, %8, %cst_56 {dimension_numbers = #tpu.dot_dimension_numbers<[1], [0], [0], [1], [0, 0, 1, 1], [], []>} : vector<1x32xbf16>, vector<32x128xbf16>, vector<1x128xf32> -> vector<1x128xf32>
    %179 = arith.addf %178, %9 : vector<1x128xf32>
    %cst_57 = arith.constant dense<0xFF800000> : vector<1xf32>
    %180 = vector.multi_reduction <maximumf>, %179, %cst_57 [1] : vector<1x128xf32> to vector<1xf32>
    %181 = vector.shape_cast %180 : vector<1xf32> to vector<1x1xf32>
    %182 = vector.broadcast %181 : vector<1x1xf32> to vector<1x128xf32>
    %183 = arith.subf %179, %182 : vector<1x128xf32>
    %184 = math.exp %183 : vector<1x128xf32>
    %cst_58 = arith.constant dense<0.000000e+00> : vector<1xf32>
    %185 = vector.multi_reduction <add>, %184, %cst_58 [1] : vector<1x128xf32> to vector<1xf32>
    %186 = vector.shape_cast %185 : vector<1xf32> to vector<1x1xf32>
    %187 = math.log %186 : vector<1x1xf32>
    %188 = arith.addf %181, %187 : vector<1x1xf32>
    %189 = vector.broadcast %188 : vector<1x1xf32> to vector<1x128xf32>
    %190 = arith.subf %179, %189 : vector<1x128xf32>
    %191 = vector.broadcast %133 : f32 to vector<1x128xf32>
    %192 = arith.mulf %190, %191 : vector<1x128xf32>
    %c1_59 = arith.constant 1 : index
    %193 = memref.load %arg1[%c1_59] : memref<8xi32, #tpu.memory_space<smem>>
    %c1_i32_60 = arith.constant 1 : i32
    %194 = arith.cmpi eq, %193, %c1_i32_60 : i32
    %195 = arith.extui %194 : i1 to i32
    %c0_i32_61 = arith.constant 0 : i32
    %196 = arith.cmpi ne, %195, %c0_i32_61 : i32
    %197 = scf.if %196 -> (i32) {
      %c0_i32_134 = arith.constant 0 : i32
      scf.yield %c0_i32_134 : i32
    } else {
      %597 = tpu.iota {dimensions = array<i32: 1>} : vector<1x128xi32>
      %598 = vector.broadcast %181 : vector<1x1xf32> to vector<1x128xf32>
      %599 = arith.cmpf oge, %179, %598 : vector<1x128xf32>
      %c128_i32 = arith.constant 128 : i32
      %600 = vector.broadcast %c128_i32 : i32 to vector<1x128xi32>
      %601 = arith.select %599, %597, %600 : vector<1x128xi1>, vector<1x128xi32>
      %602 = vector.shape_cast %601 : vector<1x128xi32> to vector<1x1x128xi32>
      %cst_134 = arith.constant dense<2147483647> : vector<1xi32>
      %603 = vector.multi_reduction <minsi>, %602, %cst_134 [1, 2] : vector<1x1x128xi32> to vector<1xi32>
      %604 = vector.shape_cast %603 : vector<1xi32> to vector<1x1x1xi32>
      %605 = vector.extract %604[0, 0, 0] : i32 from vector<1x1x1xi32>
      %c1_i32_135 = arith.constant 1 : i32
      %606 = arith.cmpi eq, %605, %c1_i32_135 : i32
      %607 = arith.extui %606 : i1 to i32
      scf.yield %607 : i32
    }
    %198 = arith.sitofp %197 : i32 to f32
    %cst_62 = arith.constant 1.000000e+00 : f32
    %199 = arith.subf %cst_62, %198 : f32
    %200 = arith.mulf %133, %199 : f32
    %201 = arith.truncf %154 : vector<1x32xf32> to vector<1x32xbf16>
    %cst_63 = arith.constant dense<0.000000e+00> : vector<1x128xf32>
    %202 = tpu.matmul %201, %66, %cst_63 {dimension_numbers = #tpu.dot_dimension_numbers<[1], [0], [0], [1], [0, 0, 1, 1], [], []>} : vector<1x32xbf16>, vector<32x128xbf16>, vector<1x128xf32> -> vector<1x128xf32>
    %203 = arith.addf %202, %65 : vector<1x128xf32>
    %204 = vector.extract_strided_slice %203 {offsets = [0, 0], sizes = [1, 64], strides = [1, 1]} : vector<1x128xf32> to vector<1x64xf32>
    %205 = arith.negf %204 : vector<1x64xf32>
    %206 = math.exp %205 : vector<1x64xf32>
    %cst_64 = arith.constant 1.000000e+00 : f32
    %207 = vector.broadcast %cst_64 : f32 to vector<1x64xf32>
    %208 = arith.addf %207, %206 : vector<1x64xf32>
    %209 = arith.divf %207, %208 : vector<1x64xf32>
    %210 = vector.extract_strided_slice %209 {offsets = [0, 0], sizes = [1, 32], strides = [1, 1]} : vector<1x64xf32> to vector<1x32xf32>
    %211 = vector.extract_strided_slice %209 {offsets = [0, 32], sizes = [1, 32], strides = [1, 1]} : vector<1x64xf32> to vector<1x32xf32>
    %212 = vector.extract_strided_slice %203 {offsets = [0, 64], sizes = [1, 32], strides = [1, 1]} : vector<1x128xf32> to vector<1x32xf32>
    %213 = vector.extract_strided_slice %203 {offsets = [0, 96], sizes = [1, 32], strides = [1, 1]} : vector<1x128xf32> to vector<1x32xf32>
    %214 = arith.mulf %210, %213 : vector<1x32xf32>
    %215 = arith.addf %212, %214 : vector<1x32xf32>
    %216 = math.tanh %215 : vector<1x32xf32>
    %cst_65 = arith.constant 1.000000e+00 : f32
    %217 = vector.broadcast %cst_65 : f32 to vector<1x32xf32>
    %218 = arith.subf %217, %211 : vector<1x32xf32>
    %219 = arith.mulf %218, %216 : vector<1x32xf32>
    %220 = arith.mulf %211, %154 : vector<1x32xf32>
    %221 = arith.addf %219, %220 : vector<1x32xf32>
    %222 = tpu.concatenate %221, %176 in 1 : vector<1x32xf32>, vector<1x32xf32> -> vector<1x64xf32>
    %223 = arith.truncf %222 : vector<1x64xf32> to vector<1x64xbf16>
    %cst_66 = arith.constant dense<0.000000e+00> : vector<1x128xf32>
    %224 = tpu.matmul %223, %3, %cst_66 {dimension_numbers = #tpu.dot_dimension_numbers<[1], [0], [0], [1], [0, 0, 1, 1], [], []>} : vector<1x64xbf16>, vector<64x128xbf16>, vector<1x128xf32> -> vector<1x128xf32>
    %225 = arith.addf %224, %7 : vector<1x128xf32>
    %226 = vector.extract_strided_slice %225 {offsets = [0, 0], sizes = [1, 64], strides = [1, 1]} : vector<1x128xf32> to vector<1x64xf32>
    %227 = arith.negf %226 : vector<1x64xf32>
    %228 = math.exp %227 : vector<1x64xf32>
    %cst_67 = arith.constant 1.000000e+00 : f32
    %229 = vector.broadcast %cst_67 : f32 to vector<1x64xf32>
    %230 = arith.addf %229, %228 : vector<1x64xf32>
    %231 = arith.divf %229, %230 : vector<1x64xf32>
    %232 = vector.extract_strided_slice %231 {offsets = [0, 0], sizes = [1, 32], strides = [1, 1]} : vector<1x64xf32> to vector<1x32xf32>
    %233 = vector.extract_strided_slice %231 {offsets = [0, 32], sizes = [1, 32], strides = [1, 1]} : vector<1x64xf32> to vector<1x32xf32>
    %234 = vector.extract_strided_slice %225 {offsets = [0, 64], sizes = [1, 32], strides = [1, 1]} : vector<1x128xf32> to vector<1x32xf32>
    %235 = vector.extract_strided_slice %225 {offsets = [0, 96], sizes = [1, 32], strides = [1, 1]} : vector<1x128xf32> to vector<1x32xf32>
    %236 = arith.mulf %232, %235 : vector<1x32xf32>
    %237 = arith.addf %234, %236 : vector<1x32xf32>
    %238 = math.tanh %237 : vector<1x32xf32>
    %cst_68 = arith.constant 1.000000e+00 : f32
    %239 = vector.broadcast %cst_68 : f32 to vector<1x32xf32>
    %240 = arith.subf %239, %233 : vector<1x32xf32>
    %241 = arith.mulf %240, %238 : vector<1x32xf32>
    %242 = arith.mulf %233, %176 : vector<1x32xf32>
    %243 = arith.addf %241, %242 : vector<1x32xf32>
    %244 = arith.truncf %243 : vector<1x32xf32> to vector<1x32xbf16>
    %cst_69 = arith.constant dense<0.000000e+00> : vector<1x128xf32>
    %245 = tpu.matmul %244, %8, %cst_69 {dimension_numbers = #tpu.dot_dimension_numbers<[1], [0], [0], [1], [0, 0, 1, 1], [], []>} : vector<1x32xbf16>, vector<32x128xbf16>, vector<1x128xf32> -> vector<1x128xf32>
    %246 = arith.addf %245, %9 : vector<1x128xf32>
    %cst_70 = arith.constant dense<0xFF800000> : vector<1xf32>
    %247 = vector.multi_reduction <maximumf>, %246, %cst_70 [1] : vector<1x128xf32> to vector<1xf32>
    %248 = vector.shape_cast %247 : vector<1xf32> to vector<1x1xf32>
    %249 = vector.broadcast %248 : vector<1x1xf32> to vector<1x128xf32>
    %250 = arith.subf %246, %249 : vector<1x128xf32>
    %251 = math.exp %250 : vector<1x128xf32>
    %cst_71 = arith.constant dense<0.000000e+00> : vector<1xf32>
    %252 = vector.multi_reduction <add>, %251, %cst_71 [1] : vector<1x128xf32> to vector<1xf32>
    %253 = vector.shape_cast %252 : vector<1xf32> to vector<1x1xf32>
    %254 = math.log %253 : vector<1x1xf32>
    %255 = arith.addf %248, %254 : vector<1x1xf32>
    %256 = vector.broadcast %255 : vector<1x1xf32> to vector<1x128xf32>
    %257 = arith.subf %246, %256 : vector<1x128xf32>
    %258 = vector.broadcast %200 : f32 to vector<1x128xf32>
    %259 = arith.mulf %257, %258 : vector<1x128xf32>
    %c2 = arith.constant 2 : index
    %260 = memref.load %arg1[%c2] : memref<8xi32, #tpu.memory_space<smem>>
    %c1_i32_72 = arith.constant 1 : i32
    %261 = arith.cmpi eq, %260, %c1_i32_72 : i32
    %262 = arith.extui %261 : i1 to i32
    %c0_i32_73 = arith.constant 0 : i32
    %263 = arith.cmpi ne, %262, %c0_i32_73 : i32
    %264 = scf.if %263 -> (i32) {
      %c0_i32_134 = arith.constant 0 : i32
      scf.yield %c0_i32_134 : i32
    } else {
      %597 = tpu.iota {dimensions = array<i32: 1>} : vector<1x128xi32>
      %598 = vector.broadcast %248 : vector<1x1xf32> to vector<1x128xf32>
      %599 = arith.cmpf oge, %246, %598 : vector<1x128xf32>
      %c128_i32 = arith.constant 128 : i32
      %600 = vector.broadcast %c128_i32 : i32 to vector<1x128xi32>
      %601 = arith.select %599, %597, %600 : vector<1x128xi1>, vector<1x128xi32>
      %602 = vector.shape_cast %601 : vector<1x128xi32> to vector<1x1x128xi32>
      %cst_134 = arith.constant dense<2147483647> : vector<1xi32>
      %603 = vector.multi_reduction <minsi>, %602, %cst_134 [1, 2] : vector<1x1x128xi32> to vector<1xi32>
      %604 = vector.shape_cast %603 : vector<1xi32> to vector<1x1x1xi32>
      %605 = vector.extract %604[0, 0, 0] : i32 from vector<1x1x1xi32>
      %c1_i32_135 = arith.constant 1 : i32
      %606 = arith.cmpi eq, %605, %c1_i32_135 : i32
      %607 = arith.extui %606 : i1 to i32
      scf.yield %607 : i32
    }
    %265 = arith.sitofp %264 : i32 to f32
    %cst_74 = arith.constant 1.000000e+00 : f32
    %266 = arith.subf %cst_74, %265 : f32
    %267 = arith.mulf %200, %266 : f32
    %268 = arith.truncf %221 : vector<1x32xf32> to vector<1x32xbf16>
    %cst_75 = arith.constant dense<0.000000e+00> : vector<1x128xf32>
    %269 = tpu.matmul %268, %66, %cst_75 {dimension_numbers = #tpu.dot_dimension_numbers<[1], [0], [0], [1], [0, 0, 1, 1], [], []>} : vector<1x32xbf16>, vector<32x128xbf16>, vector<1x128xf32> -> vector<1x128xf32>
    %270 = arith.addf %269, %65 : vector<1x128xf32>
    %271 = vector.extract_strided_slice %270 {offsets = [0, 0], sizes = [1, 64], strides = [1, 1]} : vector<1x128xf32> to vector<1x64xf32>
    %272 = arith.negf %271 : vector<1x64xf32>
    %273 = math.exp %272 : vector<1x64xf32>
    %cst_76 = arith.constant 1.000000e+00 : f32
    %274 = vector.broadcast %cst_76 : f32 to vector<1x64xf32>
    %275 = arith.addf %274, %273 : vector<1x64xf32>
    %276 = arith.divf %274, %275 : vector<1x64xf32>
    %277 = vector.extract_strided_slice %276 {offsets = [0, 0], sizes = [1, 32], strides = [1, 1]} : vector<1x64xf32> to vector<1x32xf32>
    %278 = vector.extract_strided_slice %276 {offsets = [0, 32], sizes = [1, 32], strides = [1, 1]} : vector<1x64xf32> to vector<1x32xf32>
    %279 = vector.extract_strided_slice %270 {offsets = [0, 64], sizes = [1, 32], strides = [1, 1]} : vector<1x128xf32> to vector<1x32xf32>
    %280 = vector.extract_strided_slice %270 {offsets = [0, 96], sizes = [1, 32], strides = [1, 1]} : vector<1x128xf32> to vector<1x32xf32>
    %281 = arith.mulf %277, %280 : vector<1x32xf32>
    %282 = arith.addf %279, %281 : vector<1x32xf32>
    %283 = math.tanh %282 : vector<1x32xf32>
    %cst_77 = arith.constant 1.000000e+00 : f32
    %284 = vector.broadcast %cst_77 : f32 to vector<1x32xf32>
    %285 = arith.subf %284, %278 : vector<1x32xf32>
    %286 = arith.mulf %285, %283 : vector<1x32xf32>
    %287 = arith.mulf %278, %221 : vector<1x32xf32>
    %288 = arith.addf %286, %287 : vector<1x32xf32>
    %289 = tpu.concatenate %288, %243 in 1 : vector<1x32xf32>, vector<1x32xf32> -> vector<1x64xf32>
    %290 = arith.truncf %289 : vector<1x64xf32> to vector<1x64xbf16>
    %cst_78 = arith.constant dense<0.000000e+00> : vector<1x128xf32>
    %291 = tpu.matmul %290, %3, %cst_78 {dimension_numbers = #tpu.dot_dimension_numbers<[1], [0], [0], [1], [0, 0, 1, 1], [], []>} : vector<1x64xbf16>, vector<64x128xbf16>, vector<1x128xf32> -> vector<1x128xf32>
    %292 = arith.addf %291, %7 : vector<1x128xf32>
    %293 = vector.extract_strided_slice %292 {offsets = [0, 0], sizes = [1, 64], strides = [1, 1]} : vector<1x128xf32> to vector<1x64xf32>
    %294 = arith.negf %293 : vector<1x64xf32>
    %295 = math.exp %294 : vector<1x64xf32>
    %cst_79 = arith.constant 1.000000e+00 : f32
    %296 = vector.broadcast %cst_79 : f32 to vector<1x64xf32>
    %297 = arith.addf %296, %295 : vector<1x64xf32>
    %298 = arith.divf %296, %297 : vector<1x64xf32>
    %299 = vector.extract_strided_slice %298 {offsets = [0, 0], sizes = [1, 32], strides = [1, 1]} : vector<1x64xf32> to vector<1x32xf32>
    %300 = vector.extract_strided_slice %298 {offsets = [0, 32], sizes = [1, 32], strides = [1, 1]} : vector<1x64xf32> to vector<1x32xf32>
    %301 = vector.extract_strided_slice %292 {offsets = [0, 64], sizes = [1, 32], strides = [1, 1]} : vector<1x128xf32> to vector<1x32xf32>
    %302 = vector.extract_strided_slice %292 {offsets = [0, 96], sizes = [1, 32], strides = [1, 1]} : vector<1x128xf32> to vector<1x32xf32>
    %303 = arith.mulf %299, %302 : vector<1x32xf32>
    %304 = arith.addf %301, %303 : vector<1x32xf32>
    %305 = math.tanh %304 : vector<1x32xf32>
    %cst_80 = arith.constant 1.000000e+00 : f32
    %306 = vector.broadcast %cst_80 : f32 to vector<1x32xf32>
    %307 = arith.subf %306, %300 : vector<1x32xf32>
    %308 = arith.mulf %307, %305 : vector<1x32xf32>
    %309 = arith.mulf %300, %243 : vector<1x32xf32>
    %310 = arith.addf %308, %309 : vector<1x32xf32>
    %311 = arith.truncf %310 : vector<1x32xf32> to vector<1x32xbf16>
    %cst_81 = arith.constant dense<0.000000e+00> : vector<1x128xf32>
    %312 = tpu.matmul %311, %8, %cst_81 {dimension_numbers = #tpu.dot_dimension_numbers<[1], [0], [0], [1], [0, 0, 1, 1], [], []>} : vector<1x32xbf16>, vector<32x128xbf16>, vector<1x128xf32> -> vector<1x128xf32>
    %313 = arith.addf %312, %9 : vector<1x128xf32>
    %cst_82 = arith.constant dense<0xFF800000> : vector<1xf32>
    %314 = vector.multi_reduction <maximumf>, %313, %cst_82 [1] : vector<1x128xf32> to vector<1xf32>
    %315 = vector.shape_cast %314 : vector<1xf32> to vector<1x1xf32>
    %316 = vector.broadcast %315 : vector<1x1xf32> to vector<1x128xf32>
    %317 = arith.subf %313, %316 : vector<1x128xf32>
    %318 = math.exp %317 : vector<1x128xf32>
    %cst_83 = arith.constant dense<0.000000e+00> : vector<1xf32>
    %319 = vector.multi_reduction <add>, %318, %cst_83 [1] : vector<1x128xf32> to vector<1xf32>
    %320 = vector.shape_cast %319 : vector<1xf32> to vector<1x1xf32>
    %321 = math.log %320 : vector<1x1xf32>
    %322 = arith.addf %315, %321 : vector<1x1xf32>
    %323 = vector.broadcast %322 : vector<1x1xf32> to vector<1x128xf32>
    %324 = arith.subf %313, %323 : vector<1x128xf32>
    %325 = vector.broadcast %267 : f32 to vector<1x128xf32>
    %326 = arith.mulf %324, %325 : vector<1x128xf32>
    %c3 = arith.constant 3 : index
    %327 = memref.load %arg1[%c3] : memref<8xi32, #tpu.memory_space<smem>>
    %c1_i32_84 = arith.constant 1 : i32
    %328 = arith.cmpi eq, %327, %c1_i32_84 : i32
    %329 = arith.extui %328 : i1 to i32
    %c0_i32_85 = arith.constant 0 : i32
    %330 = arith.cmpi ne, %329, %c0_i32_85 : i32
    %331 = scf.if %330 -> (i32) {
      %c0_i32_134 = arith.constant 0 : i32
      scf.yield %c0_i32_134 : i32
    } else {
      %597 = tpu.iota {dimensions = array<i32: 1>} : vector<1x128xi32>
      %598 = vector.broadcast %315 : vector<1x1xf32> to vector<1x128xf32>
      %599 = arith.cmpf oge, %313, %598 : vector<1x128xf32>
      %c128_i32 = arith.constant 128 : i32
      %600 = vector.broadcast %c128_i32 : i32 to vector<1x128xi32>
      %601 = arith.select %599, %597, %600 : vector<1x128xi1>, vector<1x128xi32>
      %602 = vector.shape_cast %601 : vector<1x128xi32> to vector<1x1x128xi32>
      %cst_134 = arith.constant dense<2147483647> : vector<1xi32>
      %603 = vector.multi_reduction <minsi>, %602, %cst_134 [1, 2] : vector<1x1x128xi32> to vector<1xi32>
      %604 = vector.shape_cast %603 : vector<1xi32> to vector<1x1x1xi32>
      %605 = vector.extract %604[0, 0, 0] : i32 from vector<1x1x1xi32>
      %c1_i32_135 = arith.constant 1 : i32
      %606 = arith.cmpi eq, %605, %c1_i32_135 : i32
      %607 = arith.extui %606 : i1 to i32
      scf.yield %607 : i32
    }
    %332 = arith.sitofp %331 : i32 to f32
    %cst_86 = arith.constant 1.000000e+00 : f32
    %333 = arith.subf %cst_86, %332 : f32
    %334 = arith.mulf %267, %333 : f32
    %335 = arith.truncf %288 : vector<1x32xf32> to vector<1x32xbf16>
    %cst_87 = arith.constant dense<0.000000e+00> : vector<1x128xf32>
    %336 = tpu.matmul %335, %66, %cst_87 {dimension_numbers = #tpu.dot_dimension_numbers<[1], [0], [0], [1], [0, 0, 1, 1], [], []>} : vector<1x32xbf16>, vector<32x128xbf16>, vector<1x128xf32> -> vector<1x128xf32>
    %337 = arith.addf %336, %65 : vector<1x128xf32>
    %338 = vector.extract_strided_slice %337 {offsets = [0, 0], sizes = [1, 64], strides = [1, 1]} : vector<1x128xf32> to vector<1x64xf32>
    %339 = arith.negf %338 : vector<1x64xf32>
    %340 = math.exp %339 : vector<1x64xf32>
    %cst_88 = arith.constant 1.000000e+00 : f32
    %341 = vector.broadcast %cst_88 : f32 to vector<1x64xf32>
    %342 = arith.addf %341, %340 : vector<1x64xf32>
    %343 = arith.divf %341, %342 : vector<1x64xf32>
    %344 = vector.extract_strided_slice %343 {offsets = [0, 0], sizes = [1, 32], strides = [1, 1]} : vector<1x64xf32> to vector<1x32xf32>
    %345 = vector.extract_strided_slice %343 {offsets = [0, 32], sizes = [1, 32], strides = [1, 1]} : vector<1x64xf32> to vector<1x32xf32>
    %346 = vector.extract_strided_slice %337 {offsets = [0, 64], sizes = [1, 32], strides = [1, 1]} : vector<1x128xf32> to vector<1x32xf32>
    %347 = vector.extract_strided_slice %337 {offsets = [0, 96], sizes = [1, 32], strides = [1, 1]} : vector<1x128xf32> to vector<1x32xf32>
    %348 = arith.mulf %344, %347 : vector<1x32xf32>
    %349 = arith.addf %346, %348 : vector<1x32xf32>
    %350 = math.tanh %349 : vector<1x32xf32>
    %cst_89 = arith.constant 1.000000e+00 : f32
    %351 = vector.broadcast %cst_89 : f32 to vector<1x32xf32>
    %352 = arith.subf %351, %345 : vector<1x32xf32>
    %353 = arith.mulf %352, %350 : vector<1x32xf32>
    %354 = arith.mulf %345, %288 : vector<1x32xf32>
    %355 = arith.addf %353, %354 : vector<1x32xf32>
    %356 = tpu.concatenate %355, %310 in 1 : vector<1x32xf32>, vector<1x32xf32> -> vector<1x64xf32>
    %357 = arith.truncf %356 : vector<1x64xf32> to vector<1x64xbf16>
    %cst_90 = arith.constant dense<0.000000e+00> : vector<1x128xf32>
    %358 = tpu.matmul %357, %3, %cst_90 {dimension_numbers = #tpu.dot_dimension_numbers<[1], [0], [0], [1], [0, 0, 1, 1], [], []>} : vector<1x64xbf16>, vector<64x128xbf16>, vector<1x128xf32> -> vector<1x128xf32>
    %359 = arith.addf %358, %7 : vector<1x128xf32>
    %360 = vector.extract_strided_slice %359 {offsets = [0, 0], sizes = [1, 64], strides = [1, 1]} : vector<1x128xf32> to vector<1x64xf32>
    %361 = arith.negf %360 : vector<1x64xf32>
    %362 = math.exp %361 : vector<1x64xf32>
    %cst_91 = arith.constant 1.000000e+00 : f32
    %363 = vector.broadcast %cst_91 : f32 to vector<1x64xf32>
    %364 = arith.addf %363, %362 : vector<1x64xf32>
    %365 = arith.divf %363, %364 : vector<1x64xf32>
    %366 = vector.extract_strided_slice %365 {offsets = [0, 0], sizes = [1, 32], strides = [1, 1]} : vector<1x64xf32> to vector<1x32xf32>
    %367 = vector.extract_strided_slice %365 {offsets = [0, 32], sizes = [1, 32], strides = [1, 1]} : vector<1x64xf32> to vector<1x32xf32>
    %368 = vector.extract_strided_slice %359 {offsets = [0, 64], sizes = [1, 32], strides = [1, 1]} : vector<1x128xf32> to vector<1x32xf32>
    %369 = vector.extract_strided_slice %359 {offsets = [0, 96], sizes = [1, 32], strides = [1, 1]} : vector<1x128xf32> to vector<1x32xf32>
    %370 = arith.mulf %366, %369 : vector<1x32xf32>
    %371 = arith.addf %368, %370 : vector<1x32xf32>
    %372 = math.tanh %371 : vector<1x32xf32>
    %cst_92 = arith.constant 1.000000e+00 : f32
    %373 = vector.broadcast %cst_92 : f32 to vector<1x32xf32>
    %374 = arith.subf %373, %367 : vector<1x32xf32>
    %375 = arith.mulf %374, %372 : vector<1x32xf32>
    %376 = arith.mulf %367, %310 : vector<1x32xf32>
    %377 = arith.addf %375, %376 : vector<1x32xf32>
    %378 = arith.truncf %377 : vector<1x32xf32> to vector<1x32xbf16>
    %cst_93 = arith.constant dense<0.000000e+00> : vector<1x128xf32>
    %379 = tpu.matmul %378, %8, %cst_93 {dimension_numbers = #tpu.dot_dimension_numbers<[1], [0], [0], [1], [0, 0, 1, 1], [], []>} : vector<1x32xbf16>, vector<32x128xbf16>, vector<1x128xf32> -> vector<1x128xf32>
    %380 = arith.addf %379, %9 : vector<1x128xf32>
    %cst_94 = arith.constant dense<0xFF800000> : vector<1xf32>
    %381 = vector.multi_reduction <maximumf>, %380, %cst_94 [1] : vector<1x128xf32> to vector<1xf32>
    %382 = vector.shape_cast %381 : vector<1xf32> to vector<1x1xf32>
    %383 = vector.broadcast %382 : vector<1x1xf32> to vector<1x128xf32>
    %384 = arith.subf %380, %383 : vector<1x128xf32>
    %385 = math.exp %384 : vector<1x128xf32>
    %cst_95 = arith.constant dense<0.000000e+00> : vector<1xf32>
    %386 = vector.multi_reduction <add>, %385, %cst_95 [1] : vector<1x128xf32> to vector<1xf32>
    %387 = vector.shape_cast %386 : vector<1xf32> to vector<1x1xf32>
    %388 = math.log %387 : vector<1x1xf32>
    %389 = arith.addf %382, %388 : vector<1x1xf32>
    %390 = vector.broadcast %389 : vector<1x1xf32> to vector<1x128xf32>
    %391 = arith.subf %380, %390 : vector<1x128xf32>
    %392 = vector.broadcast %334 : f32 to vector<1x128xf32>
    %393 = arith.mulf %391, %392 : vector<1x128xf32>
    %c4 = arith.constant 4 : index
    %394 = memref.load %arg1[%c4] : memref<8xi32, #tpu.memory_space<smem>>
    %c1_i32_96 = arith.constant 1 : i32
    %395 = arith.cmpi eq, %394, %c1_i32_96 : i32
    %396 = arith.extui %395 : i1 to i32
    %c0_i32_97 = arith.constant 0 : i32
    %397 = arith.cmpi ne, %396, %c0_i32_97 : i32
    %398 = scf.if %397 -> (i32) {
      %c0_i32_134 = arith.constant 0 : i32
      scf.yield %c0_i32_134 : i32
    } else {
      %597 = tpu.iota {dimensions = array<i32: 1>} : vector<1x128xi32>
      %598 = vector.broadcast %382 : vector<1x1xf32> to vector<1x128xf32>
      %599 = arith.cmpf oge, %380, %598 : vector<1x128xf32>
      %c128_i32 = arith.constant 128 : i32
      %600 = vector.broadcast %c128_i32 : i32 to vector<1x128xi32>
      %601 = arith.select %599, %597, %600 : vector<1x128xi1>, vector<1x128xi32>
      %602 = vector.shape_cast %601 : vector<1x128xi32> to vector<1x1x128xi32>
      %cst_134 = arith.constant dense<2147483647> : vector<1xi32>
      %603 = vector.multi_reduction <minsi>, %602, %cst_134 [1, 2] : vector<1x1x128xi32> to vector<1xi32>
      %604 = vector.shape_cast %603 : vector<1xi32> to vector<1x1x1xi32>
      %605 = vector.extract %604[0, 0, 0] : i32 from vector<1x1x1xi32>
      %c1_i32_135 = arith.constant 1 : i32
      %606 = arith.cmpi eq, %605, %c1_i32_135 : i32
      %607 = arith.extui %606 : i1 to i32
      scf.yield %607 : i32
    }
    %399 = arith.sitofp %398 : i32 to f32
    %cst_98 = arith.constant 1.000000e+00 : f32
    %400 = arith.subf %cst_98, %399 : f32
    %401 = arith.mulf %334, %400 : f32
    %402 = arith.truncf %355 : vector<1x32xf32> to vector<1x32xbf16>
    %cst_99 = arith.constant dense<0.000000e+00> : vector<1x128xf32>
    %403 = tpu.matmul %402, %66, %cst_99 {dimension_numbers = #tpu.dot_dimension_numbers<[1], [0], [0], [1], [0, 0, 1, 1], [], []>} : vector<1x32xbf16>, vector<32x128xbf16>, vector<1x128xf32> -> vector<1x128xf32>
    %404 = arith.addf %403, %65 : vector<1x128xf32>
    %405 = vector.extract_strided_slice %404 {offsets = [0, 0], sizes = [1, 64], strides = [1, 1]} : vector<1x128xf32> to vector<1x64xf32>
    %406 = arith.negf %405 : vector<1x64xf32>
    %407 = math.exp %406 : vector<1x64xf32>
    %cst_100 = arith.constant 1.000000e+00 : f32
    %408 = vector.broadcast %cst_100 : f32 to vector<1x64xf32>
    %409 = arith.addf %408, %407 : vector<1x64xf32>
    %410 = arith.divf %408, %409 : vector<1x64xf32>
    %411 = vector.extract_strided_slice %410 {offsets = [0, 0], sizes = [1, 32], strides = [1, 1]} : vector<1x64xf32> to vector<1x32xf32>
    %412 = vector.extract_strided_slice %410 {offsets = [0, 32], sizes = [1, 32], strides = [1, 1]} : vector<1x64xf32> to vector<1x32xf32>
    %413 = vector.extract_strided_slice %404 {offsets = [0, 64], sizes = [1, 32], strides = [1, 1]} : vector<1x128xf32> to vector<1x32xf32>
    %414 = vector.extract_strided_slice %404 {offsets = [0, 96], sizes = [1, 32], strides = [1, 1]} : vector<1x128xf32> to vector<1x32xf32>
    %415 = arith.mulf %411, %414 : vector<1x32xf32>
    %416 = arith.addf %413, %415 : vector<1x32xf32>
    %417 = math.tanh %416 : vector<1x32xf32>
    %cst_101 = arith.constant 1.000000e+00 : f32
    %418 = vector.broadcast %cst_101 : f32 to vector<1x32xf32>
    %419 = arith.subf %418, %412 : vector<1x32xf32>
    %420 = arith.mulf %419, %417 : vector<1x32xf32>
    %421 = arith.mulf %412, %355 : vector<1x32xf32>
    %422 = arith.addf %420, %421 : vector<1x32xf32>
    %423 = tpu.concatenate %422, %377 in 1 : vector<1x32xf32>, vector<1x32xf32> -> vector<1x64xf32>
    %424 = arith.truncf %423 : vector<1x64xf32> to vector<1x64xbf16>
    %cst_102 = arith.constant dense<0.000000e+00> : vector<1x128xf32>
    %425 = tpu.matmul %424, %3, %cst_102 {dimension_numbers = #tpu.dot_dimension_numbers<[1], [0], [0], [1], [0, 0, 1, 1], [], []>} : vector<1x64xbf16>, vector<64x128xbf16>, vector<1x128xf32> -> vector<1x128xf32>
    %426 = arith.addf %425, %7 : vector<1x128xf32>
    %427 = vector.extract_strided_slice %426 {offsets = [0, 0], sizes = [1, 64], strides = [1, 1]} : vector<1x128xf32> to vector<1x64xf32>
    %428 = arith.negf %427 : vector<1x64xf32>
    %429 = math.exp %428 : vector<1x64xf32>
    %cst_103 = arith.constant 1.000000e+00 : f32
    %430 = vector.broadcast %cst_103 : f32 to vector<1x64xf32>
    %431 = arith.addf %430, %429 : vector<1x64xf32>
    %432 = arith.divf %430, %431 : vector<1x64xf32>
    %433 = vector.extract_strided_slice %432 {offsets = [0, 0], sizes = [1, 32], strides = [1, 1]} : vector<1x64xf32> to vector<1x32xf32>
    %434 = vector.extract_strided_slice %432 {offsets = [0, 32], sizes = [1, 32], strides = [1, 1]} : vector<1x64xf32> to vector<1x32xf32>
    %435 = vector.extract_strided_slice %426 {offsets = [0, 64], sizes = [1, 32], strides = [1, 1]} : vector<1x128xf32> to vector<1x32xf32>
    %436 = vector.extract_strided_slice %426 {offsets = [0, 96], sizes = [1, 32], strides = [1, 1]} : vector<1x128xf32> to vector<1x32xf32>
    %437 = arith.mulf %433, %436 : vector<1x32xf32>
    %438 = arith.addf %435, %437 : vector<1x32xf32>
    %439 = math.tanh %438 : vector<1x32xf32>
    %cst_104 = arith.constant 1.000000e+00 : f32
    %440 = vector.broadcast %cst_104 : f32 to vector<1x32xf32>
    %441 = arith.subf %440, %434 : vector<1x32xf32>
    %442 = arith.mulf %441, %439 : vector<1x32xf32>
    %443 = arith.mulf %434, %377 : vector<1x32xf32>
    %444 = arith.addf %442, %443 : vector<1x32xf32>
    %445 = arith.truncf %444 : vector<1x32xf32> to vector<1x32xbf16>
    %cst_105 = arith.constant dense<0.000000e+00> : vector<1x128xf32>
    %446 = tpu.matmul %445, %8, %cst_105 {dimension_numbers = #tpu.dot_dimension_numbers<[1], [0], [0], [1], [0, 0, 1, 1], [], []>} : vector<1x32xbf16>, vector<32x128xbf16>, vector<1x128xf32> -> vector<1x128xf32>
    %447 = arith.addf %446, %9 : vector<1x128xf32>
    %cst_106 = arith.constant dense<0xFF800000> : vector<1xf32>
    %448 = vector.multi_reduction <maximumf>, %447, %cst_106 [1] : vector<1x128xf32> to vector<1xf32>
    %449 = vector.shape_cast %448 : vector<1xf32> to vector<1x1xf32>
    %450 = vector.broadcast %449 : vector<1x1xf32> to vector<1x128xf32>
    %451 = arith.subf %447, %450 : vector<1x128xf32>
    %452 = math.exp %451 : vector<1x128xf32>
    %cst_107 = arith.constant dense<0.000000e+00> : vector<1xf32>
    %453 = vector.multi_reduction <add>, %452, %cst_107 [1] : vector<1x128xf32> to vector<1xf32>
    %454 = vector.shape_cast %453 : vector<1xf32> to vector<1x1xf32>
    %455 = math.log %454 : vector<1x1xf32>
    %456 = arith.addf %449, %455 : vector<1x1xf32>
    %457 = vector.broadcast %456 : vector<1x1xf32> to vector<1x128xf32>
    %458 = arith.subf %447, %457 : vector<1x128xf32>
    %459 = vector.broadcast %401 : f32 to vector<1x128xf32>
    %460 = arith.mulf %458, %459 : vector<1x128xf32>
    %c5 = arith.constant 5 : index
    %461 = memref.load %arg1[%c5] : memref<8xi32, #tpu.memory_space<smem>>
    %c1_i32_108 = arith.constant 1 : i32
    %462 = arith.cmpi eq, %461, %c1_i32_108 : i32
    %463 = arith.extui %462 : i1 to i32
    %c0_i32_109 = arith.constant 0 : i32
    %464 = arith.cmpi ne, %463, %c0_i32_109 : i32
    %465 = scf.if %464 -> (i32) {
      %c0_i32_134 = arith.constant 0 : i32
      scf.yield %c0_i32_134 : i32
    } else {
      %597 = tpu.iota {dimensions = array<i32: 1>} : vector<1x128xi32>
      %598 = vector.broadcast %449 : vector<1x1xf32> to vector<1x128xf32>
      %599 = arith.cmpf oge, %447, %598 : vector<1x128xf32>
      %c128_i32 = arith.constant 128 : i32
      %600 = vector.broadcast %c128_i32 : i32 to vector<1x128xi32>
      %601 = arith.select %599, %597, %600 : vector<1x128xi1>, vector<1x128xi32>
      %602 = vector.shape_cast %601 : vector<1x128xi32> to vector<1x1x128xi32>
      %cst_134 = arith.constant dense<2147483647> : vector<1xi32>
      %603 = vector.multi_reduction <minsi>, %602, %cst_134 [1, 2] : vector<1x1x128xi32> to vector<1xi32>
      %604 = vector.shape_cast %603 : vector<1xi32> to vector<1x1x1xi32>
      %605 = vector.extract %604[0, 0, 0] : i32 from vector<1x1x1xi32>
      %c1_i32_135 = arith.constant 1 : i32
      %606 = arith.cmpi eq, %605, %c1_i32_135 : i32
      %607 = arith.extui %606 : i1 to i32
      scf.yield %607 : i32
    }
    %466 = arith.sitofp %465 : i32 to f32
    %cst_110 = arith.constant 1.000000e+00 : f32
    %467 = arith.subf %cst_110, %466 : f32
    %468 = arith.mulf %401, %467 : f32
    %469 = arith.truncf %422 : vector<1x32xf32> to vector<1x32xbf16>
    %cst_111 = arith.constant dense<0.000000e+00> : vector<1x128xf32>
    %470 = tpu.matmul %469, %66, %cst_111 {dimension_numbers = #tpu.dot_dimension_numbers<[1], [0], [0], [1], [0, 0, 1, 1], [], []>} : vector<1x32xbf16>, vector<32x128xbf16>, vector<1x128xf32> -> vector<1x128xf32>
    %471 = arith.addf %470, %65 : vector<1x128xf32>
    %472 = vector.extract_strided_slice %471 {offsets = [0, 0], sizes = [1, 64], strides = [1, 1]} : vector<1x128xf32> to vector<1x64xf32>
    %473 = arith.negf %472 : vector<1x64xf32>
    %474 = math.exp %473 : vector<1x64xf32>
    %cst_112 = arith.constant 1.000000e+00 : f32
    %475 = vector.broadcast %cst_112 : f32 to vector<1x64xf32>
    %476 = arith.addf %475, %474 : vector<1x64xf32>
    %477 = arith.divf %475, %476 : vector<1x64xf32>
    %478 = vector.extract_strided_slice %477 {offsets = [0, 0], sizes = [1, 32], strides = [1, 1]} : vector<1x64xf32> to vector<1x32xf32>
    %479 = vector.extract_strided_slice %477 {offsets = [0, 32], sizes = [1, 32], strides = [1, 1]} : vector<1x64xf32> to vector<1x32xf32>
    %480 = vector.extract_strided_slice %471 {offsets = [0, 64], sizes = [1, 32], strides = [1, 1]} : vector<1x128xf32> to vector<1x32xf32>
    %481 = vector.extract_strided_slice %471 {offsets = [0, 96], sizes = [1, 32], strides = [1, 1]} : vector<1x128xf32> to vector<1x32xf32>
    %482 = arith.mulf %478, %481 : vector<1x32xf32>
    %483 = arith.addf %480, %482 : vector<1x32xf32>
    %484 = math.tanh %483 : vector<1x32xf32>
    %cst_113 = arith.constant 1.000000e+00 : f32
    %485 = vector.broadcast %cst_113 : f32 to vector<1x32xf32>
    %486 = arith.subf %485, %479 : vector<1x32xf32>
    %487 = arith.mulf %486, %484 : vector<1x32xf32>
    %488 = arith.mulf %479, %422 : vector<1x32xf32>
    %489 = arith.addf %487, %488 : vector<1x32xf32>
    %490 = tpu.concatenate %489, %444 in 1 : vector<1x32xf32>, vector<1x32xf32> -> vector<1x64xf32>
    %491 = arith.truncf %490 : vector<1x64xf32> to vector<1x64xbf16>
    %cst_114 = arith.constant dense<0.000000e+00> : vector<1x128xf32>
    %492 = tpu.matmul %491, %3, %cst_114 {dimension_numbers = #tpu.dot_dimension_numbers<[1], [0], [0], [1], [0, 0, 1, 1], [], []>} : vector<1x64xbf16>, vector<64x128xbf16>, vector<1x128xf32> -> vector<1x128xf32>
    %493 = arith.addf %492, %7 : vector<1x128xf32>
    %494 = vector.extract_strided_slice %493 {offsets = [0, 0], sizes = [1, 64], strides = [1, 1]} : vector<1x128xf32> to vector<1x64xf32>
    %495 = arith.negf %494 : vector<1x64xf32>
    %496 = math.exp %495 : vector<1x64xf32>
    %cst_115 = arith.constant 1.000000e+00 : f32
    %497 = vector.broadcast %cst_115 : f32 to vector<1x64xf32>
    %498 = arith.addf %497, %496 : vector<1x64xf32>
    %499 = arith.divf %497, %498 : vector<1x64xf32>
    %500 = vector.extract_strided_slice %499 {offsets = [0, 0], sizes = [1, 32], strides = [1, 1]} : vector<1x64xf32> to vector<1x32xf32>
    %501 = vector.extract_strided_slice %499 {offsets = [0, 32], sizes = [1, 32], strides = [1, 1]} : vector<1x64xf32> to vector<1x32xf32>
    %502 = vector.extract_strided_slice %493 {offsets = [0, 64], sizes = [1, 32], strides = [1, 1]} : vector<1x128xf32> to vector<1x32xf32>
    %503 = vector.extract_strided_slice %493 {offsets = [0, 96], sizes = [1, 32], strides = [1, 1]} : vector<1x128xf32> to vector<1x32xf32>
    %504 = arith.mulf %500, %503 : vector<1x32xf32>
    %505 = arith.addf %502, %504 : vector<1x32xf32>
    %506 = math.tanh %505 : vector<1x32xf32>
    %cst_116 = arith.constant 1.000000e+00 : f32
    %507 = vector.broadcast %cst_116 : f32 to vector<1x32xf32>
    %508 = arith.subf %507, %501 : vector<1x32xf32>
    %509 = arith.mulf %508, %506 : vector<1x32xf32>
    %510 = arith.mulf %501, %444 : vector<1x32xf32>
    %511 = arith.addf %509, %510 : vector<1x32xf32>
    %512 = arith.truncf %511 : vector<1x32xf32> to vector<1x32xbf16>
    %cst_117 = arith.constant dense<0.000000e+00> : vector<1x128xf32>
    %513 = tpu.matmul %512, %8, %cst_117 {dimension_numbers = #tpu.dot_dimension_numbers<[1], [0], [0], [1], [0, 0, 1, 1], [], []>} : vector<1x32xbf16>, vector<32x128xbf16>, vector<1x128xf32> -> vector<1x128xf32>
    %514 = arith.addf %513, %9 : vector<1x128xf32>
    %cst_118 = arith.constant dense<0xFF800000> : vector<1xf32>
    %515 = vector.multi_reduction <maximumf>, %514, %cst_118 [1] : vector<1x128xf32> to vector<1xf32>
    %516 = vector.shape_cast %515 : vector<1xf32> to vector<1x1xf32>
    %517 = vector.broadcast %516 : vector<1x1xf32> to vector<1x128xf32>
    %518 = arith.subf %514, %517 : vector<1x128xf32>
    %519 = math.exp %518 : vector<1x128xf32>
    %cst_119 = arith.constant dense<0.000000e+00> : vector<1xf32>
    %520 = vector.multi_reduction <add>, %519, %cst_119 [1] : vector<1x128xf32> to vector<1xf32>
    %521 = vector.shape_cast %520 : vector<1xf32> to vector<1x1xf32>
    %522 = math.log %521 : vector<1x1xf32>
    %523 = arith.addf %516, %522 : vector<1x1xf32>
    %524 = vector.broadcast %523 : vector<1x1xf32> to vector<1x128xf32>
    %525 = arith.subf %514, %524 : vector<1x128xf32>
    %526 = vector.broadcast %468 : f32 to vector<1x128xf32>
    %527 = arith.mulf %525, %526 : vector<1x128xf32>
    %c6 = arith.constant 6 : index
    %528 = memref.load %arg1[%c6] : memref<8xi32, #tpu.memory_space<smem>>
    %c1_i32_120 = arith.constant 1 : i32
    %529 = arith.cmpi eq, %528, %c1_i32_120 : i32
    %530 = arith.extui %529 : i1 to i32
    %c0_i32_121 = arith.constant 0 : i32
    %531 = arith.cmpi ne, %530, %c0_i32_121 : i32
    %532 = scf.if %531 -> (i32) {
      %c0_i32_134 = arith.constant 0 : i32
      scf.yield %c0_i32_134 : i32
    } else {
      %597 = tpu.iota {dimensions = array<i32: 1>} : vector<1x128xi32>
      %598 = vector.broadcast %516 : vector<1x1xf32> to vector<1x128xf32>
      %599 = arith.cmpf oge, %514, %598 : vector<1x128xf32>
      %c128_i32 = arith.constant 128 : i32
      %600 = vector.broadcast %c128_i32 : i32 to vector<1x128xi32>
      %601 = arith.select %599, %597, %600 : vector<1x128xi1>, vector<1x128xi32>
      %602 = vector.shape_cast %601 : vector<1x128xi32> to vector<1x1x128xi32>
      %cst_134 = arith.constant dense<2147483647> : vector<1xi32>
      %603 = vector.multi_reduction <minsi>, %602, %cst_134 [1, 2] : vector<1x1x128xi32> to vector<1xi32>
      %604 = vector.shape_cast %603 : vector<1xi32> to vector<1x1x1xi32>
      %605 = vector.extract %604[0, 0, 0] : i32 from vector<1x1x1xi32>
      %c1_i32_135 = arith.constant 1 : i32
      %606 = arith.cmpi eq, %605, %c1_i32_135 : i32
      %607 = arith.extui %606 : i1 to i32
      scf.yield %607 : i32
    }
    %533 = arith.sitofp %532 : i32 to f32
    %cst_122 = arith.constant 1.000000e+00 : f32
    %534 = arith.subf %cst_122, %533 : f32
    %535 = arith.mulf %468, %534 : f32
    %536 = arith.truncf %489 : vector<1x32xf32> to vector<1x32xbf16>
    %cst_123 = arith.constant dense<0.000000e+00> : vector<1x128xf32>
    %537 = tpu.matmul %536, %66, %cst_123 {dimension_numbers = #tpu.dot_dimension_numbers<[1], [0], [0], [1], [0, 0, 1, 1], [], []>} : vector<1x32xbf16>, vector<32x128xbf16>, vector<1x128xf32> -> vector<1x128xf32>
    %538 = arith.addf %537, %65 : vector<1x128xf32>
    %539 = vector.extract_strided_slice %538 {offsets = [0, 0], sizes = [1, 64], strides = [1, 1]} : vector<1x128xf32> to vector<1x64xf32>
    %540 = arith.negf %539 : vector<1x64xf32>
    %541 = math.exp %540 : vector<1x64xf32>
    %cst_124 = arith.constant 1.000000e+00 : f32
    %542 = vector.broadcast %cst_124 : f32 to vector<1x64xf32>
    %543 = arith.addf %542, %541 : vector<1x64xf32>
    %544 = arith.divf %542, %543 : vector<1x64xf32>
    %545 = vector.extract_strided_slice %544 {offsets = [0, 0], sizes = [1, 32], strides = [1, 1]} : vector<1x64xf32> to vector<1x32xf32>
    %546 = vector.extract_strided_slice %544 {offsets = [0, 32], sizes = [1, 32], strides = [1, 1]} : vector<1x64xf32> to vector<1x32xf32>
    %547 = vector.extract_strided_slice %538 {offsets = [0, 64], sizes = [1, 32], strides = [1, 1]} : vector<1x128xf32> to vector<1x32xf32>
    %548 = vector.extract_strided_slice %538 {offsets = [0, 96], sizes = [1, 32], strides = [1, 1]} : vector<1x128xf32> to vector<1x32xf32>
    %549 = arith.mulf %545, %548 : vector<1x32xf32>
    %550 = arith.addf %547, %549 : vector<1x32xf32>
    %551 = math.tanh %550 : vector<1x32xf32>
    %cst_125 = arith.constant 1.000000e+00 : f32
    %552 = vector.broadcast %cst_125 : f32 to vector<1x32xf32>
    %553 = arith.subf %552, %546 : vector<1x32xf32>
    %554 = arith.mulf %553, %551 : vector<1x32xf32>
    %555 = arith.mulf %546, %489 : vector<1x32xf32>
    %556 = arith.addf %554, %555 : vector<1x32xf32>
    %557 = tpu.concatenate %556, %511 in 1 : vector<1x32xf32>, vector<1x32xf32> -> vector<1x64xf32>
    %558 = arith.truncf %557 : vector<1x64xf32> to vector<1x64xbf16>
    %cst_126 = arith.constant dense<0.000000e+00> : vector<1x128xf32>
    %559 = tpu.matmul %558, %3, %cst_126 {dimension_numbers = #tpu.dot_dimension_numbers<[1], [0], [0], [1], [0, 0, 1, 1], [], []>} : vector<1x64xbf16>, vector<64x128xbf16>, vector<1x128xf32> -> vector<1x128xf32>
    %560 = arith.addf %559, %7 : vector<1x128xf32>
    %561 = vector.extract_strided_slice %560 {offsets = [0, 0], sizes = [1, 64], strides = [1, 1]} : vector<1x128xf32> to vector<1x64xf32>
    %562 = arith.negf %561 : vector<1x64xf32>
    %563 = math.exp %562 : vector<1x64xf32>
    %cst_127 = arith.constant 1.000000e+00 : f32
    %564 = vector.broadcast %cst_127 : f32 to vector<1x64xf32>
    %565 = arith.addf %564, %563 : vector<1x64xf32>
    %566 = arith.divf %564, %565 : vector<1x64xf32>
    %567 = vector.extract_strided_slice %566 {offsets = [0, 0], sizes = [1, 32], strides = [1, 1]} : vector<1x64xf32> to vector<1x32xf32>
    %568 = vector.extract_strided_slice %566 {offsets = [0, 32], sizes = [1, 32], strides = [1, 1]} : vector<1x64xf32> to vector<1x32xf32>
    %569 = vector.extract_strided_slice %560 {offsets = [0, 64], sizes = [1, 32], strides = [1, 1]} : vector<1x128xf32> to vector<1x32xf32>
    %570 = vector.extract_strided_slice %560 {offsets = [0, 96], sizes = [1, 32], strides = [1, 1]} : vector<1x128xf32> to vector<1x32xf32>
    %571 = arith.mulf %567, %570 : vector<1x32xf32>
    %572 = arith.addf %569, %571 : vector<1x32xf32>
    %573 = math.tanh %572 : vector<1x32xf32>
    %cst_128 = arith.constant 1.000000e+00 : f32
    %574 = vector.broadcast %cst_128 : f32 to vector<1x32xf32>
    %575 = arith.subf %574, %568 : vector<1x32xf32>
    %576 = arith.mulf %575, %573 : vector<1x32xf32>
    %577 = arith.mulf %568, %511 : vector<1x32xf32>
    %578 = arith.addf %576, %577 : vector<1x32xf32>
    %579 = arith.truncf %578 : vector<1x32xf32> to vector<1x32xbf16>
    %cst_129 = arith.constant dense<0.000000e+00> : vector<1x128xf32>
    %580 = tpu.matmul %579, %8, %cst_129 {dimension_numbers = #tpu.dot_dimension_numbers<[1], [0], [0], [1], [0, 0, 1, 1], [], []>} : vector<1x32xbf16>, vector<32x128xbf16>, vector<1x128xf32> -> vector<1x128xf32>
    %581 = arith.addf %580, %9 : vector<1x128xf32>
    %cst_130 = arith.constant dense<0xFF800000> : vector<1xf32>
    %582 = vector.multi_reduction <maximumf>, %581, %cst_130 [1] : vector<1x128xf32> to vector<1xf32>
    %583 = vector.shape_cast %582 : vector<1xf32> to vector<1x1xf32>
    %584 = vector.broadcast %583 : vector<1x1xf32> to vector<1x128xf32>
    %585 = arith.subf %581, %584 : vector<1x128xf32>
    %586 = math.exp %585 : vector<1x128xf32>
    %cst_131 = arith.constant dense<0.000000e+00> : vector<1xf32>
    %587 = vector.multi_reduction <add>, %586, %cst_131 [1] : vector<1x128xf32> to vector<1xf32>
    %588 = vector.shape_cast %587 : vector<1xf32> to vector<1x1xf32>
    %589 = math.log %588 : vector<1x1xf32>
    %590 = arith.addf %583, %589 : vector<1x1xf32>
    %591 = vector.broadcast %590 : vector<1x1xf32> to vector<1x128xf32>
    %592 = arith.subf %581, %591 : vector<1x128xf32>
    %593 = vector.broadcast %535 : f32 to vector<1x128xf32>
    %594 = arith.mulf %592, %593 : vector<1x128xf32>
    %595 = tpu.concatenate %125, %192, %259, %326, %393, %460, %527, %594 in 0 : vector<1x128xf32>, vector<1x128xf32>, vector<1x128xf32>, vector<1x128xf32>, vector<1x128xf32>, vector<1x128xf32>, vector<1x128xf32>, vector<1x128xf32> -> vector<8x128xf32>
    %c0_132 = arith.constant 0 : index
    %c0_133 = arith.constant 0 : index
    %596 = vector.load %arg10[%c0_132, %c0_133] : memref<8x128xf32, #tpu.memory_space<vmem>>, vector<8x128xf32>
    tpu.vector_store %arg10[%c0_132, %c0_133], %595 {strides = array<i32>} : memref<8x128xf32, #tpu.memory_space<vmem>>, vector<8x128xf32>,
    return
  }
}

</mosaic_0001>

<llo_original>
// kernel: tpu_custom_call.1
$region0: #{tpu_custom_call.1}
  #allocation0 [shape = 'u32[]', space=smem, size = 0x4, offset = 0x4, fixed_abs, tag = 'smem constant byte address 0x4 - core index']
  #allocation1 [shape = 'u32[144,128]{1,0:T(1,128)}', space=vmem, size = 0x12000, scoped, tag = 'internal scratch']
  #allocation2 [shape = 's32[1]{0:T(128)S(6)}', space=smem, size = 0x200, scoped, tag = 'scoped memory for tpu_custom_call.1']
  %s0 = inlined_call_operand.<no memory space> [shape: s32[1], index: 0, kind: input, shape index: {}]
  %s1 = inlined_call_operand.hbm [shape: s32[8], index: 1, kind: input, shape index: {}]
  %s2 = inlined_call_operand.hbm [shape: f32[16,32], index: 2, kind: input, shape index: {}]
  %s3 = inlined_call_operand.hbm [shape: bf16[2,32,128], index: 3, kind: input, shape index: {}]
  %s4 = inlined_call_operand.vmem [shape: f32[2,1,128], index: 4, kind: input, shape index: {}]
  %s5 = inlined_call_operand.vmem [shape: f32[16,32], index: 5, kind: input, shape index: {}]
  %s6 = inlined_call_operand.hbm [shape: bf16[2,64,128], index: 6, kind: input, shape index: {}]
  %s7 = inlined_call_operand.vmem [shape: f32[2,1,128], index: 7, kind: input, shape index: {}]
  %s8 = inlined_call_operand.hbm [shape: bf16[32,128], index: 8, kind: input, shape index: {}]
  %s9 = inlined_call_operand.vmem [shape: f32[1,128], index: 9, kind: input, shape index: {}]
  %s10 = inlined_call_operand.hbm [shape: f32[8,128], index: 10, kind: output, shape index: {}]
  %s11 = sld [smem:[#allocation0]]
  $region126: #{tpu_custom_call.1} parent=0
    _
  %s13 = ssub.s32 1, %s11
  %s14 = scalar_select 0, %s13, %s11
  %15 = sst [smem:[#allocation2]] %s0
  $region1: #{tpu_custom_call.1} parent=0
    #allocation3 [shape = 'u8[512]{0}', space=smem, size = 0x200, scoped, tag = 'input window, operand 1, single buffered']
    #allocation4 [shape = 's32[1]{0}', space=sflag, size = 0x4, scoped, tag = 'scoped memory for tpu_custom_call.1']
    #allocation5 [shape = 's32[1]{0}', space=sflag, size = 0x4, scoped, tag = 'scoped memory for tpu_custom_call.1']
    #allocation6 [shape = 's32[1]{0}', space=sflag, size = 0x4, scoped, tag = 'scoped memory for tpu_custom_call.1']
    #allocation7 [shape = 'u8[8192]{0}', space=vmem, size = 0x2000, scoped, tag = 'input window, operand 2, single buffered']
    #allocation8 [shape = 'u8[16384]{0}', space=vmem, size = 0x4000, scoped, tag = 'input window, operand 3, single buffered']
    #allocation9 [shape = 's32[1]{0}', space=sflag, size = 0x4, scoped, tag = 'scoped memory for tpu_custom_call.1']
    #allocation10 [shape = 'u8[32768]{0}', space=vmem, size = 0x8000, scoped, tag = 'input window, operand 6, single buffered']
    #allocation11 [shape = 'u8[8192]{0}', space=vmem, size = 0x2000, scoped, tag = 'input window, operand 8, single buffered']
    #allocation12 [shape = 's32[1]{0}', space=sflag, size = 0x4, scoped, tag = 'scoped memory for tpu_custom_call.1']
    #allocation13 [shape = 'u8[4096]{0}', space=vmem, size = 0x1000, scoped, tag = 'output window, operand 0, single buffered']
    %16 = vsyncpa [#allocation6], 0
    %17 = vsyncpa [#allocation4], 0
    %18 = vsyncpa [#allocation9], 0
    %19 = vsyncpa [#allocation12], 0
    %20 = vsyncpa [#allocation5], 0
    // Predicated region
    $region2: #{tpu_custom_call.1} parent=1 // pred_check
      _
    $region3: #{tpu_custom_call.1} parent=1 // pred_check_branch
      %22 = sbr.rel (0) target = $region5
    $region4: #{tpu_custom_call.1} parent=1 // pred_region
      _
    $region5: #{tpu_custom_call.1} parent=1 // pred_fallthru
      _
    // Predicated region
    $region6: #{tpu_custom_call.1} parent=1 // pred_check
      _
    $region7: #{tpu_custom_call.1} parent=1 // pred_check_branch
      %24 = sbr.rel (0) target = $region9
    $region8: #{tpu_custom_call.1} parent=1 // pred_region
      %s26 = ssub.s32 16, 16
      %27 = vsyncadd [#allocation6], %s26
      %30 = dma.hbm_to_smem %s1, 16, [#allocation3], [#allocation6]
    $region9: #{tpu_custom_call.1} parent=1 // pred_fallthru
      _
    // Predicated region
    $region10: #{tpu_custom_call.1} parent=1 // pred_check
      _
    $region11: #{tpu_custom_call.1} parent=1 // pred_check_branch
      %32 = sbr.rel (0) target = $region13
    $region12: #{tpu_custom_call.1} parent=1 // pred_region
      %s34 = ssub.s32 256, 256
      %35 = vsyncadd [#allocation4], %s34
      %s36 = sshll.u32 [#allocation7], 4
      %s37 = int_to_ptr.vmem [resolvable:$true] %s36
      %42 = dma.hbm_to_vmem [thread:$0]  %s2, 256, %s37, [#allocation4], 128, 128, 8
    $region13: #{tpu_custom_call.1} parent=1 // pred_fallthru
      _
    // Predicated region
    $region14: #{tpu_custom_call.1} parent=1 // pred_check
      _
    $region15: #{tpu_custom_call.1} parent=1 // pred_check_branch
      %44 = sbr.rel (0) target = $region17
    $region16: #{tpu_custom_call.1} parent=1 // pred_region
      %s46 = ssub.s32 512, 512
      %47 = vsyncadd [#allocation9], %s46
      %s48 = sshll.u32 [#allocation8], 4
      %s49 = int_to_ptr.vmem [resolvable:$true] %s48
      %54 = dma.hbm_to_vmem [thread:$0]  %s3, 512, %s49, [#allocation9], 64, 64, 4
    $region17: #{tpu_custom_call.1} parent=1 // pred_fallthru
      _
    // Predicated region
    $region18: #{tpu_custom_call.1} parent=1 // pred_check
      _
    $region19: #{tpu_custom_call.1} parent=1 // pred_check_branch
      %56 = sbr.rel (0) target = $region21
    $region20: #{tpu_custom_call.1} parent=1 // pred_region
      _
    $region21: #{tpu_custom_call.1} parent=1 // pred_fallthru
      _
    // Predicated region
    $region22: #{tpu_custom_call.1} parent=1 // pred_check
      _
    $region23: #{tpu_custom_call.1} parent=1 // pred_check_branch
      %58 = sbr.rel (0) target = $region25
    $region24: #{tpu_custom_call.1} parent=1 // pred_region
      _
    $region25: #{tpu_custom_call.1} parent=1 // pred_fallthru
      _
    // Predicated region
    $region26: #{tpu_custom_call.1} parent=1 // pred_check
      _
    $region27: #{tpu_custom_call.1} parent=1 // pred_check_branch
      %60 = sbr.rel (0) target = $region29
    $region28: #{tpu_custom_call.1} parent=1 // pred_region
      %s62 = ssub.s32 1024, 1024
      %63 = vsyncadd [#allocation9], %s62
      %s64 = sshll.u32 [#allocation10], 4
      %s65 = int_to_ptr.vmem [resolvable:$true] %s64
      %70 = dma.hbm_to_vmem [thread:$0]  %s6, 1024, %s65, [#allocation9], 64, 64, 4
    $region29: #{tpu_custom_call.1} parent=1 // pred_fallthru
      _
    // Predicated region
    $region30: #{tpu_custom_call.1} parent=1 // pred_check
      _
    $region31: #{tpu_custom_call.1} parent=1 // pred_check_branch
      %72 = sbr.rel (0) target = $region33
    $region32: #{tpu_custom_call.1} parent=1 // pred_region
      _
    $region33: #{tpu_custom_call.1} parent=1 // pred_fallthru
      _
    // Predicated region
    $region34: #{tpu_custom_call.1} parent=1 // pred_check
      _
    $region35: #{tpu_custom_call.1} parent=1 // pred_check_branch
      %74 = sbr.rel (0) target = $region37
    $region36: #{tpu_custom_call.1} parent=1 // pred_region
      %s76 = ssub.s32 256, 256
      %77 = vsyncadd [#allocation12], %s76
      %s78 = sshll.u32 [#allocation11], 4
      %s79 = int_to_ptr.vmem [resolvable:$true] %s78
      %84 = dma.hbm_to_vmem [thread:$0]  %s8, 256, %s79, [#allocation12], 64, 64, 4
    $region37: #{tpu_custom_call.1} parent=1 // pred_fallthru
      _
    // Predicated region
    $region38: #{tpu_custom_call.1} parent=1 // pred_check
      _
    $region39: #{tpu_custom_call.1} parent=1 // pred_check_branch
      %86 = sbr.rel (0) target = $region41
    $region40: #{tpu_custom_call.1} parent=1 // pred_region
      _
    $region41: #{tpu_custom_call.1} parent=1 // pred_fallthru
      _
    // Predicated region
    $region42: #{tpu_custom_call.1} parent=1 // pred_check
      _
    $region43: #{tpu_custom_call.1} parent=1 // pred_check_branch
      %88 = sbr.rel (0) target = $region45
    $region44: #{tpu_custom_call.1} parent=1 // pred_region
      %89 = dma.done [#allocation6], 16
    $region45: #{tpu_custom_call.1} parent=1 // pred_fallthru
      _
    // Predicated region
    $region46: #{tpu_custom_call.1} parent=1 // pred_check
      _
    $region47: #{tpu_custom_call.1} parent=1 // pred_check_branch
      %91 = sbr.rel (0) target = $region49
    $region48: #{tpu_custom_call.1} parent=1 // pred_region
      %92 = dma.done [#allocation4], 256
    $region49: #{tpu_custom_call.1} parent=1 // pred_fallthru
      _
    // Predicated region
    $region50: #{tpu_custom_call.1} parent=1 // pred_check
      _
    $region51: #{tpu_custom_call.1} parent=1 // pred_check_branch
      %94 = sbr.rel (0) target = $region53
    $region52: #{tpu_custom_call.1} parent=1 // pred_region
      %95 = dma.done [#allocation9], 512
    $region53: #{tpu_custom_call.1} parent=1 // pred_fallthru
      _
    // Predicated region
    $region54: #{tpu_custom_call.1} parent=1 // pred_check
      _
    $region55: #{tpu_custom_call.1} parent=1 // pred_check_branch
      %97 = sbr.rel (0) target = $region57
    $region56: #{tpu_custom_call.1} parent=1 // pred_region
      %98 = dma.done [#allocation9], 1024
    $region57: #{tpu_custom_call.1} parent=1 // pred_fallthru
      _
    // Predicated region
    $region58: #{tpu_custom_call.1} parent=1 // pred_check
      _
    $region59: #{tpu_custom_call.1} parent=1 // pred_check_branch
      %100 = sbr.rel (0) target = $region61
    $region60: #{tpu_custom_call.1} parent=1 // pred_region
      %101 = dma.done [#allocation12], 256
    $region61: #{tpu_custom_call.1} parent=1 // pred_fallthru
      _
    %102 = sfence
    %v104 = vld [vmem:[#allocation10] sm:$0xf]
    %v105 = vld [vmem:[#allocation10 + $0x4] sm:$0xf]
    %v106 = vld [vmem:[#allocation10 + $0x8] sm:$0xf]
    %v107 = vld [vmem:[#allocation10 + $0xc] sm:$0xf]
    %v108 = vld [vmem:[#allocation10 + $0x10] sm:$0xf]
    %v109 = vld [vmem:[#allocation10 + $0x14] sm:$0xf]
    %v110 = vld [vmem:[#allocation10 + $0x18] sm:$0xf]
    %v111 = vld [vmem:[#allocation10 + $0x1c] sm:$0xf]
    %s112 = scalar_lea.vmem [#allocation10], 32
    %v113 = vld [vmem:[%s112] sm:$0xf]
    %v114 = vld [vmem:[%s112 + $0x4] sm:$0xf]
    %v115 = vld [vmem:[%s112 + $0x8] sm:$0xf]
    %v116 = vld [vmem:[%s112 + $0xc] sm:$0xf]
    %v117 = vld [vmem:[%s112 + $0x10] sm:$0xf]
    %v118 = vld [vmem:[%s112 + $0x14] sm:$0xf]
    %v119 = vld [vmem:[%s112 + $0x18] sm:$0xf]
    %v120 = vld [vmem:[%s112 + $0x1c] sm:$0xf]
    %v121 = vld [vmem:[%s7] sm:$0x1]
    %s122 = scalar_lea.vmem %s7, 1
    %v123 = vld [vmem:[%s122] sm:$0x1]
    %v124 = vld [vmem:[#allocation11] sm:$0xf]
    %v125 = vld [vmem:[#allocation11 + $0x4] sm:$0xf]
    %v126 = vld [vmem:[#allocation11 + $0x8] sm:$0xf]
    %v127 = vld [vmem:[#allocation11 + $0xc] sm:$0xf]
    %v128 = vld [vmem:[%s9] sm:$0x1]
    %s129 = sld [smem:[#allocation2]]
    %s130 = scalar_lea.vmem [#allocation7], %s129
    %v131 = vld [vmem:[%s130] sm:$0x1]
    %v132 = vpack.c.bf16 %v131, %v131
    %v133 = vld [vmem:[#allocation8] sm:$0xf]
    %v134 = vld [vmem:[#allocation8 + $0x4] sm:$0xf]
    %v135 = vld [vmem:[#allocation8 + $0x8] sm:$0xf]
    %v136 = vld [vmem:[#allocation8 + $0xc] sm:$0xf]
    %v137 = vld [vmem:[%s4] sm:$0x1]
    %v142 = vunpack.c.l.b16 %v133
    %v143 = vunpack.c.l.b16 %v134
    %v144 = vunpack.c.l.b16 %v135
    %v145 = vunpack.c.l.b16 %v136
    %v146 = vpack.c.b16 %v143, %v142
    %v147 = vpack.c.b16 %v145, %v144
    %vm150 = vcmask 261120
    %v152 = vsel %vm150, %v132, 0
    %154 = vmatprep.subr.bf16.mxu0 0
    %155 = vmatpush1.bf16.msra.mxu0 %v146
    %156 = vmatprep.subr.bf16.mxu0 0
    %157 = vmatpush1.bf16.msra.mxu0 %v147
    %158 = vmatprep.subr.bf16.mxu0 0
    %159 = vmatpush1.bf16.msra.mxu0 0
    %160 = vmatprep.subr.bf16.mxu0 0
    %161 = vmatpush1.bf16.msra.mxu0 0
    %162 = vmatprep.subr.bf16.mxu0 0
    %163 = vmatpush1.bf16.msra.mxu0 0
    %164 = vmatprep.subr.bf16.mxu0 0
    %165 = vmatpush1.bf16.msra.mxu0 0
    %166 = vmatprep.subr.bf16.mxu0 0
    %167 = vmatpush1.bf16.msra.mxu0 0
    %168 = vmatprep.subr.bf16.mxu0 0
    %169 = vmatpush1.bf16.msra.mxu0 0
    %170 = vmatprep.subr.bf16.mxu0 0
    %171 = vmatpush1.bf16.msra.mxu0 0
    %172 = vmatprep.subr.bf16.mxu0 0
    %173 = vmatpush1.bf16.msra.mxu0 0
    %174 = vmatprep.subr.bf16.mxu0 0
    %175 = vmatpush1.bf16.msra.mxu0 0
    %176 = vmatprep.subr.bf16.mxu0 0
    %177 = vmatpush1.bf16.msra.mxu0 0
    %178 = vmatprep.subr.bf16.mxu0 0
    %179 = vmatpush1.bf16.msra.mxu0 0
    %180 = vmatprep.subr.bf16.mxu0 0
    %181 = vmatpush1.bf16.msra.mxu0 0
    %182 = vmatprep.subr.bf16.mxu0 0
    %183 = vmatpush1.bf16.msra.mxu0 0
    %184 = vmatprep.subr.bf16.mxu0 0
    %185 = vmatpush1.bf16.msra.mxu0 0
    %186 = vmatprep.mubr.bf16.mxu0 0
    %187 = vmatmul.mubr.bf16.gmra.mrb[0].mxu0 %v152
    %v188 = vpop.f32.mrb[0].mxu0
    %v189 = vadd.f32 %v137, %v188
    %v190 = vpop.f32.mrb[0].mxu0
    %v191 = vpop.f32.mrb[0].mxu0
    %v192 = vpop.f32.mrb[0].mxu0
    %193 = vdwg.mxu0
    %v194 = vxor.u32 %v189, 2147483648
    %v195 = vmul.f32 %v194, 1.442695
    %v196 = vpow.pop %v195
    %v197 = vadd.f32 %v196, 1.0
    %v198 = vrcp.pop %v197
    %v199 = vmul.f32 1.0, %v198
    %201 = vrot.lane.b32.xlu0 %v189, 32
    %v202 = vpop.permute.xlu0 %201
    %v204 = vmul.f32 %v199, %v202
    %206 = vrot.lane.b32.xlu0 %v204, 64
    %v207 = vpop.permute.xlu0 %206
    %v209 = vadd.f32 %v189, %v207
    %v210 = vtanh.pop %v209
    %v211 = vsub.f32 1.0, %v199
    %213 = vrot.lane.b32.xlu0 %v210, 96
    %v214 = vpop.permute.xlu0 %213
    %v216 = vmul.f32 %v211, %v214
    %v217 = vpack.c.bf16 %v216, %v216
    %s218 = scalar_lea.vmem [#allocation8], 16
    %v219 = vld [vmem:[%s218] sm:$0xf]
    %v220 = vld [vmem:[%s218 + $0x4] sm:$0xf]
    %v221 = vld [vmem:[%s218 + $0x8] sm:$0xf]
    %v222 = vld [vmem:[%s218 + $0xc] sm:$0xf]
    %s223 = scalar_lea.vmem %s4, 1
    %v224 = vld [vmem:[%s223] sm:$0x1]
    %226 = vrot.lane.b32.xlu0 %v217, 96
    %v227 = vpop.permute.xlu0 %226
    %v232 = vunpack.c.l.b16 %v219
    %v233 = vunpack.c.l.b16 %v220
    %v234 = vunpack.c.l.b16 %v221
    %v235 = vunpack.c.l.b16 %v222
    %v236 = vpack.c.b16 %v233, %v232
    %v237 = vpack.c.b16 %v235, %v234
    %v241 = vsel %vm150, %v227, 0
    %243 = vmatprep.subr.bf16.mxu0 0
    %244 = vmatpush1.bf16.msra.mxu0 %v236
    %245 = vmatprep.subr.bf16.mxu0 0
    %246 = vmatpush1.bf16.msra.mxu0 %v237
    %247 = vmatprep.subr.bf16.mxu0 0
    %248 = vmatpush1.bf16.msra.mxu0 0
    %249 = vmatprep.subr.bf16.mxu0 0
    %250 = vmatpush1.bf16.msra.mxu0 0
    %251 = vmatprep.subr.bf16.mxu0 0
    %252 = vmatpush1.bf16.msra.mxu0 0
    %253 = vmatprep.subr.bf16.mxu0 0
    %254 = vmatpush1.bf16.msra.mxu0 0
    %255 = vmatprep.subr.bf16.mxu0 0
    %256 = vmatpush1.bf16.msra.mxu0 0
    %257 = vmatprep.subr.bf16.mxu0 0
    %258 = vmatpush1.bf16.msra.mxu0 0
    %259 = vmatprep.subr.bf16.mxu0 0
    %260 = vmatpush1.bf16.msra.mxu0 0
    %261 = vmatprep.subr.bf16.mxu0 0
    %262 = vmatpush1.bf16.msra.mxu0 0
    %263 = vmatprep.subr.bf16.mxu0 0
    %264 = vmatpush1.bf16.msra.mxu0 0
    %265 = vmatprep.subr.bf16.mxu0 0
    %266 = vmatpush1.bf16.msra.mxu0 0
    %267 = vmatprep.subr.bf16.mxu0 0
    %268 = vmatpush1.bf16.msra.mxu0 0
    %269 = vmatprep.subr.bf16.mxu0 0
    %270 = vmatpush1.bf16.msra.mxu0 0
    %271 = vmatprep.subr.bf16.mxu0 0
    %272 = vmatpush1.bf16.msra.mxu0 0
    %273 = vmatprep.subr.bf16.mxu0 0
    %274 = vmatpush1.bf16.msra.mxu0 0
    %275 = vmatprep.mubr.bf16.mxu0 0
    %276 = vmatmul.mubr.bf16.gmra.mrb[0].mxu0 %v241
    %v277 = vpop.f32.mrb[0].mxu0
    %v278 = vadd.f32 %v224, %v277
    %v279 = vpop.f32.mrb[0].mxu0
    %v280 = vpop.f32.mrb[0].mxu0
    %v281 = vpop.f32.mrb[0].mxu0
    %282 = vdwg.mxu0
    %v283 = vxor.u32 %v278, 2147483648
    %v284 = vmul.f32 %v283, 1.442695
    %v285 = vpow.pop %v284
    %v286 = vadd.f32 %v285, 1.0
    %v287 = vrcp.pop %v286
    %v288 = vmul.f32 1.0, %v287
    %290 = vrot.lane.b32.xlu0 %v278, 32
    %v291 = vpop.permute.xlu0 %290
    %v293 = vmul.f32 %v288, %v291
    %295 = vrot.lane.b32.xlu0 %v293, 64
    %v296 = vpop.permute.xlu0 %295
    %v298 = vadd.f32 %v278, %v296
    %v299 = vtanh.pop %v298
    %v300 = vsub.f32 1.0, %v288
    %302 = vrot.lane.b32.xlu0 %v299, 96
    %v303 = vpop.permute.xlu0 %302
    %v305 = vmul.f32 %v300, %v303
    %v306 = vld [vmem:[%s5] sm:$0x1]
    %v307 = vmax.f32 %v306, 0.0
    %v308 = vpack.c.bf16 %v307, %v307
    %v313 = vunpack.c.l.b16 %v104
    %v314 = vunpack.c.l.b16 %v105
    %v315 = vunpack.c.l.b16 %v106
    %v316 = vunpack.c.l.b16 %v107
    %v317 = vpack.c.b16 %v314, %v313
    %v318 = vpack.c.b16 %v316, %v315
    %v322 = vsel %vm150, %v308, 0
    %324 = vmatprep.subr.bf16.mxu0 0
    %325 = vmatpush1.bf16.msra.mxu0 %v317
    %326 = vmatprep.subr.bf16.mxu0 0
    %327 = vmatpush1.bf16.msra.mxu0 %v318
    %328 = vmatprep.subr.bf16.mxu0 0
    %329 = vmatpush1.bf16.msra.mxu0 0
    %330 = vmatprep.subr.bf16.mxu0 0
    %331 = vmatpush1.bf16.msra.mxu0 0
    %332 = vmatprep.subr.bf16.mxu0 0
    %333 = vmatpush1.bf16.msra.mxu0 0
    %334 = vmatprep.subr.bf16.mxu0 0
    %335 = vmatpush1.bf16.msra.mxu0 0
    %336 = vmatprep.subr.bf16.mxu0 0
    %337 = vmatpush1.bf16.msra.mxu0 0
    %338 = vmatprep.subr.bf16.mxu0 0
    %339 = vmatpush1.bf16.msra.mxu0 0
    %340 = vmatprep.subr.bf16.mxu0 0
    %341 = vmatpush1.bf16.msra.mxu0 0
    %342 = vmatprep.subr.bf16.mxu0 0
    %343 = vmatpush1.bf16.msra.mxu0 0
    %344 = vmatprep.subr.bf16.mxu0 0
    %345 = vmatpush1.bf16.msra.mxu0 0
    %346 = vmatprep.subr.bf16.mxu0 0
    %347 = vmatpush1.bf16.msra.mxu0 0
    %348 = vmatprep.subr.bf16.mxu0 0
    %349 = vmatpush1.bf16.msra.mxu0 0
    %350 = vmatprep.subr.bf16.mxu0 0
    %351 = vmatpush1.bf16.msra.mxu0 0
    %352 = vmatprep.subr.bf16.mxu0 0
    %353 = vmatpush1.bf16.msra.mxu0 0
    %354 = vmatprep.subr.bf16.mxu0 0
    %355 = vmatpush1.bf16.msra.mxu0 0
    %356 = vmatprep.mubr.bf16.mxu0 0
    %357 = vmatmul.mubr.bf16.gmra.mrb[0].mxu0 %v322
    %v358 = vpop.f32.mrb[0].mxu0
    %v359 = vadd.f32 %v121, %v358
    %v360 = vpop.f32.mrb[0].mxu0
    %v361 = vpop.f32.mrb[0].mxu0
    %v362 = vpop.f32.mrb[0].mxu0
    %363 = vdwg.mxu0
    %v368 = vunpack.c.l.b16 %v108
    %v369 = vunpack.c.l.b16 %v109
    %v370 = vunpack.c.l.b16 %v110
    %v371 = vunpack.c.l.b16 %v111
    %v372 = vpack.c.b16 %v369, %v368
    %v373 = vpack.c.b16 %v371, %v370
    %376 = vmatprep.subr.bf16.mxu0 0
    %377 = vmatpush1.bf16.msra.mxu0 %v372
    %378 = vmatprep.subr.bf16.mxu0 0
    %379 = vmatpush1.bf16.msra.mxu0 %v373
    %380 = vmatprep.subr.bf16.mxu0 0
    %381 = vmatpush1.bf16.msra.mxu0 0
    %382 = vmatprep.subr.bf16.mxu0 0
    %383 = vmatpush1.bf16.msra.mxu0 0
    %384 = vmatprep.subr.bf16.mxu0 0
    %385 = vmatpush1.bf16.msra.mxu0 0
    %386 = vmatprep.subr.bf16.mxu0 0
    %387 = vmatpush1.bf16.msra.mxu0 0
    %388 = vmatprep.subr.bf16.mxu0 0
    %389 = vmatpush1.bf16.msra.mxu0 0
    %390 = vmatprep.subr.bf16.mxu0 0
    %391 = vmatpush1.bf16.msra.mxu0 0
    %392 = vmatprep.subr.bf16.mxu0 0
    %393 = vmatpush1.bf16.msra.mxu0 0
    %394 = vmatprep.subr.bf16.mxu0 0
    %395 = vmatpush1.bf16.msra.mxu0 0
    %396 = vmatprep.subr.bf16.mxu0 0
    %397 = vmatpush1.bf16.msra.mxu0 0
    %398 = vmatprep.subr.bf16.mxu0 0
    %399 = vmatpush1.bf16.msra.mxu0 0
    %400 = vmatprep.subr.bf16.mxu0 0
    %401 = vmatpush1.bf16.msra.mxu0 0
    %402 = vmatprep.subr.bf16.mxu0 0
    %403 = vmatpush1.bf16.msra.mxu0 0
    %404 = vmatprep.subr.bf16.mxu0 0
    %405 = vmatpush1.bf16.msra.mxu0 0
    %406 = vmatprep.subr.bf16.mxu0 0
    %407 = vmatpush1.bf16.msra.mxu0 0
    %408 = vmatprep.mubr.bf16.mxu0 0
    %409 = vmatmul.mubr.bf16.gmra.mrb[0].mxu0 %v241
    %v410 = vpop.f32.mrb[0].mxu0
    %v411 = vadd.f32 %v359, %v410
    %v412 = vpop.f32.mrb[0].mxu0
    %v413 = vpop.f32.mrb[0].mxu0
    %v414 = vpop.f32.mrb[0].mxu0
    %415 = vdwg.mxu0
    %v416 = vxor.u32 %v411, 2147483648
    %v417 = vmul.f32 %v416, 1.442695
    %v418 = vpow.pop %v417
    %v419 = vadd.f32 %v418, 1.0
    %v420 = vrcp.pop %v419
    %v421 = vmul.f32 1.0, %v420
    %423 = vrot.lane.b32.xlu0 %v411, 32
    %v424 = vpop.permute.xlu0 %423
    %v426 = vmul.f32 %v421, %v424
    %428 = vrot.lane.b32.xlu0 %v426, 64
    %v429 = vpop.permute.xlu0 %428
    %v431 = vadd.f32 %v411, %v429
    %v432 = vtanh.pop %v431
    %v433 = vsub.f32 1.0, %v421
    %435 = vrot.lane.b32.xlu0 %v432, 96
    %v436 = vpop.permute.xlu0 %435
    %v438 = vmul.f32 %v433, %v436
    %v439 = vmul.f32 %v421, %v216
    %v440 = vadd.f32 %v438, %v439
    %442 = vrot.lane.b32.xlu0 %v440, 96
    %v443 = vpop.permute.xlu0 %442
    %v445 = vsel %vm150, %v443, %v305
    %v446 = vpack.c.bf16 %v445, %v445
    %v455 = vunpack.c.l.b16 %v113
    %v456 = vunpack.c.l.b16 %v114
    %v457 = vunpack.c.l.b16 %v115
    %v458 = vunpack.c.l.b16 %v116
    %v459 = vunpack.c.l.b16 %v117
    %v460 = vunpack.c.l.b16 %v118
    %v461 = vunpack.c.l.b16 %v119
    %v462 = vunpack.c.l.b16 %v120
    %v463 = vpack.c.b16 %v456, %v455
    %v464 = vpack.c.b16 %v458, %v457
    %v465 = vpack.c.b16 %v460, %v459
    %v466 = vpack.c.b16 %v462, %v461
    %vm471 = vcmask 523264
    %v473 = vsel %vm471, %v446, 0
    %475 = vmatprep.subr.bf16.mxu0 0
    %476 = vmatpush1.bf16.msra.mxu0 %v463
    %477 = vmatprep.subr.bf16.mxu0 0
    %478 = vmatpush1.bf16.msra.mxu0 %v464
    %479 = vmatprep.subr.bf16.mxu0 0
    %480 = vmatpush1.bf16.msra.mxu0 %v465
    %481 = vmatprep.subr.bf16.mxu0 0
    %482 = vmatpush1.bf16.msra.mxu0 %v466
    %483 = vmatprep.subr.bf16.mxu0 0
    %484 = vmatpush1.bf16.msra.mxu0 0
    %485 = vmatprep.subr.bf16.mxu0 0
    %486 = vmatpush1.bf16.msra.mxu0 0
    %487 = vmatprep.subr.bf16.mxu0 0
    %488 = vmatpush1.bf16.msra.mxu0 0
    %489 = vmatprep.subr.bf16.mxu0 0
    %490 = vmatpush1.bf16.msra.mxu0 0
    %491 = vmatprep.subr.bf16.mxu0 0
    %492 = vmatpush1.bf16.msra.mxu0 0
    %493 = vmatprep.subr.bf16.mxu0 0
    %494 = vmatpush1.bf16.msra.mxu0 0
    %495 = vmatprep.subr.bf16.mxu0 0
    %496 = vmatpush1.bf16.msra.mxu0 0
    %497 = vmatprep.subr.bf16.mxu0 0
    %498 = vmatpush1.bf16.msra.mxu0 0
    %499 = vmatprep.subr.bf16.mxu0 0
    %500 = vmatpush1.bf16.msra.mxu0 0
    %501 = vmatprep.subr.bf16.mxu0 0
    %502 = vmatpush1.bf16.msra.mxu0 0
    %503 = vmatprep.subr.bf16.mxu0 0
    %504 = vmatpush1.bf16.msra.mxu0 0
    %505 = vmatprep.subr.bf16.mxu0 0
    %506 = vmatpush1.bf16.msra.mxu0 0
    %507 = vmatprep.mubr.bf16.mxu0 0
    %508 = vmatmul.mubr.bf16.gmra.mrb[0].mxu0 %v473
    %v509 = vpop.f32.mrb[0].mxu0
    %v510 = vadd.f32 %v123, %v509
    %v511 = vpop.f32.mrb[0].mxu0
    %v512 = vpop.f32.mrb[0].mxu0
    %v513 = vpop.f32.mrb[0].mxu0
    %514 = vdwg.mxu0
    %v515 = vxor.u32 %v510, 2147483648
    %v516 = vmul.f32 %v515, 1.442695
    %v517 = vpow.pop %v516
    %v518 = vadd.f32 %v517, 1.0
    %v519 = vrcp.pop %v518
    %v520 = vmul.f32 1.0, %v519
    %522 = vrot.lane.b32.xlu0 %v510, 32
    %v523 = vpop.permute.xlu0 %522
    %v525 = vmul.f32 %v520, %v523
    %527 = vrot.lane.b32.xlu0 %v525, 64
    %v528 = vpop.permute.xlu0 %527
    %v530 = vadd.f32 %v510, %v528
    %v531 = vtanh.pop %v530
    %v532 = vsub.f32 1.0, %v520
    %534 = vrot.lane.b32.xlu0 %v531, 96
    %v535 = vpop.permute.xlu0 %534
    %v537 = vmul.f32 %v532, %v535
    %v538 = vmul.f32 %v520, %v305
    %v539 = vadd.f32 %v537, %v538
    %v540 = vpack.c.bf16 %v539, %v539
    %542 = vrot.lane.b32.xlu0 %v540, 96
    %v543 = vpop.permute.xlu0 %542
    %v548 = vunpack.c.l.b16 %v124
    %v549 = vunpack.c.l.b16 %v125
    %v550 = vunpack.c.l.b16 %v126
    %v551 = vunpack.c.l.b16 %v127
    %v552 = vpack.c.b16 %v549, %v548
    %v553 = vpack.c.b16 %v551, %v550
    %v557 = vsel %vm150, %v543, 0
    %559 = vmatprep.subr.bf16.mxu0 0
    %560 = vmatpush1.bf16.msra.mxu0 %v552
    %561 = vmatprep.subr.bf16.mxu0 0
    %562 = vmatpush1.bf16.msra.mxu0 %v553
    %563 = vmatprep.subr.bf16.mxu0 0
    %564 = vmatpush1.bf16.msra.mxu0 0
    %565 = vmatprep.subr.bf16.mxu0 0
    %566 = vmatpush1.bf16.msra.mxu0 0
    %567 = vmatprep.subr.bf16.mxu0 0
    %568 = vmatpush1.bf16.msra.mxu0 0
    %569 = vmatprep.subr.bf16.mxu0 0
    %570 = vmatpush1.bf16.msra.mxu0 0
    %571 = vmatprep.subr.bf16.mxu0 0
    %572 = vmatpush1.bf16.msra.mxu0 0
    %573 = vmatprep.subr.bf16.mxu0 0
    %574 = vmatpush1.bf16.msra.mxu0 0
    %575 = vmatprep.subr.bf16.mxu0 0
    %576 = vmatpush1.bf16.msra.mxu0 0
    %577 = vmatprep.subr.bf16.mxu0 0
    %578 = vmatpush1.bf16.msra.mxu0 0
    %579 = vmatprep.subr.bf16.mxu0 0
    %580 = vmatpush1.bf16.msra.mxu0 0
    %581 = vmatprep.subr.bf16.mxu0 0
    %582 = vmatpush1.bf16.msra.mxu0 0
    %583 = vmatprep.subr.bf16.mxu0 0
    %584 = vmatpush1.bf16.msra.mxu0 0
    %585 = vmatprep.subr.bf16.mxu0 0
    %586 = vmatpush1.bf16.msra.mxu0 0
    %587 = vmatprep.subr.bf16.mxu0 0
    %588 = vmatpush1.bf16.msra.mxu0 0
    %589 = vmatprep.subr.bf16.mxu0 0
    %590 = vmatpush1.bf16.msra.mxu0 0
    %591 = vmatprep.mubr.bf16.mxu0 0
    %592 = vmatmul.mubr.bf16.gmra.mrb[0].mxu0 %v557
    %v593 = vpop.f32.mrb[0].mxu0
    %v594 = vadd.f32 %v128, %v593
    %v595 = vpop.f32.mrb[0].mxu0
    %v596 = vpop.f32.mrb[0].mxu0
    %v597 = vpop.f32.mrb[0].mxu0
    %598 = vdwg.mxu0
    %vm599 = vcmask 1040384
    %v600 = vsel %vm599, %v594, -inf
    %601 = vmax.xlane.f32.xlu0 %v600
    %v602 = vpop.xlane.xlu0 %601
    %v603 = vsub.f32 %v594, %v602
    %v604 = vmul.f32 %v603, 1.442695
    %v605 = vpow.pop %v604
    %v606 = vsel %vm599, %v605, 0.0
    %607 = vadd.xlane.f32.xlu0 %v606
    %v608 = vpop.xlane.xlu0 %607
    %v609 = vlog2.pop %v608
    %v610 = vmul.f32 %v609, 0.6931472
    %v611 = vadd.f32 %v602, %v610
    %v612 = vsub.f32 %v594, %v611
    %s613 = sld [smem:[#allocation3]]
    %p614 = scmp.eq.s32.totalorder %s613, 1
    // Predicated region
    $region62: #{tpu_custom_call.1} parent=1 // pred_check
      %p615 = pneg %p614
    $region63: #{tpu_custom_call.1} parent=1 // pred_check_branch
      %617 = sbr.rel (%p615) target = $region65
    $region64: #{tpu_custom_call.1} parent=1 // pred_region
      _
    $region65: #{tpu_custom_call.1} parent=1 // pred_fallthru
      _
    %p618 = pneg %p614
    // Predicated region
    $region66: #{tpu_custom_call.1} parent=1 // pred_check
      _
    $region67: #{tpu_custom_call.1} parent=1 // pred_check_branch
      %620 = sbr.rel (%p614) target = $region69
    $region68: #{tpu_custom_call.1} parent=1 // pred_region
      %v621 = vlaneseq
      %v622 = vand.u32 %v621, 127
      %vm623 = vcmp.ge.f32.partialorder %v594, %v602
      %v624 = vsel %vm623, %v622, 128
      %v625 = vsel %vm599, %v624, 2147483647
      %v626 = vand.u32 %v625, 65535
      %v627 = vshra.s32 %v625, 16
      %v628 = vcvt.s32.f32 %v626
      %v629 = vcvt.s32.f32 %v627
      %630 = vmin.xlane.f32.xlu0 %v629
      %v631 = vpop.xlane.xlu0 %630
      %vm632 = vcmp.eq.f32.partialorder %v629, %v631
      %v633 = vsel %vm632, %v628, inf
      %634 = vmin.xlane.f32.xlu0 %v633
      %v635 = vpop.xlane.xlu0 %634
      %v636 = vcvt.f32.s32 %v635
      %v637 = vcvt.f32.s32 %v631
      %v638 = vshll.u32 %v637, 16
      %v639 = vadd.s32 %v638, %v636
      %v640 = vrot.slane %v639, 4
      %vm641 = vcmp.lt.s32.totalorder %v639, %v640
      %v642 = vsel %vm641, %v639, %v640
      %v643 = vrot.slane %v642, 2
      %vm644 = vcmp.lt.s32.totalorder %v642, %v643
      %v645 = vsel %vm644, %v642, %v643
      %v646 = vrot.slane %v645, 1
      %vm647 = vcmp.lt.s32.totalorder %v645, %v646
      %v648 = vsel %vm647, %v645, %v646
      %s649 = vtos %v648
      %p650 = scmp.eq.s32.totalorder %s649, 1
      %s651 = scalar_select %p650, 1, 0
    $region69: #{tpu_custom_call.1} parent=1 // pred_fallthru
      %s652 = sphi 0, %s651
    %s653 = scvt.s32.f32 %s652
    %s654 = ssub.f32 1.0, %s653
    %v655 = vpack.c.bf16 %v440, %v440
    %657 = vrot.lane.b32.xlu0 %v655, 96
    %v658 = vpop.permute.xlu0 %657
    %v660 = vsel %vm150, %v658, 0
    %662 = vmatprep.subr.bf16.mxu0 0
    %663 = vmatpush1.bf16.msra.mxu0 %v372
    %664 = vmatprep.subr.bf16.mxu0 0
    %665 = vmatpush1.bf16.msra.mxu0 %v373
    %666 = vmatprep.subr.bf16.mxu0 0
    %667 = vmatpush1.bf16.msra.mxu0 0
    %668 = vmatprep.subr.bf16.mxu0 0
    %669 = vmatpush1.bf16.msra.mxu0 0
    %670 = vmatprep.subr.bf16.mxu0 0
    %671 = vmatpush1.bf16.msra.mxu0 0
    %672 = vmatprep.subr.bf16.mxu0 0
    %673 = vmatpush1.bf16.msra.mxu0 0
    %674 = vmatprep.subr.bf16.mxu0 0
    %675 = vmatpush1.bf16.msra.mxu0 0
    %676 = vmatprep.subr.bf16.mxu0 0
    %677 = vmatpush1.bf16.msra.mxu0 0
    %678 = vmatprep.subr.bf16.mxu0 0
    %679 = vmatpush1.bf16.msra.mxu0 0
    %680 = vmatprep.subr.bf16.mxu0 0
    %681 = vmatpush1.bf16.msra.mxu0 0
    %682 = vmatprep.subr.bf16.mxu0 0
    %683 = vmatpush1.bf16.msra.mxu0 0
    %684 = vmatprep.subr.bf16.mxu0 0
    %685 = vmatpush1.bf16.msra.mxu0 0
    %686 = vmatprep.subr.bf16.mxu0 0
    %687 = vmatpush1.bf16.msra.mxu0 0
    %688 = vmatprep.subr.bf16.mxu0 0
    %689 = vmatpush1.bf16.msra.mxu0 0
    %690 = vmatprep.subr.bf16.mxu0 0
    %691 = vmatpush1.bf16.msra.mxu0 0
    %692 = vmatprep.subr.bf16.mxu0 0
    %693 = vmatpush1.bf16.msra.mxu0 0
    %694 = vmatprep.mubr.bf16.mxu0 0
    %695 = vmatmul.mubr.bf16.gmra.mrb[0].mxu0 %v660
    %v696 = vpop.f32.mrb[0].mxu0
    %v697 = vadd.f32 %v359, %v696
    %v698 = vpop.f32.mrb[0].mxu0
    %v699 = vpop.f32.mrb[0].mxu0
    %v700 = vpop.f32.mrb[0].mxu0
    %701 = vdwg.mxu0
    %v702 = vxor.u32 %v697, 2147483648
    %v703 = vmul.f32 %v702, 1.442695
    %v704 = vpow.pop %v703
    %v705 = vadd.f32 %v704, 1.0
    %v706 = vrcp.pop %v705
    %v707 = vmul.f32 1.0, %v706
    %709 = vrot.lane.b32.xlu0 %v697, 32
    %v710 = vpop.permute.xlu0 %709
    %v712 = vmul.f32 %v707, %v710
    %714 = vrot.lane.b32.xlu0 %v712, 64
    %v715 = vpop.permute.xlu0 %714
    %v717 = vadd.f32 %v697, %v715
    %v718 = vtanh.pop %v717
    %v719 = vsub.f32 1.0, %v707
    %721 = vrot.lane.b32.xlu0 %v718, 96
    %v722 = vpop.permute.xlu0 %721
    %v724 = vmul.f32 %v719, %v722
    %v725 = vmul.f32 %v707, %v440
    %v726 = vadd.f32 %v724, %v725
    %728 = vrot.lane.b32.xlu0 %v726, 96
    %v729 = vpop.permute.xlu0 %728
    %v731 = vsel %vm150, %v729, %v539
    %v732 = vpack.c.bf16 %v731, %v731
    %v734 = vsel %vm471, %v732, 0
    %736 = vmatprep.subr.bf16.mxu0 0
    %737 = vmatpush1.bf16.msra.mxu0 %v463
    %738 = vmatprep.subr.bf16.mxu0 0
    %739 = vmatpush1.bf16.msra.mxu0 %v464
    %740 = vmatprep.subr.bf16.mxu0 0
    %741 = vmatpush1.bf16.msra.mxu0 %v465
    %742 = vmatprep.subr.bf16.mxu0 0
    %743 = vmatpush1.bf16.msra.mxu0 %v466
    %744 = vmatprep.subr.bf16.mxu0 0
    %745 = vmatpush1.bf16.msra.mxu0 0
    %746 = vmatprep.subr.bf16.mxu0 0
    %747 = vmatpush1.bf16.msra.mxu0 0
    %748 = vmatprep.subr.bf16.mxu0 0
    %749 = vmatpush1.bf16.msra.mxu0 0
    %750 = vmatprep.subr.bf16.mxu0 0
    %751 = vmatpush1.bf16.msra.mxu0 0
    %752 = vmatprep.subr.bf16.mxu0 0
    %753 = vmatpush1.bf16.msra.mxu0 0
    %754 = vmatprep.subr.bf16.mxu0 0
    %755 = vmatpush1.bf16.msra.mxu0 0
    %756 = vmatprep.subr.bf16.mxu0 0
    %757 = vmatpush1.bf16.msra.mxu0 0
    %758 = vmatprep.subr.bf16.mxu0 0
    %759 = vmatpush1.bf16.msra.mxu0 0
    %760 = vmatprep.subr.bf16.mxu0 0
    %761 = vmatpush1.bf16.msra.mxu0 0
    %762 = vmatprep.subr.bf16.mxu0 0
    %763 = vmatpush1.bf16.msra.mxu0 0
    %764 = vmatprep.subr.bf16.mxu0 0
    %765 = vmatpush1.bf16.msra.mxu0 0
    %766 = vmatprep.subr.bf16.mxu0 0
    %767 = vmatpush1.bf16.msra.mxu0 0
    %768 = vmatprep.mubr.bf16.mxu0 0
    %769 = vmatmul.mubr.bf16.gmra.mrb[0].mxu0 %v734
    %v770 = vpop.f32.mrb[0].mxu0
    %v771 = vadd.f32 %v123, %v770
    %v772 = vpop.f32.mrb[0].mxu0
    %v773 = vpop.f32.mrb[0].mxu0
    %v774 = vpop.f32.mrb[0].mxu0
    %775 = vdwg.mxu0
    %v776 = vxor.u32 %v771, 2147483648
    %v777 = vmul.f32 %v776, 1.442695
    %v778 = vpow.pop %v777
    %v779 = vadd.f32 %v778, 1.0
    %v780 = vrcp.pop %v779
    %v781 = vmul.f32 1.0, %v780
    %783 = vrot.lane.b32.xlu0 %v771, 32
    %v784 = vpop.permute.xlu0 %783
    %v786 = vmul.f32 %v781, %v784
    %788 = vrot.lane.b32.xlu0 %v786, 64
    %v789 = vpop.permute.xlu0 %788
    %v791 = vadd.f32 %v771, %v789
    %v792 = vtanh.pop %v791
    %v793 = vsub.f32 1.0, %v781
    %795 = vrot.lane.b32.xlu0 %v792, 96
    %v796 = vpop.permute.xlu0 %795
    %v798 = vmul.f32 %v793, %v796
    %v799 = vmul.f32 %v781, %v539
    %v800 = vadd.f32 %v798, %v799
    %v801 = vpack.c.bf16 %v800, %v800
    %803 = vrot.lane.b32.xlu0 %v801, 96
    %v804 = vpop.permute.xlu0 %803
    %v806 = vsel %vm150, %v804, 0
    %808 = vmatprep.subr.bf16.mxu0 0
    %809 = vmatpush1.bf16.msra.mxu0 %v552
    %810 = vmatprep.subr.bf16.mxu0 0
    %811 = vmatpush1.bf16.msra.mxu0 %v553
    %812 = vmatprep.subr.bf16.mxu0 0
    %813 = vmatpush1.bf16.msra.mxu0 0
    %814 = vmatprep.subr.bf16.mxu0 0
    %815 = vmatpush1.bf16.msra.mxu0 0
    %816 = vmatprep.subr.bf16.mxu0 0
    %817 = vmatpush1.bf16.msra.mxu0 0
    %818 = vmatprep.subr.bf16.mxu0 0
    %819 = vmatpush1.bf16.msra.mxu0 0
    %820 = vmatprep.subr.bf16.mxu0 0
    %821 = vmatpush1.bf16.msra.mxu0 0
    %822 = vmatprep.subr.bf16.mxu0 0
    %823 = vmatpush1.bf16.msra.mxu0 0
    %824 = vmatprep.subr.bf16.mxu0 0
    %825 = vmatpush1.bf16.msra.mxu0 0
    %826 = vmatprep.subr.bf16.mxu0 0
    %827 = vmatpush1.bf16.msra.mxu0 0
    %828 = vmatprep.subr.bf16.mxu0 0
    %829 = vmatpush1.bf16.msra.mxu0 0
    %830 = vmatprep.subr.bf16.mxu0 0
    %831 = vmatpush1.bf16.msra.mxu0 0
    %832 = vmatprep.subr.bf16.mxu0 0
    %833 = vmatpush1.bf16.msra.mxu0 0
    %834 = vmatprep.subr.bf16.mxu0 0
    %835 = vmatpush1.bf16.msra.mxu0 0
    %836 = vmatprep.subr.bf16.mxu0 0
    %837 = vmatpush1.bf16.msra.mxu0 0
    %838 = vmatprep.subr.bf16.mxu0 0
    %839 = vmatpush1.bf16.msra.mxu0 0
    %840 = vmatprep.mubr.bf16.mxu0 0
    %841 = vmatmul.mubr.bf16.gmra.mrb[0].mxu0 %v806
    %v842 = vpop.f32.mrb[0].mxu0
    %v843 = vadd.f32 %v128, %v842
    %v844 = vpop.f32.mrb[0].mxu0
    %v845 = vpop.f32.mrb[0].mxu0
    %v846 = vpop.f32.mrb[0].mxu0
    %847 = vdwg.mxu0
    %v848 = vsel %vm599, %v843, -inf
    %849 = vmax.xlane.f32.xlu0 %v848
    %v850 = vpop.xlane.xlu0 %849
    %v851 = vsub.f32 %v843, %v850
    %v852 = vmul.f32 %v851, 1.442695
    %v853 = vpow.pop %v852
    %v854 = vsel %vm599, %v853, 0.0
    %855 = vadd.xlane.f32.xlu0 %v854
    %v856 = vpop.xlane.xlu0 %855
    %v857 = vlog2.pop %v856
    %v858 = vmul.f32 %v857, 0.6931472
    %v859 = vadd.f32 %v850, %v858
    %v860 = vsub.f32 %v843, %v859
    %v861 = vstv %s654
    %v862 = vmul.f32 %v860, %v861
    %s863 = sld [smem:[#allocation3 + $0x1]]
    %p864 = scmp.eq.s32.totalorder %s863, 1
    // Predicated region
    $region70: #{tpu_custom_call.1} parent=1 // pred_check
      %p865 = pneg %p864
    $region71: #{tpu_custom_call.1} parent=1 // pred_check_branch
      %867 = sbr.rel (%p865) target = $region73
    $region72: #{tpu_custom_call.1} parent=1 // pred_region
      _
    $region73: #{tpu_custom_call.1} parent=1 // pred_fallthru
      _
    %p868 = pneg %p864
    // Predicated region
    $region74: #{tpu_custom_call.1} parent=1 // pred_check
      _
    $region75: #{tpu_custom_call.1} parent=1 // pred_check_branch
      %870 = sbr.rel (%p864) target = $region77
    $region76: #{tpu_custom_call.1} parent=1 // pred_region
      %v871 = vlaneseq
      %v872 = vand.u32 %v871, 127
      %vm873 = vcmp.ge.f32.partialorder %v843, %v850
      %v874 = vsel %vm873, %v872, 128
      %v875 = vsel %vm599, %v874, 2147483647
      %v876 = vand.u32 %v875, 65535
      %v877 = vshra.s32 %v875, 16
      %v878 = vcvt.s32.f32 %v876
      %v879 = vcvt.s32.f32 %v877
      %880 = vmin.xlane.f32.xlu0 %v879
      %v881 = vpop.xlane.xlu0 %880
      %vm882 = vcmp.eq.f32.partialorder %v879, %v881
      %v883 = vsel %vm882, %v878, inf
      %884 = vmin.xlane.f32.xlu0 %v883
      %v885 = vpop.xlane.xlu0 %884
      %v886 = vcvt.f32.s32 %v885
      %v887 = vcvt.f32.s32 %v881
      %v888 = vshll.u32 %v887, 16
      %v889 = vadd.s32 %v888, %v886
      %v890 = vrot.slane %v889, 4
      %vm891 = vcmp.lt.s32.totalorder %v889, %v890
      %v892 = vsel %vm891, %v889, %v890
      %v893 = vrot.slane %v892, 2
      %vm894 = vcmp.lt.s32.totalorder %v892, %v893
      %v895 = vsel %vm894, %v892, %v893
      %v896 = vrot.slane %v895, 1
      %vm897 = vcmp.lt.s32.totalorder %v895, %v896
      %v898 = vsel %vm897, %v895, %v896
      %s899 = vtos %v898
      %p900 = scmp.eq.s32.totalorder %s899, 1
      %s901 = scalar_select %p900, 1, 0
    $region77: #{tpu_custom_call.1} parent=1 // pred_fallthru
      %s902 = sphi 0, %s901
    %s903 = scvt.s32.f32 %s902
    %s904 = ssub.f32 1.0, %s903
    %s905 = smul.f32 %s654, %s904
    %v906 = vpack.c.bf16 %v726, %v726
    %908 = vrot.lane.b32.xlu0 %v906, 96
    %v909 = vpop.permute.xlu0 %908
    %v911 = vsel %vm150, %v909, 0
    %913 = vmatprep.subr.bf16.mxu0 0
    %914 = vmatpush1.bf16.msra.mxu0 %v372
    %915 = vmatprep.subr.bf16.mxu0 0
    %916 = vmatpush1.bf16.msra.mxu0 %v373
    %917 = vmatprep.subr.bf16.mxu0 0
    %918 = vmatpush1.bf16.msra.mxu0 0
    %919 = vmatprep.subr.bf16.mxu0 0
    %920 = vmatpush1.bf16.msra.mxu0 0
    %921 = vmatprep.subr.bf16.mxu0 0
    %922 = vmatpush1.bf16.msra.mxu0 0
    %923 = vmatprep.subr.bf16.mxu0 0
    %924 = vmatpush1.bf16.msra.mxu0 0
    %925 = vmatprep.subr.bf16.mxu0 0
    %926 = vmatpush1.bf16.msra.mxu0 0
    %927 = vmatprep.subr.bf16.mxu0 0
    %928 = vmatpush1.bf16.msra.mxu0 0
    %929 = vmatprep.subr.bf16.mxu0 0
    %930 = vmatpush1.bf16.msra.mxu0 0
    %931 = vmatprep.subr.bf16.mxu0 0
    %932 = vmatpush1.bf16.msra.mxu0 0
    %933 = vmatprep.subr.bf16.mxu0 0
    %934 = vmatpush1.bf16.msra.mxu0 0
    %935 = vmatprep.subr.bf16.mxu0 0
    %936 = vmatpush1.bf16.msra.mxu0 0
    %937 = vmatprep.subr.bf16.mxu0 0
    %938 = vmatpush1.bf16.msra.mxu0 0
    %939 = vmatprep.subr.bf16.mxu0 0
    %940 = vmatpush1.bf16.msra.mxu0 0
    %941 = vmatprep.subr.bf16.mxu0 0
    %942 = vmatpush1.bf16.msra.mxu0 0
    %943 = vmatprep.subr.bf16.mxu0 0
    %944 = vmatpush1.bf16.msra.mxu0 0
    %945 = vmatprep.mubr.bf16.mxu0 0
    %946 = vmatmul.mubr.bf16.gmra.mrb[0].mxu0 %v911
    %v947 = vpop.f32.mrb[0].mxu0
    %v948 = vadd.f32 %v359, %v947
    %v949 = vpop.f32.mrb[0].mxu0
    %v950 = vpop.f32.mrb[0].mxu0
    %v951 = vpop.f32.mrb[0].mxu0
    %952 = vdwg.mxu0
    %v953 = vxor.u32 %v948, 2147483648
    %v954 = vmul.f32 %v953, 1.442695
    %v955 = vpow.pop %v954
    %v956 = vadd.f32 %v955, 1.0
    %v957 = vrcp.pop %v956
    %v958 = vmul.f32 1.0, %v957
    %960 = vrot.lane.b32.xlu0 %v948, 32
    %v961 = vpop.permute.xlu0 %960
    %v963 = vmul.f32 %v958, %v961
    %965 = vrot.lane.b32.xlu0 %v963, 64
    %v966 = vpop.permute.xlu0 %965
    %v968 = vadd.f32 %v948, %v966
    %v969 = vtanh.pop %v968
    %v970 = vsub.f32 1.0, %v958
    %972 = vrot.lane.b32.xlu0 %v969, 96
    %v973 = vpop.permute.xlu0 %972
    %v975 = vmul.f32 %v970, %v973
    %v976 = vmul.f32 %v958, %v726
    %v977 = vadd.f32 %v975, %v976
    %979 = vrot.lane.b32.xlu0 %v977, 96
    %v980 = vpop.permute.xlu0 %979
    %v982 = vsel %vm150, %v980, %v800
    %v983 = vpack.c.bf16 %v982, %v982
    %v985 = vsel %vm471, %v983, 0
    %987 = vmatprep.subr.bf16.mxu0 0
    %988 = vmatpush1.bf16.msra.mxu0 %v463
    %989 = vmatprep.subr.bf16.mxu0 0
    %990 = vmatpush1.bf16.msra.mxu0 %v464
    %991 = vmatprep.subr.bf16.mxu0 0
    %992 = vmatpush1.bf16.msra.mxu0 %v465
    %993 = vmatprep.subr.bf16.mxu0 0
    %994 = vmatpush1.bf16.msra.mxu0 %v466
    %995 = vmatprep.subr.bf16.mxu0 0
    %996 = vmatpush1.bf16.msra.mxu0 0
    %997 = vmatprep.subr.bf16.mxu0 0
    %998 = vmatpush1.bf16.msra.mxu0 0
    %999 = vmatprep.subr.bf16.mxu0 0
    %1000 = vmatpush1.bf16.msra.mxu0 0
    %1001 = vmatprep.subr.bf16.mxu0 0
    %1002 = vmatpush1.bf16.msra.mxu0 0
    %1003 = vmatprep.subr.bf16.mxu0 0
    %1004 = vmatpush1.bf16.msra.mxu0 0
    %1005 = vmatprep.subr.bf16.mxu0 0
    %1006 = vmatpush1.bf16.msra.mxu0 0
    %1007 = vmatprep.subr.bf16.mxu0 0
    %1008 = vmatpush1.bf16.msra.mxu0 0
    %1009 = vmatprep.subr.bf16.mxu0 0
    %1010 = vmatpush1.bf16.msra.mxu0 0
    %1011 = vmatprep.subr.bf16.mxu0 0
    %1012 = vmatpush1.bf16.msra.mxu0 0
    %1013 = vmatprep.subr.bf16.mxu0 0
    %1014 = vmatpush1.bf16.msra.mxu0 0
    %1015 = vmatprep.subr.bf16.mxu0 0
    %1016 = vmatpush1.bf16.msra.mxu0 0
    %1017 = vmatprep.subr.bf16.mxu0 0
    %1018 = vmatpush1.bf16.msra.mxu0 0
    %1019 = vmatprep.mubr.bf16.mxu0 0
    %1020 = vmatmul.mubr.bf16.gmra.mrb[0].mxu0 %v985
    %v1021 = vpop.f32.mrb[0].mxu0
    %v1022 = vadd.f32 %v123, %v1021
    %v1023 = vpop.f32.mrb[0].mxu0
    %v1024 = vpop.f32.mrb[0].mxu0
    %v1025 = vpop.f32.mrb[0].mxu0
    %1026 = vdwg.mxu0
    %v1027 = vxor.u32 %v1022, 2147483648
    %v1028 = vmul.f32 %v1027, 1.442695
    %v1029 = vpow.pop %v1028
    %v1030 = vadd.f32 %v1029, 1.0
    %v1031 = vrcp.pop %v1030
    %v1032 = vmul.f32 1.0, %v1031
    %1034 = vrot.lane.b32.xlu0 %v1022, 32
    %v1035 = vpop.permute.xlu0 %1034
    %v1037 = vmul.f32 %v1032, %v1035
    %1039 = vrot.lane.b32.xlu0 %v1037, 64
    %v1040 = vpop.permute.xlu0 %1039
    %v1042 = vadd.f32 %v1022, %v1040
    %v1043 = vtanh.pop %v1042
    %v1044 = vsub.f32 1.0, %v1032
    %1046 = vrot.lane.b32.xlu0 %v1043, 96
    %v1047 = vpop.permute.xlu0 %1046
    %v1049 = vmul.f32 %v1044, %v1047
    %v1050 = vmul.f32 %v1032, %v800
    %v1051 = vadd.f32 %v1049, %v1050
    %v1052 = vpack.c.bf16 %v1051, %v1051
    %1054 = vrot.lane.b32.xlu0 %v1052, 96
    %v1055 = vpop.permute.xlu0 %1054
    %v1057 = vsel %vm150, %v1055, 0
    %1059 = vmatprep.subr.bf16.mxu0 0
    %1060 = vmatpush1.bf16.msra.mxu0 %v552
    %1061 = vmatprep.subr.bf16.mxu0 0
    %1062 = vmatpush1.bf16.msra.mxu0 %v553
    %1063 = vmatprep.subr.bf16.mxu0 0
    %1064 = vmatpush1.bf16.msra.mxu0 0
    %1065 = vmatprep.subr.bf16.mxu0 0
    %1066 = vmatpush1.bf16.msra.mxu0 0
    %1067 = vmatprep.subr.bf16.mxu0 0
    %1068 = vmatpush1.bf16.msra.mxu0 0
    %1069 = vmatprep.subr.bf16.mxu0 0
    %1070 = vmatpush1.bf16.msra.mxu0 0
    %1071 = vmatprep.subr.bf16.mxu0 0
    %1072 = vmatpush1.bf16.msra.mxu0 0
    %1073 = vmatprep.subr.bf16.mxu0 0
    %1074 = vmatpush1.bf16.msra.mxu0 0
    %1075 = vmatprep.subr.bf16.mxu0 0
    %1076 = vmatpush1.bf16.msra.mxu0 0
    %1077 = vmatprep.subr.bf16.mxu0 0
    %1078 = vmatpush1.bf16.msra.mxu0 0
    %1079 = vmatprep.subr.bf16.mxu0 0
    %1080 = vmatpush1.bf16.msra.mxu0 0
    %1081 = vmatprep.subr.bf16.mxu0 0
    %1082 = vmatpush1.bf16.msra.mxu0 0
    %1083 = vmatprep.subr.bf16.mxu0 0
    %1084 = vmatpush1.bf16.msra.mxu0 0
    %1085 = vmatprep.subr.bf16.mxu0 0
    %1086 = vmatpush1.bf16.msra.mxu0 0
    %1087 = vmatprep.subr.bf16.mxu0 0
    %1088 = vmatpush1.bf16.msra.mxu0 0
    %1089 = vmatprep.subr.bf16.mxu0 0
    %1090 = vmatpush1.bf16.msra.mxu0 0
    %1091 = vmatprep.mubr.bf16.mxu0 0
    %1092 = vmatmul.mubr.bf16.gmra.mrb[0].mxu0 %v1057
    %v1093 = vpop.f32.mrb[0].mxu0
    %v1094 = vadd.f32 %v128, %v1093
    %v1095 = vpop.f32.mrb[0].mxu0
    %v1096 = vpop.f32.mrb[0].mxu0
    %v1097 = vpop.f32.mrb[0].mxu0
    %1098 = vdwg.mxu0
    %v1099 = vsel %vm599, %v1094, -inf
    %1100 = vmax.xlane.f32.xlu0 %v1099
    %v1101 = vpop.xlane.xlu0 %1100
    %v1102 = vsub.f32 %v1094, %v1101
    %v1103 = vmul.f32 %v1102, 1.442695
    %v1104 = vpow.pop %v1103
    %v1105 = vsel %vm599, %v1104, 0.0
    %1106 = vadd.xlane.f32.xlu0 %v1105
    %v1107 = vpop.xlane.xlu0 %1106
    %v1108 = vlog2.pop %v1107
    %v1109 = vmul.f32 %v1108, 0.6931472
    %v1110 = vadd.f32 %v1101, %v1109
    %v1111 = vsub.f32 %v1094, %v1110
    %v1112 = vstv %s905
    %v1113 = vmul.f32 %v1111, %v1112
    %s1114 = sld [smem:[#allocation3 + $0x2]]
    %p1115 = scmp.eq.s32.totalorder %s1114, 1
    // Predicated region
    $region78: #{tpu_custom_call.1} parent=1 // pred_check
      %p1116 = pneg %p1115
    $region79: #{tpu_custom_call.1} parent=1 // pred_check_branch
      %1118 = sbr.rel (%p1116) target = $region81
    $region80: #{tpu_custom_call.1} parent=1 // pred_region
      _
    $region81: #{tpu_custom_call.1} parent=1 // pred_fallthru
      _
    %p1119 = pneg %p1115
    // Predicated region
    $region82: #{tpu_custom_call.1} parent=1 // pred_check
      _
    $region83: #{tpu_custom_call.1} parent=1 // pred_check_branch
      %1121 = sbr.rel (%p1115) target = $region85
    $region84: #{tpu_custom_call.1} parent=1 // pred_region
      %v1122 = vlaneseq
      %v1123 = vand.u32 %v1122, 127
      %vm1124 = vcmp.ge.f32.partialorder %v1094, %v1101
      %v1125 = vsel %vm1124, %v1123, 128
      %v1126 = vsel %vm599, %v1125, 2147483647
      %v1127 = vand.u32 %v1126, 65535
      %v1128 = vshra.s32 %v1126, 16
      %v1129 = vcvt.s32.f32 %v1127
      %v1130 = vcvt.s32.f32 %v1128
      %1131 = vmin.xlane.f32.xlu0 %v1130
      %v1132 = vpop.xlane.xlu0 %1131
      %vm1133 = vcmp.eq.f32.partialorder %v1130, %v1132
      %v1134 = vsel %vm1133, %v1129, inf
      %1135 = vmin.xlane.f32.xlu0 %v1134
      %v1136 = vpop.xlane.xlu0 %1135
      %v1137 = vcvt.f32.s32 %v1136
      %v1138 = vcvt.f32.s32 %v1132
      %v1139 = vshll.u32 %v1138, 16
      %v1140 = vadd.s32 %v1139, %v1137
      %v1141 = vrot.slane %v1140, 4
      %vm1142 = vcmp.lt.s32.totalorder %v1140, %v1141
      %v1143 = vsel %vm1142, %v1140, %v1141
      %v1144 = vrot.slane %v1143, 2
      %vm1145 = vcmp.lt.s32.totalorder %v1143, %v1144
      %v1146 = vsel %vm1145, %v1143, %v1144
      %v1147 = vrot.slane %v1146, 1
      %vm1148 = vcmp.lt.s32.totalorder %v1146, %v1147
      %v1149 = vsel %vm1148, %v1146, %v1147
      %s1150 = vtos %v1149
      %p1151 = scmp.eq.s32.totalorder %s1150, 1
      %s1152 = scalar_select %p1151, 1, 0
    $region85: #{tpu_custom_call.1} parent=1 // pred_fallthru
      %s1153 = sphi 0, %s1152
    %s1154 = scvt.s32.f32 %s1153
    %s1155 = ssub.f32 1.0, %s1154
    %s1156 = smul.f32 %s905, %s1155
    %v1157 = vpack.c.bf16 %v977, %v977
    %1159 = vrot.lane.b32.xlu0 %v1157, 96
    %v1160 = vpop.permute.xlu0 %1159
    %v1162 = vsel %vm150, %v1160, 0
    %1164 = vmatprep.subr.bf16.mxu0 0
    %1165 = vmatpush1.bf16.msra.mxu0 %v372
    %1166 = vmatprep.subr.bf16.mxu0 0
    %1167 = vmatpush1.bf16.msra.mxu0 %v373
    %1168 = vmatprep.subr.bf16.mxu0 0
    %1169 = vmatpush1.bf16.msra.mxu0 0
    %1170 = vmatprep.subr.bf16.mxu0 0
    %1171 = vmatpush1.bf16.msra.mxu0 0
    %1172 = vmatprep.subr.bf16.mxu0 0
    %1173 = vmatpush1.bf16.msra.mxu0 0
    %1174 = vmatprep.subr.bf16.mxu0 0
    %1175 = vmatpush1.bf16.msra.mxu0 0
    %1176 = vmatprep.subr.bf16.mxu0 0
    %1177 = vmatpush1.bf16.msra.mxu0 0
    %1178 = vmatprep.subr.bf16.mxu0 0
    %1179 = vmatpush1.bf16.msra.mxu0 0
    %1180 = vmatprep.subr.bf16.mxu0 0
    %1181 = vmatpush1.bf16.msra.mxu0 0
    %1182 = vmatprep.subr.bf16.mxu0 0
    %1183 = vmatpush1.bf16.msra.mxu0 0
    %1184 = vmatprep.subr.bf16.mxu0 0
    %1185 = vmatpush1.bf16.msra.mxu0 0
    %1186 = vmatprep.subr.bf16.mxu0 0
    %1187 = vmatpush1.bf16.msra.mxu0 0
    %1188 = vmatprep.subr.bf16.mxu0 0
    %1189 = vmatpush1.bf16.msra.mxu0 0
    %1190 = vmatprep.subr.bf16.mxu0 0
    %1191 = vmatpush1.bf16.msra.mxu0 0
    %1192 = vmatprep.subr.bf16.mxu0 0
    %1193 = vmatpush1.bf16.msra.mxu0 0
    %1194 = vmatprep.subr.bf16.mxu0 0
    %1195 = vmatpush1.bf16.msra.mxu0 0
    %1196 = vmatprep.mubr.bf16.mxu0 0
    %1197 = vmatmul.mubr.bf16.gmra.mrb[0].mxu0 %v1162
    %v1198 = vpop.f32.mrb[0].mxu0
    %v1199 = vadd.f32 %v359, %v1198
    %v1200 = vpop.f32.mrb[0].mxu0
    %v1201 = vpop.f32.mrb[0].mxu0
    %v1202 = vpop.f32.mrb[0].mxu0
    %1203 = vdwg.mxu0
    %v1204 = vxor.u32 %v1199, 2147483648
    %v1205 = vmul.f32 %v1204, 1.442695
    %v1206 = vpow.pop %v1205
    %v1207 = vadd.f32 %v1206, 1.0
    %v1208 = vrcp.pop %v1207
    %v1209 = vmul.f32 1.0, %v1208
    %1211 = vrot.lane.b32.xlu0 %v1199, 32
    %v1212 = vpop.permute.xlu0 %1211
    %v1214 = vmul.f32 %v1209, %v1212
    %1216 = vrot.lane.b32.xlu0 %v1214, 64
    %v1217 = vpop.permute.xlu0 %1216
    %v1219 = vadd.f32 %v1199, %v1217
    %v1220 = vtanh.pop %v1219
    %v1221 = vsub.f32 1.0, %v1209
    %1223 = vrot.lane.b32.xlu0 %v1220, 96
    %v1224 = vpop.permute.xlu0 %1223
    %v1226 = vmul.f32 %v1221, %v1224
    %v1227 = vmul.f32 %v1209, %v977
    %v1228 = vadd.f32 %v1226, %v1227
    %1230 = vrot.lane.b32.xlu0 %v1228, 96
    %v1231 = vpop.permute.xlu0 %1230
    %v1233 = vsel %vm150, %v1231, %v1051
    %v1234 = vpack.c.bf16 %v1233, %v1233
    %v1236 = vsel %vm471, %v1234, 0
    %1238 = vmatprep.subr.bf16.mxu0 0
    %1239 = vmatpush1.bf16.msra.mxu0 %v463
    %1240 = vmatprep.subr.bf16.mxu0 0
    %1241 = vmatpush1.bf16.msra.mxu0 %v464
    %1242 = vmatprep.subr.bf16.mxu0 0
    %1243 = vmatpush1.bf16.msra.mxu0 %v465
    %1244 = vmatprep.subr.bf16.mxu0 0
    %1245 = vmatpush1.bf16.msra.mxu0 %v466
    %1246 = vmatprep.subr.bf16.mxu0 0
    %1247 = vmatpush1.bf16.msra.mxu0 0
    %1248 = vmatprep.subr.bf16.mxu0 0
    %1249 = vmatpush1.bf16.msra.mxu0 0
    %1250 = vmatprep.subr.bf16.mxu0 0
    %1251 = vmatpush1.bf16.msra.mxu0 0
    %1252 = vmatprep.subr.bf16.mxu0 0
    %1253 = vmatpush1.bf16.msra.mxu0 0
    %1254 = vmatprep.subr.bf16.mxu0 0
    %1255 = vmatpush1.bf16.msra.mxu0 0
    %1256 = vmatprep.subr.bf16.mxu0 0
    %1257 = vmatpush1.bf16.msra.mxu0 0
    %1258 = vmatprep.subr.bf16.mxu0 0
    %1259 = vmatpush1.bf16.msra.mxu0 0
    %1260 = vmatprep.subr.bf16.mxu0 0
    %1261 = vmatpush1.bf16.msra.mxu0 0
    %1262 = vmatprep.subr.bf16.mxu0 0
    %1263 = vmatpush1.bf16.msra.mxu0 0
    %1264 = vmatprep.subr.bf16.mxu0 0
    %1265 = vmatpush1.bf16.msra.mxu0 0
    %1266 = vmatprep.subr.bf16.mxu0 0
    %1267 = vmatpush1.bf16.msra.mxu0 0
    %1268 = vmatprep.subr.bf16.mxu0 0
    %1269 = vmatpush1.bf16.msra.mxu0 0
    %1270 = vmatprep.mubr.bf16.mxu0 0
    %1271 = vmatmul.mubr.bf16.gmra.mrb[0].mxu0 %v1236
    %v1272 = vpop.f32.mrb[0].mxu0
    %v1273 = vadd.f32 %v123, %v1272
    %v1274 = vpop.f32.mrb[0].mxu0
    %v1275 = vpop.f32.mrb[0].mxu0
    %v1276 = vpop.f32.mrb[0].mxu0
    %1277 = vdwg.mxu0
    %v1278 = vxor.u32 %v1273, 2147483648
    %v1279 = vmul.f32 %v1278, 1.442695
    %v1280 = vpow.pop %v1279
    %v1281 = vadd.f32 %v1280, 1.0
    %v1282 = vrcp.pop %v1281
    %v1283 = vmul.f32 1.0, %v1282
    %1285 = vrot.lane.b32.xlu0 %v1273, 32
    %v1286 = vpop.permute.xlu0 %1285
    %v1288 = vmul.f32 %v1283, %v1286
    %1290 = vrot.lane.b32.xlu0 %v1288, 64
    %v1291 = vpop.permute.xlu0 %1290
    %v1293 = vadd.f32 %v1273, %v1291
    %v1294 = vtanh.pop %v1293
    %v1295 = vsub.f32 1.0, %v1283
    %1297 = vrot.lane.b32.xlu0 %v1294, 96
    %v1298 = vpop.permute.xlu0 %1297
    %v1300 = vmul.f32 %v1295, %v1298
    %v1301 = vmul.f32 %v1283, %v1051
    %v1302 = vadd.f32 %v1300, %v1301
    %v1303 = vpack.c.bf16 %v1302, %v1302
    %1305 = vrot.lane.b32.xlu0 %v1303, 96
    %v1306 = vpop.permute.xlu0 %1305
    %v1308 = vsel %vm150, %v1306, 0
    %1310 = vmatprep.subr.bf16.mxu0 0
    %1311 = vmatpush1.bf16.msra.mxu0 %v552
    %1312 = vmatprep.subr.bf16.mxu0 0
    %1313 = vmatpush1.bf16.msra.mxu0 %v553
    %1314 = vmatprep.subr.bf16.mxu0 0
    %1315 = vmatpush1.bf16.msra.mxu0 0
    %1316 = vmatprep.subr.bf16.mxu0 0
    %1317 = vmatpush1.bf16.msra.mxu0 0
    %1318 = vmatprep.subr.bf16.mxu0 0
    %1319 = vmatpush1.bf16.msra.mxu0 0
    %1320 = vmatprep.subr.bf16.mxu0 0
    %1321 = vmatpush1.bf16.msra.mxu0 0
    %1322 = vmatprep.subr.bf16.mxu0 0
    %1323 = vmatpush1.bf16.msra.mxu0 0
    %1324 = vmatprep.subr.bf16.mxu0 0
    %1325 = vmatpush1.bf16.msra.mxu0 0
    %1326 = vmatprep.subr.bf16.mxu0 0
    %1327 = vmatpush1.bf16.msra.mxu0 0
    %1328 = vmatprep.subr.bf16.mxu0 0
    %1329 = vmatpush1.bf16.msra.mxu0 0
    %1330 = vmatprep.subr.bf16.mxu0 0
    %1331 = vmatpush1.bf16.msra.mxu0 0
    %1332 = vmatprep.subr.bf16.mxu0 0
    %1333 = vmatpush1.bf16.msra.mxu0 0
    %1334 = vmatprep.subr.bf16.mxu0 0
    %1335 = vmatpush1.bf16.msra.mxu0 0
    %1336 = vmatprep.subr.bf16.mxu0 0
    %1337 = vmatpush1.bf16.msra.mxu0 0
    %1338 = vmatprep.subr.bf16.mxu0 0
    %1339 = vmatpush1.bf16.msra.mxu0 0
    %1340 = vmatprep.subr.bf16.mxu0 0
    %1341 = vmatpush1.bf16.msra.mxu0 0
    %1342 = vmatprep.mubr.bf16.mxu0 0
    %1343 = vmatmul.mubr.bf16.gmra.mrb[0].mxu0 %v1308
    %v1344 = vpop.f32.mrb[0].mxu0
    %v1345 = vadd.f32 %v128, %v1344
    %v1346 = vpop.f32.mrb[0].mxu0
    %v1347 = vpop.f32.mrb[0].mxu0
    %v1348 = vpop.f32.mrb[0].mxu0
    %1349 = vdwg.mxu0
    %v1350 = vsel %vm599, %v1345, -inf
    %1351 = vmax.xlane.f32.xlu0 %v1350
    %v1352 = vpop.xlane.xlu0 %1351
    %v1353 = vsub.f32 %v1345, %v1352
    %v1354 = vmul.f32 %v1353, 1.442695
    %v1355 = vpow.pop %v1354
    %v1356 = vsel %vm599, %v1355, 0.0
    %1357 = vadd.xlane.f32.xlu0 %v1356
    %v1358 = vpop.xlane.xlu0 %1357
    %v1359 = vlog2.pop %v1358
    %v1360 = vmul.f32 %v1359, 0.6931472
    %v1361 = vadd.f32 %v1352, %v1360
    %v1362 = vsub.f32 %v1345, %v1361
    %v1363 = vstv %s1156
    %v1364 = vmul.f32 %v1362, %v1363
    %s1365 = sld [smem:[#allocation3 + $0x3]]
    %p1366 = scmp.eq.s32.totalorder %s1365, 1
    // Predicated region
    $region86: #{tpu_custom_call.1} parent=1 // pred_check
      %p1367 = pneg %p1366
    $region87: #{tpu_custom_call.1} parent=1 // pred_check_branch
      %1369 = sbr.rel (%p1367) target = $region89
    $region88: #{tpu_custom_call.1} parent=1 // pred_region
      _
    $region89: #{tpu_custom_call.1} parent=1 // pred_fallthru
      _
    %p1370 = pneg %p1366
    // Predicated region
    $region90: #{tpu_custom_call.1} parent=1 // pred_check
      _
    $region91: #{tpu_custom_call.1} parent=1 // pred_check_branch
      %1372 = sbr.rel (%p1366) target = $region93
    $region92: #{tpu_custom_call.1} parent=1 // pred_region
      %v1373 = vlaneseq
      %v1374 = vand.u32 %v1373, 127
      %vm1375 = vcmp.ge.f32.partialorder %v1345, %v1352
      %v1376 = vsel %vm1375, %v1374, 128
      %v1377 = vsel %vm599, %v1376, 2147483647
      %v1378 = vand.u32 %v1377, 65535
      %v1379 = vshra.s32 %v1377, 16
      %v1380 = vcvt.s32.f32 %v1378
      %v1381 = vcvt.s32.f32 %v1379
      %1382 = vmin.xlane.f32.xlu0 %v1381
      %v1383 = vpop.xlane.xlu0 %1382
      %vm1384 = vcmp.eq.f32.partialorder %v1381, %v1383
      %v1385 = vsel %vm1384, %v1380, inf
      %1386 = vmin.xlane.f32.xlu0 %v1385
      %v1387 = vpop.xlane.xlu0 %1386
      %v1388 = vcvt.f32.s32 %v1387
      %v1389 = vcvt.f32.s32 %v1383
      %v1390 = vshll.u32 %v1389, 16
      %v1391 = vadd.s32 %v1390, %v1388
      %v1392 = vrot.slane %v1391, 4
      %vm1393 = vcmp.lt.s32.totalorder %v1391, %v1392
      %v1394 = vsel %vm1393, %v1391, %v1392
      %v1395 = vrot.slane %v1394, 2
      %vm1396 = vcmp.lt.s32.totalorder %v1394, %v1395
      %v1397 = vsel %vm1396, %v1394, %v1395
      %v1398 = vrot.slane %v1397, 1
      %vm1399 = vcmp.lt.s32.totalorder %v1397, %v1398
      %v1400 = vsel %vm1399, %v1397, %v1398
      %s1401 = vtos %v1400
      %p1402 = scmp.eq.s32.totalorder %s1401, 1
      %s1403 = scalar_select %p1402, 1, 0
    $region93: #{tpu_custom_call.1} parent=1 // pred_fallthru
      %s1404 = sphi 0, %s1403
    %s1405 = scvt.s32.f32 %s1404
    %s1406 = ssub.f32 1.0, %s1405
    %s1407 = smul.f32 %s1156, %s1406
    %v1408 = vpack.c.bf16 %v1228, %v1228
    %1410 = vrot.lane.b32.xlu0 %v1408, 96
    %v1411 = vpop.permute.xlu0 %1410
    %v1413 = vsel %vm150, %v1411, 0
    %1415 = vmatprep.subr.bf16.mxu0 0
    %1416 = vmatpush1.bf16.msra.mxu0 %v372
    %1417 = vmatprep.subr.bf16.mxu0 0
    %1418 = vmatpush1.bf16.msra.mxu0 %v373
    %1419 = vmatprep.subr.bf16.mxu0 0
    %1420 = vmatpush1.bf16.msra.mxu0 0
    %1421 = vmatprep.subr.bf16.mxu0 0
    %1422 = vmatpush1.bf16.msra.mxu0 0
    %1423 = vmatprep.subr.bf16.mxu0 0
    %1424 = vmatpush1.bf16.msra.mxu0 0
    %1425 = vmatprep.subr.bf16.mxu0 0
    %1426 = vmatpush1.bf16.msra.mxu0 0
    %1427 = vmatprep.subr.bf16.mxu0 0
    %1428 = vmatpush1.bf16.msra.mxu0 0
    %1429 = vmatprep.subr.bf16.mxu0 0
    %1430 = vmatpush1.bf16.msra.mxu0 0
    %1431 = vmatprep.subr.bf16.mxu0 0
    %1432 = vmatpush1.bf16.msra.mxu0 0
    %1433 = vmatprep.subr.bf16.mxu0 0
    %1434 = vmatpush1.bf16.msra.mxu0 0
    %1435 = vmatprep.subr.bf16.mxu0 0
    %1436 = vmatpush1.bf16.msra.mxu0 0
    %1437 = vmatprep.subr.bf16.mxu0 0
    %1438 = vmatpush1.bf16.msra.mxu0 0
    %1439 = vmatprep.subr.bf16.mxu0 0
    %1440 = vmatpush1.bf16.msra.mxu0 0
    %1441 = vmatprep.subr.bf16.mxu0 0
    %1442 = vmatpush1.bf16.msra.mxu0 0
    %1443 = vmatprep.subr.bf16.mxu0 0
    %1444 = vmatpush1.bf16.msra.mxu0 0
    %1445 = vmatprep.subr.bf16.mxu0 0
    %1446 = vmatpush1.bf16.msra.mxu0 0
    %1447 = vmatprep.mubr.bf16.mxu0 0
    %1448 = vmatmul.mubr.bf16.gmra.mrb[0].mxu0 %v1413
    %v1449 = vpop.f32.mrb[0].mxu0
    %v1450 = vadd.f32 %v359, %v1449
    %v1451 = vpop.f32.mrb[0].mxu0
    %v1452 = vpop.f32.mrb[0].mxu0
    %v1453 = vpop.f32.mrb[0].mxu0
    %1454 = vdwg.mxu0
    %v1455 = vxor.u32 %v1450, 2147483648
    %v1456 = vmul.f32 %v1455, 1.442695
    %v1457 = vpow.pop %v1456
    %v1458 = vadd.f32 %v1457, 1.0
    %v1459 = vrcp.pop %v1458
    %v1460 = vmul.f32 1.0, %v1459
    %1462 = vrot.lane.b32.xlu0 %v1450, 32
    %v1463 = vpop.permute.xlu0 %1462
    %v1465 = vmul.f32 %v1460, %v1463
    %1467 = vrot.lane.b32.xlu0 %v1465, 64
    %v1468 = vpop.permute.xlu0 %1467
    %v1470 = vadd.f32 %v1450, %v1468
    %v1471 = vtanh.pop %v1470
    %v1472 = vsub.f32 1.0, %v1460
    %1474 = vrot.lane.b32.xlu0 %v1471, 96
    %v1475 = vpop.permute.xlu0 %1474
    %v1477 = vmul.f32 %v1472, %v1475
    %v1478 = vmul.f32 %v1460, %v1228
    %v1479 = vadd.f32 %v1477, %v1478
    %1481 = vrot.lane.b32.xlu0 %v1479, 96
    %v1482 = vpop.permute.xlu0 %1481
    %v1484 = vsel %vm150, %v1482, %v1302
    %v1485 = vpack.c.bf16 %v1484, %v1484
    %v1487 = vsel %vm471, %v1485, 0
    %1489 = vmatprep.subr.bf16.mxu0 0
    %1490 = vmatpush1.bf16.msra.mxu0 %v463
    %1491 = vmatprep.subr.bf16.mxu0 0
    %1492 = vmatpush1.bf16.msra.mxu0 %v464
    %1493 = vmatprep.subr.bf16.mxu0 0
    %1494 = vmatpush1.bf16.msra.mxu0 %v465
    %1495 = vmatprep.subr.bf16.mxu0 0
    %1496 = vmatpush1.bf16.msra.mxu0 %v466
    %1497 = vmatprep.subr.bf16.mxu0 0
    %1498 = vmatpush1.bf16.msra.mxu0 0
    %1499 = vmatprep.subr.bf16.mxu0 0
    %1500 = vmatpush1.bf16.msra.mxu0 0
    %1501 = vmatprep.subr.bf16.mxu0 0
    %1502 = vmatpush1.bf16.msra.mxu0 0
    %1503 = vmatprep.subr.bf16.mxu0 0
    %1504 = vmatpush1.bf16.msra.mxu0 0
    %1505 = vmatprep.subr.bf16.mxu0 0
    %1506 = vmatpush1.bf16.msra.mxu0 0
    %1507 = vmatprep.subr.bf16.mxu0 0
    %1508 = vmatpush1.bf16.msra.mxu0 0
    %1509 = vmatprep.subr.bf16.mxu0 0
    %1510 = vmatpush1.bf16.msra.mxu0 0
    %1511 = vmatprep.subr.bf16.mxu0 0
    %1512 = vmatpush1.bf16.msra.mxu0 0
    %1513 = vmatprep.subr.bf16.mxu0 0
    %1514 = vmatpush1.bf16.msra.mxu0 0
    %1515 = vmatprep.subr.bf16.mxu0 0
    %1516 = vmatpush1.bf16.msra.mxu0 0
    %1517 = vmatprep.subr.bf16.mxu0 0
    %1518 = vmatpush1.bf16.msra.mxu0 0
    %1519 = vmatprep.subr.bf16.mxu0 0
    %1520 = vmatpush1.bf16.msra.mxu0 0
    %1521 = vmatprep.mubr.bf16.mxu0 0
    %1522 = vmatmul.mubr.bf16.gmra.mrb[0].mxu0 %v1487
    %v1523 = vpop.f32.mrb[0].mxu0
    %v1524 = vadd.f32 %v123, %v1523
    %v1525 = vpop.f32.mrb[0].mxu0
    %v1526 = vpop.f32.mrb[0].mxu0
    %v1527 = vpop.f32.mrb[0].mxu0
    %1528 = vdwg.mxu0
    %v1529 = vxor.u32 %v1524, 2147483648
    %v1530 = vmul.f32 %v1529, 1.442695
    %v1531 = vpow.pop %v1530
    %v1532 = vadd.f32 %v1531, 1.0
    %v1533 = vrcp.pop %v1532
    %v1534 = vmul.f32 1.0, %v1533
    %1536 = vrot.lane.b32.xlu0 %v1524, 32
    %v1537 = vpop.permute.xlu0 %1536
    %v1539 = vmul.f32 %v1534, %v1537
    %1541 = vrot.lane.b32.xlu0 %v1539, 64
    %v1542 = vpop.permute.xlu0 %1541
    %v1544 = vadd.f32 %v1524, %v1542
    %v1545 = vtanh.pop %v1544
    %v1546 = vsub.f32 1.0, %v1534
    %1548 = vrot.lane.b32.xlu0 %v1545, 96
    %v1549 = vpop.permute.xlu0 %1548
    %v1551 = vmul.f32 %v1546, %v1549
    %v1552 = vmul.f32 %v1534, %v1302
    %v1553 = vadd.f32 %v1551, %v1552
    %v1554 = vpack.c.bf16 %v1553, %v1553
    %1556 = vrot.lane.b32.xlu0 %v1554, 96
    %v1557 = vpop.permute.xlu0 %1556
    %v1559 = vsel %vm150, %v1557, 0
    %1561 = vmatprep.subr.bf16.mxu0 0
    %1562 = vmatpush1.bf16.msra.mxu0 %v552
    %1563 = vmatprep.subr.bf16.mxu0 0
    %1564 = vmatpush1.bf16.msra.mxu0 %v553
    %1565 = vmatprep.subr.bf16.mxu0 0
    %1566 = vmatpush1.bf16.msra.mxu0 0
    %1567 = vmatprep.subr.bf16.mxu0 0
    %1568 = vmatpush1.bf16.msra.mxu0 0
    %1569 = vmatprep.subr.bf16.mxu0 0
    %1570 = vmatpush1.bf16.msra.mxu0 0
    %1571 = vmatprep.subr.bf16.mxu0 0
    %1572 = vmatpush1.bf16.msra.mxu0 0
    %1573 = vmatprep.subr.bf16.mxu0 0
    %1574 = vmatpush1.bf16.msra.mxu0 0
    %1575 = vmatprep.subr.bf16.mxu0 0
    %1576 = vmatpush1.bf16.msra.mxu0 0
    %1577 = vmatprep.subr.bf16.mxu0 0
    %1578 = vmatpush1.bf16.msra.mxu0 0
    %1579 = vmatprep.subr.bf16.mxu0 0
    %1580 = vmatpush1.bf16.msra.mxu0 0
    %1581 = vmatprep.subr.bf16.mxu0 0
    %1582 = vmatpush1.bf16.msra.mxu0 0
    %1583 = vmatprep.subr.bf16.mxu0 0
    %1584 = vmatpush1.bf16.msra.mxu0 0
    %1585 = vmatprep.subr.bf16.mxu0 0
    %1586 = vmatpush1.bf16.msra.mxu0 0
    %1587 = vmatprep.subr.bf16.mxu0 0
    %1588 = vmatpush1.bf16.msra.mxu0 0
    %1589 = vmatprep.subr.bf16.mxu0 0
    %1590 = vmatpush1.bf16.msra.mxu0 0
    %1591 = vmatprep.subr.bf16.mxu0 0
    %1592 = vmatpush1.bf16.msra.mxu0 0
    %1593 = vmatprep.mubr.bf16.mxu0 0
    %1594 = vmatmul.mubr.bf16.gmra.mrb[0].mxu0 %v1559
    %v1595 = vpop.f32.mrb[0].mxu0
    %v1596 = vadd.f32 %v128, %v1595
    %v1597 = vpop.f32.mrb[0].mxu0
    %v1598 = vpop.f32.mrb[0].mxu0
    %v1599 = vpop.f32.mrb[0].mxu0
    %1600 = vdwg.mxu0
    %v1601 = vsel %vm599, %v1596, -inf
    %1602 = vmax.xlane.f32.xlu0 %v1601
    %v1603 = vpop.xlane.xlu0 %1602
    %v1604 = vsub.f32 %v1596, %v1603
    %v1605 = vmul.f32 %v1604, 1.442695
    %v1606 = vpow.pop %v1605
    %v1607 = vsel %vm599, %v1606, 0.0
    %1608 = vadd.xlane.f32.xlu0 %v1607
    %v1609 = vpop.xlane.xlu0 %1608
    %v1610 = vlog2.pop %v1609
    %v1611 = vmul.f32 %v1610, 0.6931472
    %v1612 = vadd.f32 %v1603, %v1611
    %v1613 = vsub.f32 %v1596, %v1612
    %v1614 = vstv %s1407
    %v1615 = vmul.f32 %v1613, %v1614
    %s1616 = sld [smem:[#allocation3 + $0x4]]
    %p1617 = scmp.eq.s32.totalorder %s1616, 1
    // Predicated region
    $region94: #{tpu_custom_call.1} parent=1 // pred_check
      %p1618 = pneg %p1617
    $region95: #{tpu_custom_call.1} parent=1 // pred_check_branch
      %1620 = sbr.rel (%p1618) target = $region97
    $region96: #{tpu_custom_call.1} parent=1 // pred_region
      _
    $region97: #{tpu_custom_call.1} parent=1 // pred_fallthru
      _
    %p1621 = pneg %p1617
    // Predicated region
    $region98: #{tpu_custom_call.1} parent=1 // pred_check
      _
    $region99: #{tpu_custom_call.1} parent=1 // pred_check_branch
      %1623 = sbr.rel (%p1617) target = $region101
    $region100: #{tpu_custom_call.1} parent=1 // pred_region
      %v1624 = vlaneseq
      %v1625 = vand.u32 %v1624, 127
      %vm1626 = vcmp.ge.f32.partialorder %v1596, %v1603
      %v1627 = vsel %vm1626, %v1625, 128
      %v1628 = vsel %vm599, %v1627, 2147483647
      %v1629 = vand.u32 %v1628, 65535
      %v1630 = vshra.s32 %v1628, 16
      %v1631 = vcvt.s32.f32 %v1629
      %v1632 = vcvt.s32.f32 %v1630
      %1633 = vmin.xlane.f32.xlu0 %v1632
      %v1634 = vpop.xlane.xlu0 %1633
      %vm1635 = vcmp.eq.f32.partialorder %v1632, %v1634
      %v1636 = vsel %vm1635, %v1631, inf
      %1637 = vmin.xlane.f32.xlu0 %v1636
      %v1638 = vpop.xlane.xlu0 %1637
      %v1639 = vcvt.f32.s32 %v1638
      %v1640 = vcvt.f32.s32 %v1634
      %v1641 = vshll.u32 %v1640, 16
      %v1642 = vadd.s32 %v1641, %v1639
      %v1643 = vrot.slane %v1642, 4
      %vm1644 = vcmp.lt.s32.totalorder %v1642, %v1643
      %v1645 = vsel %vm1644, %v1642, %v1643
      %v1646 = vrot.slane %v1645, 2
      %vm1647 = vcmp.lt.s32.totalorder %v1645, %v1646
      %v1648 = vsel %vm1647, %v1645, %v1646
      %v1649 = vrot.slane %v1648, 1
      %vm1650 = vcmp.lt.s32.totalorder %v1648, %v1649
      %v1651 = vsel %vm1650, %v1648, %v1649
      %s1652 = vtos %v1651
      %p1653 = scmp.eq.s32.totalorder %s1652, 1
      %s1654 = scalar_select %p1653, 1, 0
    $region101: #{tpu_custom_call.1} parent=1 // pred_fallthru
      %s1655 = sphi 0, %s1654
    %s1656 = scvt.s32.f32 %s1655
    %s1657 = ssub.f32 1.0, %s1656
    %s1658 = smul.f32 %s1407, %s1657
    %v1659 = vpack.c.bf16 %v1479, %v1479
    %1661 = vrot.lane.b32.xlu0 %v1659, 96
    %v1662 = vpop.permute.xlu0 %1661
    %v1664 = vsel %vm150, %v1662, 0
    %1666 = vmatprep.subr.bf16.mxu0 0
    %1667 = vmatpush1.bf16.msra.mxu0 %v372
    %1668 = vmatprep.subr.bf16.mxu0 0
    %1669 = vmatpush1.bf16.msra.mxu0 %v373
    %1670 = vmatprep.subr.bf16.mxu0 0
    %1671 = vmatpush1.bf16.msra.mxu0 0
    %1672 = vmatprep.subr.bf16.mxu0 0
    %1673 = vmatpush1.bf16.msra.mxu0 0
    %1674 = vmatprep.subr.bf16.mxu0 0
    %1675 = vmatpush1.bf16.msra.mxu0 0
    %1676 = vmatprep.subr.bf16.mxu0 0
    %1677 = vmatpush1.bf16.msra.mxu0 0
    %1678 = vmatprep.subr.bf16.mxu0 0
    %1679 = vmatpush1.bf16.msra.mxu0 0
    %1680 = vmatprep.subr.bf16.mxu0 0
    %1681 = vmatpush1.bf16.msra.mxu0 0
    %1682 = vmatprep.subr.bf16.mxu0 0
    %1683 = vmatpush1.bf16.msra.mxu0 0
    %1684 = vmatprep.subr.bf16.mxu0 0
    %1685 = vmatpush1.bf16.msra.mxu0 0
    %1686 = vmatprep.subr.bf16.mxu0 0
    %1687 = vmatpush1.bf16.msra.mxu0 0
    %1688 = vmatprep.subr.bf16.mxu0 0
    %1689 = vmatpush1.bf16.msra.mxu0 0
    %1690 = vmatprep.subr.bf16.mxu0 0
    %1691 = vmatpush1.bf16.msra.mxu0 0
    %1692 = vmatprep.subr.bf16.mxu0 0
    %1693 = vmatpush1.bf16.msra.mxu0 0
    %1694 = vmatprep.subr.bf16.mxu0 0
    %1695 = vmatpush1.bf16.msra.mxu0 0
    %1696 = vmatprep.subr.bf16.mxu0 0
    %1697 = vmatpush1.bf16.msra.mxu0 0
    %1698 = vmatprep.mubr.bf16.mxu0 0
    %1699 = vmatmul.mubr.bf16.gmra.mrb[0].mxu0 %v1664
    %v1700 = vpop.f32.mrb[0].mxu0
    %v1701 = vadd.f32 %v359, %v1700
    %v1702 = vpop.f32.mrb[0].mxu0
    %v1703 = vpop.f32.mrb[0].mxu0
    %v1704 = vpop.f32.mrb[0].mxu0
    %1705 = vdwg.mxu0
    %v1706 = vxor.u32 %v1701, 2147483648
    %v1707 = vmul.f32 %v1706, 1.442695
    %v1708 = vpow.pop %v1707
    %v1709 = vadd.f32 %v1708, 1.0
    %v1710 = vrcp.pop %v1709
    %v1711 = vmul.f32 1.0, %v1710
    %1713 = vrot.lane.b32.xlu0 %v1701, 32
    %v1714 = vpop.permute.xlu0 %1713
    %v1716 = vmul.f32 %v1711, %v1714
    %1718 = vrot.lane.b32.xlu0 %v1716, 64
    %v1719 = vpop.permute.xlu0 %1718
    %v1721 = vadd.f32 %v1701, %v1719
    %v1722 = vtanh.pop %v1721
    %v1723 = vsub.f32 1.0, %v1711
    %1725 = vrot.lane.b32.xlu0 %v1722, 96
    %v1726 = vpop.permute.xlu0 %1725
    %v1728 = vmul.f32 %v1723, %v1726
    %v1729 = vmul.f32 %v1711, %v1479
    %v1730 = vadd.f32 %v1728, %v1729
    %1732 = vrot.lane.b32.xlu0 %v1730, 96
    %v1733 = vpop.permute.xlu0 %1732
    %v1735 = vsel %vm150, %v1733, %v1553
    %v1736 = vpack.c.bf16 %v1735, %v1735
    %v1738 = vsel %vm471, %v1736, 0
    %1740 = vmatprep.subr.bf16.mxu0 0
    %1741 = vmatpush1.bf16.msra.mxu0 %v463
    %1742 = vmatprep.subr.bf16.mxu0 0
    %1743 = vmatpush1.bf16.msra.mxu0 %v464
    %1744 = vmatprep.subr.bf16.mxu0 0
    %1745 = vmatpush1.bf16.msra.mxu0 %v465
    %1746 = vmatprep.subr.bf16.mxu0 0
    %1747 = vmatpush1.bf16.msra.mxu0 %v466
    %1748 = vmatprep.subr.bf16.mxu0 0
    %1749 = vmatpush1.bf16.msra.mxu0 0
    %1750 = vmatprep.subr.bf16.mxu0 0
    %1751 = vmatpush1.bf16.msra.mxu0 0
    %1752 = vmatprep.subr.bf16.mxu0 0
    %1753 = vmatpush1.bf16.msra.mxu0 0
    %1754 = vmatprep.subr.bf16.mxu0 0
    %1755 = vmatpush1.bf16.msra.mxu0 0
    %1756 = vmatprep.subr.bf16.mxu0 0
    %1757 = vmatpush1.bf16.msra.mxu0 0
    %1758 = vmatprep.subr.bf16.mxu0 0
    %1759 = vmatpush1.bf16.msra.mxu0 0
    %1760 = vmatprep.subr.bf16.mxu0 0
    %1761 = vmatpush1.bf16.msra.mxu0 0
    %1762 = vmatprep.subr.bf16.mxu0 0
    %1763 = vmatpush1.bf16.msra.mxu0 0
    %1764 = vmatprep.subr.bf16.mxu0 0
    %1765 = vmatpush1.bf16.msra.mxu0 0
    %1766 = vmatprep.subr.bf16.mxu0 0
    %1767 = vmatpush1.bf16.msra.mxu0 0
    %1768 = vmatprep.subr.bf16.mxu0 0
    %1769 = vmatpush1.bf16.msra.mxu0 0
    %1770 = vmatprep.subr.bf16.mxu0 0
    %1771 = vmatpush1.bf16.msra.mxu0 0
    %1772 = vmatprep.mubr.bf16.mxu0 0
    %1773 = vmatmul.mubr.bf16.gmra.mrb[0].mxu0 %v1738
    %v1774 = vpop.f32.mrb[0].mxu0
    %v1775 = vadd.f32 %v123, %v1774
    %v1776 = vpop.f32.mrb[0].mxu0
    %v1777 = vpop.f32.mrb[0].mxu0
    %v1778 = vpop.f32.mrb[0].mxu0
    %1779 = vdwg.mxu0
    %v1780 = vxor.u32 %v1775, 2147483648
    %v1781 = vmul.f32 %v1780, 1.442695
    %v1782 = vpow.pop %v1781
    %v1783 = vadd.f32 %v1782, 1.0
    %v1784 = vrcp.pop %v1783
    %v1785 = vmul.f32 1.0, %v1784
    %1787 = vrot.lane.b32.xlu0 %v1775, 32
    %v1788 = vpop.permute.xlu0 %1787
    %v1790 = vmul.f32 %v1785, %v1788
    %1792 = vrot.lane.b32.xlu0 %v1790, 64
    %v1793 = vpop.permute.xlu0 %1792
    %v1795 = vadd.f32 %v1775, %v1793
    %v1796 = vtanh.pop %v1795
    %v1797 = vsub.f32 1.0, %v1785
    %1799 = vrot.lane.b32.xlu0 %v1796, 96
    %v1800 = vpop.permute.xlu0 %1799
    %v1802 = vmul.f32 %v1797, %v1800
    %v1803 = vmul.f32 %v1785, %v1553
    %v1804 = vadd.f32 %v1802, %v1803
    %v1805 = vpack.c.bf16 %v1804, %v1804
    %1807 = vrot.lane.b32.xlu0 %v1805, 96
    %v1808 = vpop.permute.xlu0 %1807
    %v1810 = vsel %vm150, %v1808, 0
    %1812 = vmatprep.subr.bf16.mxu0 0
    %1813 = vmatpush1.bf16.msra.mxu0 %v552
    %1814 = vmatprep.subr.bf16.mxu0 0
    %1815 = vmatpush1.bf16.msra.mxu0 %v553
    %1816 = vmatprep.subr.bf16.mxu0 0
    %1817 = vmatpush1.bf16.msra.mxu0 0
    %1818 = vmatprep.subr.bf16.mxu0 0
    %1819 = vmatpush1.bf16.msra.mxu0 0
    %1820 = vmatprep.subr.bf16.mxu0 0
    %1821 = vmatpush1.bf16.msra.mxu0 0
    %1822 = vmatprep.subr.bf16.mxu0 0
    %1823 = vmatpush1.bf16.msra.mxu0 0
    %1824 = vmatprep.subr.bf16.mxu0 0
    %1825 = vmatpush1.bf16.msra.mxu0 0
    %1826 = vmatprep.subr.bf16.mxu0 0
    %1827 = vmatpush1.bf16.msra.mxu0 0
    %1828 = vmatprep.subr.bf16.mxu0 0
    %1829 = vmatpush1.bf16.msra.mxu0 0
    %1830 = vmatprep.subr.bf16.mxu0 0
    %1831 = vmatpush1.bf16.msra.mxu0 0
    %1832 = vmatprep.subr.bf16.mxu0 0
    %1833 = vmatpush1.bf16.msra.mxu0 0
    %1834 = vmatprep.subr.bf16.mxu0 0
    %1835 = vmatpush1.bf16.msra.mxu0 0
    %1836 = vmatprep.subr.bf16.mxu0 0
    %1837 = vmatpush1.bf16.msra.mxu0 0
    %1838 = vmatprep.subr.bf16.mxu0 0
    %1839 = vmatpush1.bf16.msra.mxu0 0
    %1840 = vmatprep.subr.bf16.mxu0 0
    %1841 = vmatpush1.bf16.msra.mxu0 0
    %1842 = vmatprep.subr.bf16.mxu0 0
    %1843 = vmatpush1.bf16.msra.mxu0 0
    %1844 = vmatprep.mubr.bf16.mxu0 0
    %1845 = vmatmul.mubr.bf16.gmra.mrb[0].mxu0 %v1810
    %v1846 = vpop.f32.mrb[0].mxu0
    %v1847 = vadd.f32 %v128, %v1846
    %v1848 = vpop.f32.mrb[0].mxu0
    %v1849 = vpop.f32.mrb[0].mxu0
    %v1850 = vpop.f32.mrb[0].mxu0
    %1851 = vdwg.mxu0
    %v1852 = vsel %vm599, %v1847, -inf
    %1853 = vmax.xlane.f32.xlu0 %v1852
    %v1854 = vpop.xlane.xlu0 %1853
    %v1855 = vsub.f32 %v1847, %v1854
    %v1856 = vmul.f32 %v1855, 1.442695
    %v1857 = vpow.pop %v1856
    %v1858 = vsel %vm599, %v1857, 0.0
    %1859 = vadd.xlane.f32.xlu0 %v1858
    %v1860 = vpop.xlane.xlu0 %1859
    %v1861 = vlog2.pop %v1860
    %v1862 = vmul.f32 %v1861, 0.6931472
    %v1863 = vadd.f32 %v1854, %v1862
    %v1864 = vsub.f32 %v1847, %v1863
    %v1865 = vstv %s1658
    %v1866 = vmul.f32 %v1864, %v1865
    %s1867 = sld [smem:[#allocation3 + $0x5]]
    %p1868 = scmp.eq.s32.totalorder %s1867, 1
    // Predicated region
    $region102: #{tpu_custom_call.1} parent=1 // pred_check
      %p1869 = pneg %p1868
    $region103: #{tpu_custom_call.1} parent=1 // pred_check_branch
      %1871 = sbr.rel (%p1869) target = $region105
    $region104: #{tpu_custom_call.1} parent=1 // pred_region
      _
    $region105: #{tpu_custom_call.1} parent=1 // pred_fallthru
      _
    %p1872 = pneg %p1868
    // Predicated region
    $region106: #{tpu_custom_call.1} parent=1 // pred_check
      _
    $region107: #{tpu_custom_call.1} parent=1 // pred_check_branch
      %1874 = sbr.rel (%p1868) target = $region109
    $region108: #{tpu_custom_call.1} parent=1 // pred_region
      %v1875 = vlaneseq
      %v1876 = vand.u32 %v1875, 127
      %vm1877 = vcmp.ge.f32.partialorder %v1847, %v1854
      %v1878 = vsel %vm1877, %v1876, 128
      %v1879 = vsel %vm599, %v1878, 2147483647
      %v1880 = vand.u32 %v1879, 65535
      %v1881 = vshra.s32 %v1879, 16
      %v1882 = vcvt.s32.f32 %v1880
      %v1883 = vcvt.s32.f32 %v1881
      %1884 = vmin.xlane.f32.xlu0 %v1883
      %v1885 = vpop.xlane.xlu0 %1884
      %vm1886 = vcmp.eq.f32.partialorder %v1883, %v1885
      %v1887 = vsel %vm1886, %v1882, inf
      %1888 = vmin.xlane.f32.xlu0 %v1887
      %v1889 = vpop.xlane.xlu0 %1888
      %v1890 = vcvt.f32.s32 %v1889
      %v1891 = vcvt.f32.s32 %v1885
      %v1892 = vshll.u32 %v1891, 16
      %v1893 = vadd.s32 %v1892, %v1890
      %v1894 = vrot.slane %v1893, 4
      %vm1895 = vcmp.lt.s32.totalorder %v1893, %v1894
      %v1896 = vsel %vm1895, %v1893, %v1894
      %v1897 = vrot.slane %v1896, 2
      %vm1898 = vcmp.lt.s32.totalorder %v1896, %v1897
      %v1899 = vsel %vm1898, %v1896, %v1897
      %v1900 = vrot.slane %v1899, 1
      %vm1901 = vcmp.lt.s32.totalorder %v1899, %v1900
      %v1902 = vsel %vm1901, %v1899, %v1900
      %s1903 = vtos %v1902
      %p1904 = scmp.eq.s32.totalorder %s1903, 1
      %s1905 = scalar_select %p1904, 1, 0
    $region109: #{tpu_custom_call.1} parent=1 // pred_fallthru
      %s1906 = sphi 0, %s1905
    %s1907 = scvt.s32.f32 %s1906
    %s1908 = ssub.f32 1.0, %s1907
    %s1909 = smul.f32 %s1658, %s1908
    %v1910 = vpack.c.bf16 %v1730, %v1730
    %1912 = vrot.lane.b32.xlu0 %v1910, 96
    %v1913 = vpop.permute.xlu0 %1912
    %v1915 = vsel %vm150, %v1913, 0
    %1917 = vmatprep.subr.bf16.mxu0 0
    %1918 = vmatpush1.bf16.msra.mxu0 %v372
    %1919 = vmatprep.subr.bf16.mxu0 0
    %1920 = vmatpush1.bf16.msra.mxu0 %v373
    %1921 = vmatprep.subr.bf16.mxu0 0
    %1922 = vmatpush1.bf16.msra.mxu0 0
    %1923 = vmatprep.subr.bf16.mxu0 0
    %1924 = vmatpush1.bf16.msra.mxu0 0
    %1925 = vmatprep.subr.bf16.mxu0 0
    %1926 = vmatpush1.bf16.msra.mxu0 0
    %1927 = vmatprep.subr.bf16.mxu0 0
    %1928 = vmatpush1.bf16.msra.mxu0 0
    %1929 = vmatprep.subr.bf16.mxu0 0
    %1930 = vmatpush1.bf16.msra.mxu0 0
    %1931 = vmatprep.subr.bf16.mxu0 0
    %1932 = vmatpush1.bf16.msra.mxu0 0
    %1933 = vmatprep.subr.bf16.mxu0 0
    %1934 = vmatpush1.bf16.msra.mxu0 0
    %1935 = vmatprep.subr.bf16.mxu0 0
    %1936 = vmatpush1.bf16.msra.mxu0 0
    %1937 = vmatprep.subr.bf16.mxu0 0
    %1938 = vmatpush1.bf16.msra.mxu0 0
    %1939 = vmatprep.subr.bf16.mxu0 0
    %1940 = vmatpush1.bf16.msra.mxu0 0
    %1941 = vmatprep.subr.bf16.mxu0 0
    %1942 = vmatpush1.bf16.msra.mxu0 0
    %1943 = vmatprep.subr.bf16.mxu0 0
    %1944 = vmatpush1.bf16.msra.mxu0 0
    %1945 = vmatprep.subr.bf16.mxu0 0
    %1946 = vmatpush1.bf16.msra.mxu0 0
    %1947 = vmatprep.subr.bf16.mxu0 0
    %1948 = vmatpush1.bf16.msra.mxu0 0
    %1949 = vmatprep.mubr.bf16.mxu0 0
    %1950 = vmatmul.mubr.bf16.gmra.mrb[0].mxu0 %v1915
    %v1951 = vpop.f32.mrb[0].mxu0
    %v1952 = vadd.f32 %v359, %v1951
    %v1953 = vpop.f32.mrb[0].mxu0
    %v1954 = vpop.f32.mrb[0].mxu0
    %v1955 = vpop.f32.mrb[0].mxu0
    %1956 = vdwg.mxu0
    %v1957 = vxor.u32 %v1952, 2147483648
    %v1958 = vmul.f32 %v1957, 1.442695
    %v1959 = vpow.pop %v1958
    %v1960 = vadd.f32 %v1959, 1.0
    %v1961 = vrcp.pop %v1960
    %v1962 = vmul.f32 1.0, %v1961
    %1964 = vrot.lane.b32.xlu0 %v1952, 32
    %v1965 = vpop.permute.xlu0 %1964
    %v1967 = vmul.f32 %v1962, %v1965
    %1969 = vrot.lane.b32.xlu0 %v1967, 64
    %v1970 = vpop.permute.xlu0 %1969
    %v1972 = vadd.f32 %v1952, %v1970
    %v1973 = vtanh.pop %v1972
    %v1974 = vsub.f32 1.0, %v1962
    %1976 = vrot.lane.b32.xlu0 %v1973, 96
    %v1977 = vpop.permute.xlu0 %1976
    %v1979 = vmul.f32 %v1974, %v1977
    %v1980 = vmul.f32 %v1962, %v1730
    %v1981 = vadd.f32 %v1979, %v1980
    %1983 = vrot.lane.b32.xlu0 %v1981, 96
    %v1984 = vpop.permute.xlu0 %1983
    %v1986 = vsel %vm150, %v1984, %v1804
    %v1987 = vpack.c.bf16 %v1986, %v1986
    %v1989 = vsel %vm471, %v1987, 0
    %1991 = vmatprep.subr.bf16.mxu0 0
    %1992 = vmatpush1.bf16.msra.mxu0 %v463
    %1993 = vmatprep.subr.bf16.mxu0 0
    %1994 = vmatpush1.bf16.msra.mxu0 %v464
    %1995 = vmatprep.subr.bf16.mxu0 0
    %1996 = vmatpush1.bf16.msra.mxu0 %v465
    %1997 = vmatprep.subr.bf16.mxu0 0
    %1998 = vmatpush1.bf16.msra.mxu0 %v466
    %1999 = vmatprep.subr.bf16.mxu0 0
    %2000 = vmatpush1.bf16.msra.mxu0 0
    %2001 = vmatprep.subr.bf16.mxu0 0
    %2002 = vmatpush1.bf16.msra.mxu0 0
    %2003 = vmatprep.subr.bf16.mxu0 0
    %2004 = vmatpush1.bf16.msra.mxu0 0
    %2005 = vmatprep.subr.bf16.mxu0 0
    %2006 = vmatpush1.bf16.msra.mxu0 0
    %2007 = vmatprep.subr.bf16.mxu0 0
    %2008 = vmatpush1.bf16.msra.mxu0 0
    %2009 = vmatprep.subr.bf16.mxu0 0
    %2010 = vmatpush1.bf16.msra.mxu0 0
    %2011 = vmatprep.subr.bf16.mxu0 0
    %2012 = vmatpush1.bf16.msra.mxu0 0
    %2013 = vmatprep.subr.bf16.mxu0 0
    %2014 = vmatpush1.bf16.msra.mxu0 0
    %2015 = vmatprep.subr.bf16.mxu0 0
    %2016 = vmatpush1.bf16.msra.mxu0 0
    %2017 = vmatprep.subr.bf16.mxu0 0
    %2018 = vmatpush1.bf16.msra.mxu0 0
    %2019 = vmatprep.subr.bf16.mxu0 0
    %2020 = vmatpush1.bf16.msra.mxu0 0
    %2021 = vmatprep.subr.bf16.mxu0 0
    %2022 = vmatpush1.bf16.msra.mxu0 0
    %2023 = vmatprep.mubr.bf16.mxu0 0
    %2024 = vmatmul.mubr.bf16.gmra.mrb[0].mxu0 %v1989
    %v2025 = vpop.f32.mrb[0].mxu0
    %v2026 = vadd.f32 %v123, %v2025
    %v2027 = vpop.f32.mrb[0].mxu0
    %v2028 = vpop.f32.mrb[0].mxu0
    %v2029 = vpop.f32.mrb[0].mxu0
    %2030 = vdwg.mxu0
    %v2031 = vxor.u32 %v2026, 2147483648
    %v2032 = vmul.f32 %v2031, 1.442695
    %v2033 = vpow.pop %v2032
    %v2034 = vadd.f32 %v2033, 1.0
    %v2035 = vrcp.pop %v2034
    %v2036 = vmul.f32 1.0, %v2035
    %2038 = vrot.lane.b32.xlu0 %v2026, 32
    %v2039 = vpop.permute.xlu0 %2038
    %v2041 = vmul.f32 %v2036, %v2039
    %2043 = vrot.lane.b32.xlu0 %v2041, 64
    %v2044 = vpop.permute.xlu0 %2043
    %v2046 = vadd.f32 %v2026, %v2044
    %v2047 = vtanh.pop %v2046
    %v2048 = vsub.f32 1.0, %v2036
    %2050 = vrot.lane.b32.xlu0 %v2047, 96
    %v2051 = vpop.permute.xlu0 %2050
    %v2053 = vmul.f32 %v2048, %v2051
    %v2054 = vmul.f32 %v2036, %v1804
    %v2055 = vadd.f32 %v2053, %v2054
    %v2056 = vpack.c.bf16 %v2055, %v2055
    %2058 = vrot.lane.b32.xlu0 %v2056, 96
    %v2059 = vpop.permute.xlu0 %2058
    %v2061 = vsel %vm150, %v2059, 0
    %2063 = vmatprep.subr.bf16.mxu0 0
    %2064 = vmatpush1.bf16.msra.mxu0 %v552
    %2065 = vmatprep.subr.bf16.mxu0 0
    %2066 = vmatpush1.bf16.msra.mxu0 %v553
    %2067 = vmatprep.subr.bf16.mxu0 0
    %2068 = vmatpush1.bf16.msra.mxu0 0
    %2069 = vmatprep.subr.bf16.mxu0 0
    %2070 = vmatpush1.bf16.msra.mxu0 0
    %2071 = vmatprep.subr.bf16.mxu0 0
    %2072 = vmatpush1.bf16.msra.mxu0 0
    %2073 = vmatprep.subr.bf16.mxu0 0
    %2074 = vmatpush1.bf16.msra.mxu0 0
    %2075 = vmatprep.subr.bf16.mxu0 0
    %2076 = vmatpush1.bf16.msra.mxu0 0
    %2077 = vmatprep.subr.bf16.mxu0 0
    %2078 = vmatpush1.bf16.msra.mxu0 0
    %2079 = vmatprep.subr.bf16.mxu0 0
    %2080 = vmatpush1.bf16.msra.mxu0 0
    %2081 = vmatprep.subr.bf16.mxu0 0
    %2082 = vmatpush1.bf16.msra.mxu0 0
    %2083 = vmatprep.subr.bf16.mxu0 0
    %2084 = vmatpush1.bf16.msra.mxu0 0
    %2085 = vmatprep.subr.bf16.mxu0 0
    %2086 = vmatpush1.bf16.msra.mxu0 0
    %2087 = vmatprep.subr.bf16.mxu0 0
    %2088 = vmatpush1.bf16.msra.mxu0 0
    %2089 = vmatprep.subr.bf16.mxu0 0
    %2090 = vmatpush1.bf16.msra.mxu0 0
    %2091 = vmatprep.subr.bf16.mxu0 0
    %2092 = vmatpush1.bf16.msra.mxu0 0
    %2093 = vmatprep.subr.bf16.mxu0 0
    %2094 = vmatpush1.bf16.msra.mxu0 0
    %2095 = vmatprep.mubr.bf16.mxu0 0
    %2096 = vmatmul.mubr.bf16.gmra.mrb[0].mxu0 %v2061
    %v2097 = vpop.f32.mrb[0].mxu0
    %v2098 = vadd.f32 %v128, %v2097
    %v2099 = vpop.f32.mrb[0].mxu0
    %v2100 = vpop.f32.mrb[0].mxu0
    %v2101 = vpop.f32.mrb[0].mxu0
    %2102 = vdwg.mxu0
    %v2103 = vsel %vm599, %v2098, -inf
    %2104 = vmax.xlane.f32.xlu0 %v2103
    %v2105 = vpop.xlane.xlu0 %2104
    %v2106 = vsub.f32 %v2098, %v2105
    %v2107 = vmul.f32 %v2106, 1.442695
    %v2108 = vpow.pop %v2107
    %v2109 = vsel %vm599, %v2108, 0.0
    %2110 = vadd.xlane.f32.xlu0 %v2109
    %v2111 = vpop.xlane.xlu0 %2110
    %v2112 = vlog2.pop %v2111
    %v2113 = vmul.f32 %v2112, 0.6931472
    %v2114 = vadd.f32 %v2105, %v2113
    %v2115 = vsub.f32 %v2098, %v2114
    %v2116 = vstv %s1909
    %v2117 = vmul.f32 %v2115, %v2116
    %s2118 = sld [smem:[#allocation3 + $0x6]]
    %p2119 = scmp.eq.s32.totalorder %s2118, 1
    // Predicated region
    $region110: #{tpu_custom_call.1} parent=1 // pred_check
      %p2120 = pneg %p2119
    $region111: #{tpu_custom_call.1} parent=1 // pred_check_branch
      %2122 = sbr.rel (%p2120) target = $region113
    $region112: #{tpu_custom_call.1} parent=1 // pred_region
      _
    $region113: #{tpu_custom_call.1} parent=1 // pred_fallthru
      _
    %p2123 = pneg %p2119
    // Predicated region
    $region114: #{tpu_custom_call.1} parent=1 // pred_check
      _
    $region115: #{tpu_custom_call.1} parent=1 // pred_check_branch
      %2125 = sbr.rel (%p2119) target = $region117
    $region116: #{tpu_custom_call.1} parent=1 // pred_region
      %v2126 = vlaneseq
      %v2127 = vand.u32 %v2126, 127
      %vm2128 = vcmp.ge.f32.partialorder %v2098, %v2105
      %v2129 = vsel %vm2128, %v2127, 128
      %v2130 = vsel %vm599, %v2129, 2147483647
      %v2131 = vand.u32 %v2130, 65535
      %v2132 = vshra.s32 %v2130, 16
      %v2133 = vcvt.s32.f32 %v2131
      %v2134 = vcvt.s32.f32 %v2132
      %2135 = vmin.xlane.f32.xlu0 %v2134
      %v2136 = vpop.xlane.xlu0 %2135
      %vm2137 = vcmp.eq.f32.partialorder %v2134, %v2136
      %v2138 = vsel %vm2137, %v2133, inf
      %2139 = vmin.xlane.f32.xlu0 %v2138
      %v2140 = vpop.xlane.xlu0 %2139
      %v2141 = vcvt.f32.s32 %v2140
      %v2142 = vcvt.f32.s32 %v2136
      %v2143 = vshll.u32 %v2142, 16
      %v2144 = vadd.s32 %v2143, %v2141
      %v2145 = vrot.slane %v2144, 4
      %vm2146 = vcmp.lt.s32.totalorder %v2144, %v2145
      %v2147 = vsel %vm2146, %v2144, %v2145
      %v2148 = vrot.slane %v2147, 2
      %vm2149 = vcmp.lt.s32.totalorder %v2147, %v2148
      %v2150 = vsel %vm2149, %v2147, %v2148
      %v2151 = vrot.slane %v2150, 1
      %vm2152 = vcmp.lt.s32.totalorder %v2150, %v2151
      %v2153 = vsel %vm2152, %v2150, %v2151
      %s2154 = vtos %v2153
      %p2155 = scmp.eq.s32.totalorder %s2154, 1
      %s2156 = scalar_select %p2155, 1, 0
    $region117: #{tpu_custom_call.1} parent=1 // pred_fallthru
      %s2157 = sphi 0, %s2156
    %s2158 = scvt.s32.f32 %s2157
    %s2159 = ssub.f32 1.0, %s2158
    %s2160 = smul.f32 %s1909, %s2159
    %v2161 = vpack.c.bf16 %v1981, %v1981
    %2163 = vrot.lane.b32.xlu0 %v2161, 96
    %v2164 = vpop.permute.xlu0 %2163
    %v2166 = vsel %vm150, %v2164, 0
    %2168 = vmatprep.subr.bf16.mxu0 0
    %2169 = vmatpush1.bf16.msra.mxu0 %v372
    %2170 = vmatprep.subr.bf16.mxu0 0
    %2171 = vmatpush1.bf16.msra.mxu0 %v373
    %2172 = vmatprep.subr.bf16.mxu0 0
    %2173 = vmatpush1.bf16.msra.mxu0 0
    %2174 = vmatprep.subr.bf16.mxu0 0
    %2175 = vmatpush1.bf16.msra.mxu0 0
    %2176 = vmatprep.subr.bf16.mxu0 0
    %2177 = vmatpush1.bf16.msra.mxu0 0
    %2178 = vmatprep.subr.bf16.mxu0 0
    %2179 = vmatpush1.bf16.msra.mxu0 0
    %2180 = vmatprep.subr.bf16.mxu0 0
    %2181 = vmatpush1.bf16.msra.mxu0 0
    %2182 = vmatprep.subr.bf16.mxu0 0
    %2183 = vmatpush1.bf16.msra.mxu0 0
    %2184 = vmatprep.subr.bf16.mxu0 0
    %2185 = vmatpush1.bf16.msra.mxu0 0
    %2186 = vmatprep.subr.bf16.mxu0 0
    %2187 = vmatpush1.bf16.msra.mxu0 0
    %2188 = vmatprep.subr.bf16.mxu0 0
    %2189 = vmatpush1.bf16.msra.mxu0 0
    %2190 = vmatprep.subr.bf16.mxu0 0
    %2191 = vmatpush1.bf16.msra.mxu0 0
    %2192 = vmatprep.subr.bf16.mxu0 0
    %2193 = vmatpush1.bf16.msra.mxu0 0
    %2194 = vmatprep.subr.bf16.mxu0 0
    %2195 = vmatpush1.bf16.msra.mxu0 0
    %2196 = vmatprep.subr.bf16.mxu0 0
    %2197 = vmatpush1.bf16.msra.mxu0 0
    %2198 = vmatprep.subr.bf16.mxu0 0
    %2199 = vmatpush1.bf16.msra.mxu0 0
    %2200 = vmatprep.mubr.bf16.mxu0 0
    %2201 = vmatmul.mubr.bf16.gmra.mrb[0].mxu0 %v2166
    %v2202 = vpop.f32.mrb[0].mxu0
    %v2203 = vadd.f32 %v359, %v2202
    %v2204 = vpop.f32.mrb[0].mxu0
    %v2205 = vpop.f32.mrb[0].mxu0
    %v2206 = vpop.f32.mrb[0].mxu0
    %2207 = vdwg.mxu0
    %v2208 = vxor.u32 %v2203, 2147483648
    %v2209 = vmul.f32 %v2208, 1.442695
    %v2210 = vpow.pop %v2209
    %v2211 = vadd.f32 %v2210, 1.0
    %v2212 = vrcp.pop %v2211
    %v2213 = vmul.f32 1.0, %v2212
    %2215 = vrot.lane.b32.xlu0 %v2203, 32
    %v2216 = vpop.permute.xlu0 %2215
    %v2218 = vmul.f32 %v2213, %v2216
    %2220 = vrot.lane.b32.xlu0 %v2218, 64
    %v2221 = vpop.permute.xlu0 %2220
    %v2223 = vadd.f32 %v2203, %v2221
    %v2224 = vtanh.pop %v2223
    %v2225 = vsub.f32 1.0, %v2213
    %2227 = vrot.lane.b32.xlu0 %v2224, 96
    %v2228 = vpop.permute.xlu0 %2227
    %v2230 = vmul.f32 %v2225, %v2228
    %v2231 = vmul.f32 %v2213, %v1981
    %v2232 = vadd.f32 %v2230, %v2231
    %2234 = vrot.lane.b32.xlu0 %v2232, 96
    %v2235 = vpop.permute.xlu0 %2234
    %v2237 = vsel %vm150, %v2235, %v2055
    %v2238 = vpack.c.bf16 %v2237, %v2237
    %v2240 = vsel %vm471, %v2238, 0
    %2242 = vmatprep.subr.bf16.mxu0 0
    %2243 = vmatpush1.bf16.msra.mxu0 %v463
    %2244 = vmatprep.subr.bf16.mxu0 0
    %2245 = vmatpush1.bf16.msra.mxu0 %v464
    %2246 = vmatprep.subr.bf16.mxu0 0
    %2247 = vmatpush1.bf16.msra.mxu0 %v465
    %2248 = vmatprep.subr.bf16.mxu0 0
    %2249 = vmatpush1.bf16.msra.mxu0 %v466
    %2250 = vmatprep.subr.bf16.mxu0 0
    %2251 = vmatpush1.bf16.msra.mxu0 0
    %2252 = vmatprep.subr.bf16.mxu0 0
    %2253 = vmatpush1.bf16.msra.mxu0 0
    %2254 = vmatprep.subr.bf16.mxu0 0
    %2255 = vmatpush1.bf16.msra.mxu0 0
    %2256 = vmatprep.subr.bf16.mxu0 0
    %2257 = vmatpush1.bf16.msra.mxu0 0
    %2258 = vmatprep.subr.bf16.mxu0 0
    %2259 = vmatpush1.bf16.msra.mxu0 0
    %2260 = vmatprep.subr.bf16.mxu0 0
    %2261 = vmatpush1.bf16.msra.mxu0 0
    %2262 = vmatprep.subr.bf16.mxu0 0
    %2263 = vmatpush1.bf16.msra.mxu0 0
    %2264 = vmatprep.subr.bf16.mxu0 0
    %2265 = vmatpush1.bf16.msra.mxu0 0
    %2266 = vmatprep.subr.bf16.mxu0 0
    %2267 = vmatpush1.bf16.msra.mxu0 0
    %2268 = vmatprep.subr.bf16.mxu0 0
    %2269 = vmatpush1.bf16.msra.mxu0 0
    %2270 = vmatprep.subr.bf16.mxu0 0
    %2271 = vmatpush1.bf16.msra.mxu0 0
    %2272 = vmatprep.subr.bf16.mxu0 0
    %2273 = vmatpush1.bf16.msra.mxu0 0
    %2274 = vmatprep.mubr.bf16.mxu0 0
    %2275 = vmatmul.mubr.bf16.gmra.mrb[0].mxu0 %v2240
    %v2276 = vpop.f32.mrb[0].mxu0
    %v2277 = vadd.f32 %v123, %v2276
    %v2278 = vpop.f32.mrb[0].mxu0
    %v2279 = vpop.f32.mrb[0].mxu0
    %v2280 = vpop.f32.mrb[0].mxu0
    %2281 = vdwg.mxu0
    %v2282 = vxor.u32 %v2277, 2147483648
    %v2283 = vmul.f32 %v2282, 1.442695
    %v2284 = vpow.pop %v2283
    %v2285 = vadd.f32 %v2284, 1.0
    %v2286 = vrcp.pop %v2285
    %v2287 = vmul.f32 1.0, %v2286
    %2289 = vrot.lane.b32.xlu0 %v2277, 32
    %v2290 = vpop.permute.xlu0 %2289
    %v2292 = vmul.f32 %v2287, %v2290
    %2294 = vrot.lane.b32.xlu0 %v2292, 64
    %v2295 = vpop.permute.xlu0 %2294
    %v2297 = vadd.f32 %v2277, %v2295
    %v2298 = vtanh.pop %v2297
    %v2299 = vsub.f32 1.0, %v2287
    %2301 = vrot.lane.b32.xlu0 %v2298, 96
    %v2302 = vpop.permute.xlu0 %2301
    %v2304 = vmul.f32 %v2299, %v2302
    %v2305 = vmul.f32 %v2287, %v2055
    %v2306 = vadd.f32 %v2304, %v2305
    %v2307 = vpack.c.bf16 %v2306, %v2306
    %2309 = vrot.lane.b32.xlu0 %v2307, 96
    %v2310 = vpop.permute.xlu0 %2309
    %v2312 = vsel %vm150, %v2310, 0
    %2314 = vmatprep.subr.bf16.mxu0 0
    %2315 = vmatpush1.bf16.msra.mxu0 %v552
    %2316 = vmatprep.subr.bf16.mxu0 0
    %2317 = vmatpush1.bf16.msra.mxu0 %v553
    %2318 = vmatprep.subr.bf16.mxu0 0
    %2319 = vmatpush1.bf16.msra.mxu0 0
    %2320 = vmatprep.subr.bf16.mxu0 0
    %2321 = vmatpush1.bf16.msra.mxu0 0
    %2322 = vmatprep.subr.bf16.mxu0 0
    %2323 = vmatpush1.bf16.msra.mxu0 0
    %2324 = vmatprep.subr.bf16.mxu0 0
    %2325 = vmatpush1.bf16.msra.mxu0 0
    %2326 = vmatprep.subr.bf16.mxu0 0
    %2327 = vmatpush1.bf16.msra.mxu0 0
    %2328 = vmatprep.subr.bf16.mxu0 0
    %2329 = vmatpush1.bf16.msra.mxu0 0
    %2330 = vmatprep.subr.bf16.mxu0 0
    %2331 = vmatpush1.bf16.msra.mxu0 0
    %2332 = vmatprep.subr.bf16.mxu0 0
    %2333 = vmatpush1.bf16.msra.mxu0 0
    %2334 = vmatprep.subr.bf16.mxu0 0
    %2335 = vmatpush1.bf16.msra.mxu0 0
    %2336 = vmatprep.subr.bf16.mxu0 0
    %2337 = vmatpush1.bf16.msra.mxu0 0
    %2338 = vmatprep.subr.bf16.mxu0 0
    %2339 = vmatpush1.bf16.msra.mxu0 0
    %2340 = vmatprep.subr.bf16.mxu0 0
    %2341 = vmatpush1.bf16.msra.mxu0 0
    %2342 = vmatprep.subr.bf16.mxu0 0
    %2343 = vmatpush1.bf16.msra.mxu0 0
    %2344 = vmatprep.subr.bf16.mxu0 0
    %2345 = vmatpush1.bf16.msra.mxu0 0
    %2346 = vmatprep.mubr.bf16.mxu0 0
    %2347 = vmatmul.mubr.bf16.gmra.mrb[0].mxu0 %v2312
    %v2348 = vpop.f32.mrb[0].mxu0
    %v2349 = vadd.f32 %v128, %v2348
    %v2350 = vpop.f32.mrb[0].mxu0
    %v2351 = vpop.f32.mrb[0].mxu0
    %v2352 = vpop.f32.mrb[0].mxu0
    %2353 = vdwg.mxu0
    %v2354 = vsel %vm599, %v2349, -inf
    %2355 = vmax.xlane.f32.xlu0 %v2354
    %v2356 = vpop.xlane.xlu0 %2355
    %v2357 = vsub.f32 %v2349, %v2356
    %v2358 = vmul.f32 %v2357, 1.442695
    %v2359 = vpow.pop %v2358
    %v2360 = vsel %vm599, %v2359, 0.0
    %2361 = vadd.xlane.f32.xlu0 %v2360
    %v2362 = vpop.xlane.xlu0 %2361
    %v2363 = vlog2.pop %v2362
    %v2364 = vmul.f32 %v2363, 0.6931472
    %v2365 = vadd.f32 %v2356, %v2364
    %v2366 = vsub.f32 %v2349, %v2365
    %v2367 = vstv %s2160
    %v2368 = vmul.f32 %v2366, %v2367
    %v2370 = vrot.slane %v862, 7
    %v2373 = vrot.slane %v1113, 6
    %v2376 = vrot.slane %v1364, 5
    %v2379 = vrot.slane %v1615, 4
    %v2382 = vrot.slane %v1866, 3
    %v2385 = vrot.slane %v2117, 2
    %v2388 = vrot.slane %v2368, 1
    %v2390 = vsel %vm599, %v612, %v2370
    %vm2391 = vcmask 1041408
    %v2392 = vsel %vm2391, %v2390, %v2373
    %vm2393 = vcmask 1042432
    %v2394 = vsel %vm2393, %v2392, %v2376
    %vm2395 = vcmask 1043456
    %v2396 = vsel %vm2395, %v2394, %v2379
    %vm2397 = vcmask 1044480
    %v2398 = vsel %vm2397, %v2396, %v2382
    %vm2399 = vcmask 1045504
    %v2400 = vsel %vm2399, %v2398, %v2385
    %vm2401 = vcmask 1046528
    %v2402 = vsel %vm2401, %v2400, %v2388
    %2403 = vst [vmem:[#allocation13] sm:$0xff] %v2402
    // Predicated region
    $region118: #{tpu_custom_call.1} parent=1 // pred_check
      _
    $region119: #{tpu_custom_call.1} parent=1 // pred_check_branch
      %2405 = sbr.rel (0) target = $region121
    $region120: #{tpu_custom_call.1} parent=1 // pred_region
      %s2407 = ssub.s32 128, 128
      %2408 = vsyncadd [#allocation5], %s2407
      %s2410 = sshll.u32 [#allocation13], 4
      %s2411 = int_to_ptr.vmem [resolvable:$true] %s2410
      %2413 = dma.vmem_to_hbm [thread:$0]  %s2411, 128, %s10, [#allocation5]
    $region121: #{tpu_custom_call.1} parent=1 // pred_fallthru
      _
    // Predicated region
    $region122: #{tpu_custom_call.1} parent=1 // pred_check
      _
    $region123: #{tpu_custom_call.1} parent=1 // pred_check_branch
      %2415 = sbr.rel (0) target = $region125
    $region124: #{tpu_custom_call.1} parent=1 // pred_region
      %2416 = dma.done [#allocation5], 128
    $region125: #{tpu_custom_call.1} parent=1 // pred_fallthru
      _
    %2417 = vsyncpa [#allocation4], 1
    %2418 = vsyncpa [#allocation9], 1
    %2419 = vsyncpa [#allocation12], 1
    %2420 = vsyncpa [#allocation5], 1
    %2421 = vsyncpa [#allocation6], 1

</llo_original>
